<compile_context>
chip_gen: v5e
topology: v5e:2x2
jax: 0.10.0
libtpu: 0.0.40
codegen_flags: <defaults>
</compile_context>

<pallas_src>
import jax
import jax.numpy as jnp
from jax.experimental import pallas as pl
from jax.experimental.pallas import tpu as pltpu


def _round_up(x, m):
    return ((x + m - 1) // m) * m


def _num_row_tiles():
    """>=2 row tiles on dual-TC v7x, 1 tile (no serial grid overhead) otherwise."""
    try:
        kind = jax.devices()[0].device_kind.lower()
    except Exception:
        return 1
    return 2 if ("v7" in kind or "7x" in kind) else 1


def det_heads_kernel(x_ref,
                     w1_ref, b1_ref, w2_ref, b2_ref, w3_ref, b3_ref,   # class head
                     v1_ref, c1_ref, v2_ref, c2_ref, v3_ref, c3_ref,   # box head
                     cls_ref, box_ref):
    # Load x once (f32 from HBM), cast to bf16 in-register for the MXU.
    x = x_ref[...].astype(jnp.bfloat16)

    def mlp_sigmoid(xin, wa, ba, wb, bb, wc, bc):
        h = jnp.dot(xin, wa[...], preferred_element_type=jnp.float32)
        h = jnp.maximum(h + ba[...], 0.0)
        h = jnp.dot(h.astype(jnp.bfloat16), wb[...],
                    preferred_element_type=jnp.float32)
        h = jnp.maximum(h + bb[...], 0.0)
        z = jnp.dot(h.astype(jnp.bfloat16), wc[...],
                    preferred_element_type=jnp.float32)
        z = z + bc[...]
        # Stable sigmoid: clamp removes exp overflow; exact exp + exact divide
        # (EUP has plenty of slack, avoids approx-reciprocal error on probs).
        z = jnp.clip(z, -30.0, 30.0)
        return 1.0 / (1.0 + jnp.exp(-z))

    cls = mlp_sigmoid(x, w1_ref, b1_ref, w2_ref, b2_ref, w3_ref, b3_ref)
    box = mlp_sigmoid(x, v1_ref, c1_ref, v2_ref, c2_ref, v3_ref, c3_ref)

    cls_ref[...] = cls.astype(cls_ref.dtype)
    box_ref[...] = box.astype(box_ref.dtype)


def qfreedet_heads_forward(x2d, params):
    """x2d: (M, input_dim) f32 with M = batch * num_queries.
    params: bf16 weights pre-transposed to (in, out), f32 biases (1, out).
    Returns (boxes (M,4) f32, class_scores (M,num_classes) bf16)."""
    M, in_dim = x2d.shape
    embed = params["w1"].shape[1]
    n_cls = params["w3"].shape[1]
    n_box = params["v3"].shape[1]

    # Row tiling: one big tile on single-TC chips, split across TCs on v7x.
    n_tiles = _num_row_tiles() if M >= 16 else 1
    tm = _round_up(pl.cdiv(M, n_tiles), 8)
    tm = min(tm, _round_up(M, 8))
    grid = (pl.cdiv(M, tm),)

    flops = 2 * M * (in_dim * embed + embed * embed + embed * (n_cls + n_box)
                     + in_dim * embed + embed * embed)
    transcendentals = M * (n_cls + n_box)  # one exp per output element
    bytes_accessed = (
        M * in_dim * 4                                   # x (f32, read once)
        + sum(int(params[k].size) * params[k].dtype.itemsize for k in params)
        + M * n_cls * 2                                  # class scores (bf16)
        + M * n_box * 4)                                 # boxes (f32)

    const = lambda shape: pl.BlockSpec(shape, lambda i: (0, 0))
    p = params

    cls, box = pl.pallas_call(
        det_heads_kernel,
        out_shape=(jax.ShapeDtypeStruct((M, n_cls), jnp.bfloat16),
                   jax.ShapeDtypeStruct((M, n_box), jnp.float32)),
        grid=grid,
        in_specs=[
            pl.BlockSpec((tm, in_dim), lambda i: (i, 0)),          # x rows tiled
            const(p["w1"].shape), const(p["b1"].shape),            # class head
            const(p["w2"].shape), const(p["b2"].shape),
            const(p["w3"].shape), const(p["b3"].shape),
            const(p["v1"].shape), const(p["c1"].shape),            # box head
            const(p["v2"].shape), const(p["c2"].shape),
            const(p["v3"].shape), const(p["c3"].shape),
        ],
        out_specs=(pl.BlockSpec((tm, n_cls), lambda i: (i, 0)),
                   pl.BlockSpec((tm, n_box), lambda i: (i, 0))),
        compiler_params=pltpu.CompilerParams(
            dimension_semantics=("parallel",)),
        cost_estimate=pl.CostEstimate(
            flops=flops,
            transcendentals=transcendentals,
            bytes_accessed=bytes_accessed),
    )(x2d,
      p["w1"], p["b1"], p["w2"], p["b2"], p["w3"], p["b3"],
      p["v1"], p["c1"], p["v2"], p["c2"], p["v3"], p["c3"])
    return box, cls


def init_params(key, input_dim, embed_dim, num_classes, box_dim=4):
    """PyTorch-style init U(-1/sqrt(fan_in), 1/sqrt(fan_in)); weights (in, out).
    Weights are pre-cast to bf16 ONCE here (hoisted out of the call path);
    biases stay f32 for the f32 epilogue."""
    ks = jax.random.split(key, 12)

    def lin(kw, kb, fan_in, fan_out):
        bound = 1.0 / jnp.sqrt(fan_in)
        w = jax.random.uniform(kw, (fan_in, fan_out), jnp.float32, -bound, bound)
        b = jax.random.uniform(kb, (1, fan_out), jnp.float32, -bound, bound)
        return w.astype(jnp.bfloat16), b

    w1, b1 = lin(ks[0], ks[1], input_dim, embed_dim)
    w2, b2 = lin(ks[2], ks[3], embed_dim, embed_dim)
    w3, b3 = lin(ks[4], ks[5], embed_dim, num_classes)
    v1, c1 = lin(ks[6], ks[7], input_dim, embed_dim)
    v2, c2 = lin(ks[8], ks[9], embed_dim, embed_dim)
    v3, c3 = lin(ks[10], ks[11], embed_dim, box_dim)
    return {"w1": w1, "b1": b1, "w2": w2, "b2": b2, "w3": w3, "b3": b3,
            "v1": v1, "c1": c1, "v2": v2, "c2": c2, "v3": v3, "c3": c3}


def _ref_heads(x2d, params):
    """Pure-JAX reference with the same bf16-operand / f32-accumulate math."""
    def mlp(x, wa, ba, wb, bb, wc, bc):
        h = jnp.maximum(
            jnp.dot(x.astype(jnp.bfloat16), wa,
                    preferred_element_type=jnp.float32) + ba, 0.0)
        h = jnp.maximum(
            jnp.dot(h.astype(jnp.bfloat16), wb,
                    preferred_element_type=jnp.float32) + bb, 0.0)
        z = jnp.dot(h.astype(jnp.bfloat16), wc,
                    preferred_element_type=jnp.float32) + bc
        return jax.nn.sigmoid(z)

    p = params
    cls = mlp(x2d, p["w1"], p["b1"], p["w2"], p["b2"], p["w3"], p["b3"])
    box = mlp(x2d, p["v1"], p["c1"], p["v2"], p["c2"], p["v3"], p["c3"])
    return box, cls


if __name__ == "__main__":
    # Small shapes consistent with a detection head:
    # batch=2, num_queries=256 (flattened into one M dim), input=32, embed=64,
    # 16 classes, 4 box coords.
    B, NQ, INPUT, EMBED, NUM_CLASSES = 2, 256, 32, 64, 16

    key = jax.random.PRNGKey(0)
    kx, kp = jax.random.split(key)
    x = jax.random.normal(kx, (B, NQ, INPUT), jnp.float32)
    params = init_params(kp, INPUT, EMBED, NUM_CLASSES)

    # Flatten (batch x num_queries) into one M dim; single fused pallas_call.
    x2d = x.reshape(B * NQ, INPUT)
    fwd = jax.jit(qfreedet_heads_forward)
    box, cls = fwd(x2d, params)
    box = jax.block_until_ready(box)
    cls = jax.block_until_ready(cls)

    box = box.reshape(B, NQ, 4)
    cls = cls.reshape(B, NQ, NUM_CLASSES).astype(jnp.float32)

    box_ref, cls_ref = _ref_heads(x2d, params)
    box_ref = box_ref.reshape(B, NQ, 4)
    cls_ref = cls_ref.reshape(B, NQ, NUM_CLASSES)

    assert cls.shape == (B, NQ, NUM_CLASSES)
    assert box.shape == (B, NQ, 4)
    assert jnp.allclose(cls, cls_ref, atol=2e-2, rtol=2e-2)
    assert jnp.allclose(box, box_ref, atol=2e-2, rtol=2e-2)

    print("KERNEL_OK")
</pallas_src>

<mosaic_0001>
module attributes {stable_mosaic.version = 11 : i64} {
  func.func @det_heads_kernel(%arg0: i32, %arg1: memref<512x32xf32, #tpu.memory_space<vmem>>, %arg2: memref<32x64xbf16, #tpu.memory_space<vmem>>, %arg3: memref<1x64xf32, #tpu.memory_space<vmem>>, %arg4: memref<64x64xbf16, #tpu.memory_space<vmem>>, %arg5: memref<1x64xf32, #tpu.memory_space<vmem>>, %arg6: memref<64x16xbf16, #tpu.memory_space<vmem>>, %arg7: memref<1x16xf32, #tpu.memory_space<vmem>>, %arg8: memref<32x64xbf16, #tpu.memory_space<vmem>>, %arg9: memref<1x64xf32, #tpu.memory_space<vmem>>, %arg10: memref<64x64xbf16, #tpu.memory_space<vmem>>, %arg11: memref<1x64xf32, #tpu.memory_space<vmem>>, %arg12: memref<64x4xbf16, #tpu.memory_space<vmem>>, %arg13: memref<1x4xf32, #tpu.memory_space<vmem>>, %arg14: memref<512x16xbf16, #tpu.memory_space<vmem>>, %arg15: memref<512x4xf32, #tpu.memory_space<vmem>>) attributes {dimension_semantics = [#tpu.dimension_semantics<parallel>], iteration_bounds = array<i64: 1>, scalar_prefetch = 0 : i64, scratch_operands = 0 : i64, tpu.core_type = #tpu.core_type<tc>, window_params = [{transform_indices = @transform_0, window_bounds = array<i64: 512, 32>}, {pipeline_mode = #tpu.pipeline_mode<synchronous>, transform_indices = @transform_1, window_bounds = array<i64: 32, 64>}, {pipeline_mode = #tpu.pipeline_mode<synchronous>, transform_indices = @transform_2, window_bounds = array<i64: 1, 64>}, {pipeline_mode = #tpu.pipeline_mode<synchronous>, transform_indices = @transform_3, window_bounds = array<i64: 64, 64>}, {pipeline_mode = #tpu.pipeline_mode<synchronous>, transform_indices = @transform_4, window_bounds = array<i64: 1, 64>}, {pipeline_mode = #tpu.pipeline_mode<synchronous>, transform_indices = @transform_5, window_bounds = array<i64: 64, 16>}, {pipeline_mode = #tpu.pipeline_mode<synchronous>, transform_indices = @transform_6, window_bounds = array<i64: 1, 16>}, {pipeline_mode = #tpu.pipeline_mode<synchronous>, transform_indices = @transform_7, window_bounds = array<i64: 32, 64>}, {pipeline_mode = #tpu.pipeline_mode<synchronous>, transform_indices = @transform_8, window_bounds = array<i64: 1, 64>}, {pipeline_mode = #tpu.pipeline_mode<synchronous>, transform_indices = @transform_9, window_bounds = array<i64: 64, 64>}, {pipeline_mode = #tpu.pipeline_mode<synchronous>, transform_indices = @transform_10, window_bounds = array<i64: 1, 64>}, {pipeline_mode = #tpu.pipeline_mode<synchronous>, transform_indices = @transform_11, window_bounds = array<i64: 64, 4>}, {pipeline_mode = #tpu.pipeline_mode<synchronous>, transform_indices = @transform_12, window_bounds = array<i64: 1, 4>}, {transform_indices = @transform_13, window_bounds = array<i64: 512, 16>}, {transform_indices = @transform_14, window_bounds = array<i64: 512, 4>}]} {
    %c0 = arith.constant 0 : index
    %c0_0 = arith.constant 0 : index
    %0 = vector.load %arg1[%c0, %c0_0] : memref<512x32xf32, #tpu.memory_space<vmem>>, vector<512x32xf32>
    %1 = arith.truncf %0 : vector<512x32xf32> to vector<512x32xbf16>
    %c0_1 = arith.constant 0 : index
    %c0_2 = arith.constant 0 : index
    %2 = vector.load %arg2[%c0_1, %c0_2] : memref<32x64xbf16, #tpu.memory_space<vmem>>, vector<32x64xbf16>
    %cst = arith.constant dense<0.000000e+00> : vector<512x64xf32>
    %3 = tpu.matmul %1, %2, %cst {dimension_numbers = #tpu.dot_dimension_numbers<[1], [0], [0], [1], [0, 0, 1, 1], [], []>} : vector<512x32xbf16>, vector<32x64xbf16>, vector<512x64xf32> -> vector<512x64xf32>
    %c0_3 = arith.constant 0 : index
    %c0_4 = arith.constant 0 : index
    %4 = vector.load %arg3[%c0_3, %c0_4] : memref<1x64xf32, #tpu.memory_space<vmem>>, vector<1x64xf32>
    %5 = vector.broadcast %4 : vector<1x64xf32> to vector<512x64xf32>
    %6 = arith.addf %3, %5 : vector<512x64xf32>
    %cst_5 = arith.constant 0.000000e+00 : f32
    %7 = vector.broadcast %cst_5 : f32 to vector<512x64xf32>
    %8 = arith.maximumf %6, %7 : vector<512x64xf32>
    %9 = arith.truncf %8 : vector<512x64xf32> to vector<512x64xbf16>
    %c0_6 = arith.constant 0 : index
    %c0_7 = arith.constant 0 : index
    %10 = vector.load %arg4[%c0_6, %c0_7] : memref<64x64xbf16, #tpu.memory_space<vmem>>, vector<64x64xbf16>
    %cst_8 = arith.constant dense<0.000000e+00> : vector<512x64xf32>
    %11 = tpu.matmul %9, %10, %cst_8 {dimension_numbers = #tpu.dot_dimension_numbers<[1], [0], [0], [1], [0, 0, 1, 1], [], []>} : vector<512x64xbf16>, vector<64x64xbf16>, vector<512x64xf32> -> vector<512x64xf32>
    %c0_9 = arith.constant 0 : index
    %c0_10 = arith.constant 0 : index
    %12 = vector.load %arg5[%c0_9, %c0_10] : memref<1x64xf32, #tpu.memory_space<vmem>>, vector<1x64xf32>
    %13 = vector.broadcast %12 : vector<1x64xf32> to vector<512x64xf32>
    %14 = arith.addf %11, %13 : vector<512x64xf32>
    %cst_11 = arith.constant 0.000000e+00 : f32
    %15 = vector.broadcast %cst_11 : f32 to vector<512x64xf32>
    %16 = arith.maximumf %14, %15 : vector<512x64xf32>
    %17 = arith.truncf %16 : vector<512x64xf32> to vector<512x64xbf16>
    %c0_12 = arith.constant 0 : index
    %c0_13 = arith.constant 0 : index
    %18 = vector.load %arg6[%c0_12, %c0_13] : memref<64x16xbf16, #tpu.memory_space<vmem>>, vector<64x16xbf16>
    %cst_14 = arith.constant dense<0.000000e+00> : vector<512x16xf32>
    %19 = tpu.matmul %17, %18, %cst_14 {dimension_numbers = #tpu.dot_dimension_numbers<[1], [0], [0], [1], [0, 0, 1, 1], [], []>} : vector<512x64xbf16>, vector<64x16xbf16>, vector<512x16xf32> -> vector<512x16xf32>
    %c0_15 = arith.constant 0 : index
    %c0_16 = arith.constant 0 : index
    %20 = vector.load %arg7[%c0_15, %c0_16] : memref<1x16xf32, #tpu.memory_space<vmem>>, vector<1x16xf32>
    %21 = vector.broadcast %20 : vector<1x16xf32> to vector<512x16xf32>
    %22 = arith.addf %19, %21 : vector<512x16xf32>
    %cst_17 = arith.constant -3.000000e+01 : f32
    %cst_18 = arith.constant 3.000000e+01 : f32
    %23 = vector.broadcast %cst_17 : f32 to vector<512x16xf32>
    %24 = arith.maximumf %23, %22 : vector<512x16xf32>
    %25 = vector.broadcast %cst_18 : f32 to vector<512x16xf32>
    %26 = arith.minimumf %25, %24 : vector<512x16xf32>
    %cst_19 = arith.constant 0.000000e+00 : f32
    %27 = vector.broadcast %cst_19 : f32 to vector<512x16xf32>
    %28 = arith.subf %27, %26 : vector<512x16xf32>
    %29 = math.exp %28 : vector<512x16xf32>
    %cst_20 = arith.constant 1.000000e+00 : f32
    %30 = vector.broadcast %cst_20 : f32 to vector<512x16xf32>
    %31 = arith.addf %30, %29 : vector<512x16xf32>
    %cst_21 = arith.constant 1.000000e+00 : f32
    %32 = vector.broadcast %cst_21 : f32 to vector<512x16xf32>
    %33 = arith.divf %32, %31 : vector<512x16xf32>
    %c0_22 = arith.constant 0 : index
    %c0_23 = arith.constant 0 : index
    %34 = vector.load %arg8[%c0_22, %c0_23] : memref<32x64xbf16, #tpu.memory_space<vmem>>, vector<32x64xbf16>
    %cst_24 = arith.constant dense<0.000000e+00> : vector<512x64xf32>
    %35 = tpu.matmul %1, %34, %cst_24 {dimension_numbers = #tpu.dot_dimension_numbers<[1], [0], [0], [1], [0, 0, 1, 1], [], []>} : vector<512x32xbf16>, vector<32x64xbf16>, vector<512x64xf32> -> vector<512x64xf32>
    %c0_25 = arith.constant 0 : index
    %c0_26 = arith.constant 0 : index
    %36 = vector.load %arg9[%c0_25, %c0_26] : memref<1x64xf32, #tpu.memory_space<vmem>>, vector<1x64xf32>
    %37 = vector.broadcast %36 : vector<1x64xf32> to vector<512x64xf32>
    %38 = arith.addf %35, %37 : vector<512x64xf32>
    %cst_27 = arith.constant 0.000000e+00 : f32
    %39 = vector.broadcast %cst_27 : f32 to vector<512x64xf32>
    %40 = arith.maximumf %38, %39 : vector<512x64xf32>
    %41 = arith.truncf %40 : vector<512x64xf32> to vector<512x64xbf16>
    %c0_28 = arith.constant 0 : index
    %c0_29 = arith.constant 0 : index
    %42 = vector.load %arg10[%c0_28, %c0_29] : memref<64x64xbf16, #tpu.memory_space<vmem>>, vector<64x64xbf16>
    %cst_30 = arith.constant dense<0.000000e+00> : vector<512x64xf32>
    %43 = tpu.matmul %41, %42, %cst_30 {dimension_numbers = #tpu.dot_dimension_numbers<[1], [0], [0], [1], [0, 0, 1, 1], [], []>} : vector<512x64xbf16>, vector<64x64xbf16>, vector<512x64xf32> -> vector<512x64xf32>
    %c0_31 = arith.constant 0 : index
    %c0_32 = arith.constant 0 : index
    %44 = vector.load %arg11[%c0_31, %c0_32] : memref<1x64xf32, #tpu.memory_space<vmem>>, vector<1x64xf32>
    %45 = vector.broadcast %44 : vector<1x64xf32> to vector<512x64xf32>
    %46 = arith.addf %43, %45 : vector<512x64xf32>
    %cst_33 = arith.constant 0.000000e+00 : f32
    %47 = vector.broadcast %cst_33 : f32 to vector<512x64xf32>
    %48 = arith.maximumf %46, %47 : vector<512x64xf32>
    %49 = arith.truncf %48 : vector<512x64xf32> to vector<512x64xbf16>
    %c0_34 = arith.constant 0 : index
    %c0_35 = arith.constant 0 : index
    %50 = vector.load %arg12[%c0_34, %c0_35] : memref<64x4xbf16, #tpu.memory_space<vmem>>, vector<64x4xbf16>
    %cst_36 = arith.constant dense<0.000000e+00> : vector<512x4xf32>
    %51 = tpu.matmul %49, %50, %cst_36 {dimension_numbers = #tpu.dot_dimension_numbers<[1], [0], [0], [1], [0, 0, 1, 1], [], []>} : vector<512x64xbf16>, vector<64x4xbf16>, vector<512x4xf32> -> vector<512x4xf32>
    %c0_37 = arith.constant 0 : index
    %c0_38 = arith.constant 0 : index
    %52 = vector.load %arg13[%c0_37, %c0_38] : memref<1x4xf32, #tpu.memory_space<vmem>>, vector<1x4xf32>
    %53 = vector.broadcast %52 : vector<1x4xf32> to vector<512x4xf32>
    %54 = arith.addf %51, %53 : vector<512x4xf32>
    %cst_39 = arith.constant -3.000000e+01 : f32
    %cst_40 = arith.constant 3.000000e+01 : f32
    %55 = vector.broadcast %cst_39 : f32 to vector<512x4xf32>
    %56 = arith.maximumf %55, %54 : vector<512x4xf32>
    %57 = vector.broadcast %cst_40 : f32 to vector<512x4xf32>
    %58 = arith.minimumf %57, %56 : vector<512x4xf32>
    %cst_41 = arith.constant 0.000000e+00 : f32
    %59 = vector.broadcast %cst_41 : f32 to vector<512x4xf32>
    %60 = arith.subf %59, %58 : vector<512x4xf32>
    %61 = math.exp %60 : vector<512x4xf32>
    %cst_42 = arith.constant 1.000000e+00 : f32
    %62 = vector.broadcast %cst_42 : f32 to vector<512x4xf32>
    %63 = arith.addf %62, %61 : vector<512x4xf32>
    %cst_43 = arith.constant 1.000000e+00 : f32
    %64 = vector.broadcast %cst_43 : f32 to vector<512x4xf32>
    %65 = arith.divf %64, %63 : vector<512x4xf32>
    %66 = arith.truncf %33 : vector<512x16xf32> to vector<512x16xbf16>
    %c0_44 = arith.constant 0 : index
    %c0_45 = arith.constant 0 : index
    %67 = vector.load %arg14[%c0_44, %c0_45] : memref<512x16xbf16, #tpu.memory_space<vmem>>, vector<512x16xbf16>
    tpu.vector_store %arg14[%c0_44, %c0_45], %66 {strides = array<i32>} : memref<512x16xbf16, #tpu.memory_space<vmem>>, vector<512x16xbf16>,
    %c0_46 = arith.constant 0 : index
    %c0_47 = arith.constant 0 : index
    %68 = vector.load %arg15[%c0_46, %c0_47] : memref<512x4xf32, #tpu.memory_space<vmem>>, vector<512x4xf32>
    tpu.vector_store %arg15[%c0_46, %c0_47], %65 {strides = array<i32>} : memref<512x4xf32, #tpu.memory_space<vmem>>, vector<512x4xf32>,
    return
  }
  func.func @transform_0(%arg0: i32) -> (i32, i32) {
    %c0_i32 = arith.constant 0 : i32
    %c0_i32_0 = arith.constant 0 : i32
    return %arg0, %c0_i32 : i32, i32
  }
  func.func @transform_1(%arg0: i32) -> (i32, i32) {
    %c0_i32 = arith.constant 0 : i32
    %c0_i32_0 = arith.constant 0 : i32
    %c0_i32_1 = arith.constant 0 : i32
    return %c0_i32, %c0_i32_0 : i32, i32
  }
  func.func @transform_2(%arg0: i32) -> (i32, i32) {
    %c0_i32 = arith.constant 0 : i32
    %c0_i32_0 = arith.constant 0 : i32
    %c0_i32_1 = arith.constant 0 : i32
    return %c0_i32, %c0_i32_0 : i32, i32
  }
  func.func @transform_3(%arg0: i32) -> (i32, i32) {
    %c0_i32 = arith.constant 0 : i32
    %c0_i32_0 = arith.constant 0 : i32
    %c0_i32_1 = arith.constant 0 : i32
    return %c0_i32, %c0_i32_0 : i32, i32
  }
  func.func @transform_4(%arg0: i32) -> (i32, i32) {
    %c0_i32 = arith.constant 0 : i32
    %c0_i32_0 = arith.constant 0 : i32
    %c0_i32_1 = arith.constant 0 : i32
    return %c0_i32, %c0_i32_0 : i32, i32
  }
  func.func @transform_5(%arg0: i32) -> (i32, i32) {
    %c0_i32 = arith.constant 0 : i32
    %c0_i32_0 = arith.constant 0 : i32
    %c0_i32_1 = arith.constant 0 : i32
    return %c0_i32, %c0_i32_0 : i32, i32
  }
  func.func @transform_6(%arg0: i32) -> (i32, i32) {
    %c0_i32 = arith.constant 0 : i32
    %c0_i32_0 = arith.constant 0 : i32
    %c0_i32_1 = arith.constant 0 : i32
    return %c0_i32, %c0_i32_0 : i32, i32
  }
  func.func @transform_7(%arg0: i32) -> (i32, i32) {
    %c0_i32 = arith.constant 0 : i32
    %c0_i32_0 = arith.constant 0 : i32
    %c0_i32_1 = arith.constant 0 : i32
    return %c0_i32, %c0_i32_0 : i32, i32
  }
  func.func @transform_8(%arg0: i32) -> (i32, i32) {
    %c0_i32 = arith.constant 0 : i32
    %c0_i32_0 = arith.constant 0 : i32
    %c0_i32_1 = arith.constant 0 : i32
    return %c0_i32, %c0_i32_0 : i32, i32
  }
  func.func @transform_9(%arg0: i32) -> (i32, i32) {
    %c0_i32 = arith.constant 0 : i32
    %c0_i32_0 = arith.constant 0 : i32
    %c0_i32_1 = arith.constant 0 : i32
    return %c0_i32, %c0_i32_0 : i32, i32
  }
  func.func @transform_10(%arg0: i32) -> (i32, i32) {
    %c0_i32 = arith.constant 0 : i32
    %c0_i32_0 = arith.constant 0 : i32
    %c0_i32_1 = arith.constant 0 : i32
    return %c0_i32, %c0_i32_0 : i32, i32
  }
  func.func @transform_11(%arg0: i32) -> (i32, i32) {
    %c0_i32 = arith.constant 0 : i32
    %c0_i32_0 = arith.constant 0 : i32
    %c0_i32_1 = arith.constant 0 : i32
    return %c0_i32, %c0_i32_0 : i32, i32
  }
  func.func @transform_12(%arg0: i32) -> (i32, i32) {
    %c0_i32 = arith.constant 0 : i32
    %c0_i32_0 = arith.constant 0 : i32
    %c0_i32_1 = arith.constant 0 : i32
    return %c0_i32, %c0_i32_0 : i32, i32
  }
  func.func @transform_13(%arg0: i32) -> (i32, i32) {
    %c0_i32 = arith.constant 0 : i32
    %c0_i32_0 = arith.constant 0 : i32
    return %arg0, %c0_i32 : i32, i32
  }
  func.func @transform_14(%arg0: i32) -> (i32, i32) {
    %c0_i32 = arith.constant 0 : i32
    %c0_i32_0 = arith.constant 0 : i32
    return %arg0, %c0_i32 : i32, i32
  }
}

</mosaic_0001>

<llo_original>
// kernel: qfreedet_heads_forward.1
$region0: #{qfreedet_heads_forward.1}
  #allocation0 [shape = 'u32[]', space=smem, size = 0x4, offset = 0x4, fixed_abs, tag = 'smem constant byte address 0x4 - core index']
  #allocation1 [shape = 'u32[72,128]{1,0:T(1,128)}', space=vmem, size = 0x9000, scoped, tag = 'internal scratch']
  %s0 = inlined_call_operand.vmem [shape: f32[512,32], index: 0, kind: input, shape index: {}]
  %s1 = inlined_call_operand.vmem [shape: bf16[32,64], index: 1, kind: input, shape index: {}]
  %s2 = inlined_call_operand.vmem [shape: f32[1,64], index: 2, kind: input, shape index: {}]
  %s3 = inlined_call_operand.vmem [shape: bf16[64,64], index: 3, kind: input, shape index: {}]
  %s4 = inlined_call_operand.vmem [shape: f32[1,64], index: 4, kind: input, shape index: {}]
  %s5 = inlined_call_operand.vmem [shape: bf16[64,16], index: 5, kind: input, shape index: {}]
  %s6 = inlined_call_operand.vmem [shape: f32[1,16], index: 6, kind: input, shape index: {}]
  %s7 = inlined_call_operand.vmem [shape: bf16[32,64], index: 7, kind: input, shape index: {}]
  %s8 = inlined_call_operand.vmem [shape: f32[1,64], index: 8, kind: input, shape index: {}]
  %s9 = inlined_call_operand.vmem [shape: bf16[64,64], index: 9, kind: input, shape index: {}]
  %s10 = inlined_call_operand.vmem [shape: f32[1,64], index: 10, kind: input, shape index: {}]
  %s11 = inlined_call_operand.vmem [shape: bf16[64,4], index: 11, kind: input, shape index: {}]
  %s12 = inlined_call_operand.vmem [shape: f32[1,4], index: 12, kind: input, shape index: {}]
  %s13 = inlined_call_operand.vmem [shape: bf16[512,16], index: 13, kind: output, shape index: {0}]
  %s14 = inlined_call_operand.vmem [shape: f32[512,4], index: 14, kind: output, shape index: {1}]
  %15 = xla_tuple %s13, %s14
  %s16 = sld [smem:[#allocation0]]
  $region70: #{qfreedet_heads_forward.1} parent=0
    _
  %s18 = ssub.s32 1, %s16
  %s19 = scalar_select 0, %s18, %s16
  // Predicated region
  $region2: #{qfreedet_heads_forward.1} parent=0 // pred_check
    _
  $region3: #{qfreedet_heads_forward.1} parent=0 // pred_check_branch
    %21 = sbr.rel (0) target = $region5
  $region4: #{qfreedet_heads_forward.1} parent=0 // pred_region
    _
  $region5: #{qfreedet_heads_forward.1} parent=0 // pred_fallthru
    _
  // Predicated region
  $region6: #{qfreedet_heads_forward.1} parent=0 // pred_check
    _
  $region7: #{qfreedet_heads_forward.1} parent=0 // pred_check_branch
    %23 = sbr.rel (0) target = $region9
  $region8: #{qfreedet_heads_forward.1} parent=0 // pred_region
    _
  $region9: #{qfreedet_heads_forward.1} parent=0 // pred_fallthru
    _
  // Predicated region
  $region10: #{qfreedet_heads_forward.1} parent=0 // pred_check
    _
  $region11: #{qfreedet_heads_forward.1} parent=0 // pred_check_branch
    %25 = sbr.rel (0) target = $region13
  $region12: #{qfreedet_heads_forward.1} parent=0 // pred_region
    _
  $region13: #{qfreedet_heads_forward.1} parent=0 // pred_fallthru
    _
  // Predicated region
  $region14: #{qfreedet_heads_forward.1} parent=0 // pred_check
    _
  $region15: #{qfreedet_heads_forward.1} parent=0 // pred_check_branch
    %27 = sbr.rel (0) target = $region17
  $region16: #{qfreedet_heads_forward.1} parent=0 // pred_region
    _
  $region17: #{qfreedet_heads_forward.1} parent=0 // pred_fallthru
    _
  // Predicated region
  $region18: #{qfreedet_heads_forward.1} parent=0 // pred_check
    _
  $region19: #{qfreedet_heads_forward.1} parent=0 // pred_check_branch
    %29 = sbr.rel (0) target = $region21
  $region20: #{qfreedet_heads_forward.1} parent=0 // pred_region
    _
  $region21: #{qfreedet_heads_forward.1} parent=0 // pred_fallthru
    _
  // Predicated region
  $region22: #{qfreedet_heads_forward.1} parent=0 // pred_check
    _
  $region23: #{qfreedet_heads_forward.1} parent=0 // pred_check_branch
    %31 = sbr.rel (0) target = $region25
  $region24: #{qfreedet_heads_forward.1} parent=0 // pred_region
    _
  $region25: #{qfreedet_heads_forward.1} parent=0 // pred_fallthru
    _
  // Predicated region
  $region26: #{qfreedet_heads_forward.1} parent=0 // pred_check
    _
  $region27: #{qfreedet_heads_forward.1} parent=0 // pred_check_branch
    %33 = sbr.rel (0) target = $region29
  $region28: #{qfreedet_heads_forward.1} parent=0 // pred_region
    _
  $region29: #{qfreedet_heads_forward.1} parent=0 // pred_fallthru
    _
  // Predicated region
  $region30: #{qfreedet_heads_forward.1} parent=0 // pred_check
    _
  $region31: #{qfreedet_heads_forward.1} parent=0 // pred_check_branch
    %35 = sbr.rel (0) target = $region33
  $region32: #{qfreedet_heads_forward.1} parent=0 // pred_region
    _
  $region33: #{qfreedet_heads_forward.1} parent=0 // pred_fallthru
    _
  // Predicated region
  $region34: #{qfreedet_heads_forward.1} parent=0 // pred_check
    _
  $region35: #{qfreedet_heads_forward.1} parent=0 // pred_check_branch
    %37 = sbr.rel (0) target = $region37
  $region36: #{qfreedet_heads_forward.1} parent=0 // pred_region
    _
  $region37: #{qfreedet_heads_forward.1} parent=0 // pred_fallthru
    _
  // Predicated region
  $region38: #{qfreedet_heads_forward.1} parent=0 // pred_check
    _
  $region39: #{qfreedet_heads_forward.1} parent=0 // pred_check_branch
    %39 = sbr.rel (0) target = $region41
  $region40: #{qfreedet_heads_forward.1} parent=0 // pred_region
    _
  $region41: #{qfreedet_heads_forward.1} parent=0 // pred_fallthru
    _
  // Predicated region
  $region42: #{qfreedet_heads_forward.1} parent=0 // pred_check
    _
  $region43: #{qfreedet_heads_forward.1} parent=0 // pred_check_branch
    %41 = sbr.rel (0) target = $region45
  $region44: #{qfreedet_heads_forward.1} parent=0 // pred_region
    _
  $region45: #{qfreedet_heads_forward.1} parent=0 // pred_fallthru
    _
  // Predicated region
  $region46: #{qfreedet_heads_forward.1} parent=0 // pred_check
    _
  $region47: #{qfreedet_heads_forward.1} parent=0 // pred_check_branch
    %43 = sbr.rel (0) target = $region49
  $region48: #{qfreedet_heads_forward.1} parent=0 // pred_region
    _
  $region49: #{qfreedet_heads_forward.1} parent=0 // pred_fallthru
    _
  // Predicated region
  $region50: #{qfreedet_heads_forward.1} parent=0 // pred_check
    _
  $region51: #{qfreedet_heads_forward.1} parent=0 // pred_check_branch
    %45 = sbr.rel (0) target = $region53
  $region52: #{qfreedet_heads_forward.1} parent=0 // pred_region
    _
  $region53: #{qfreedet_heads_forward.1} parent=0 // pred_fallthru
    _
  %v47 = vld [vmem:[%s0] sm:$0xff]
  %v48 = vld [vmem:[%s0 + $0x8] sm:$0xff]
  %v49 = vld [vmem:[%s0 + $0x10] sm:$0xff]
  %v50 = vld [vmem:[%s0 + $0x18] sm:$0xff]
  %v51 = vld [vmem:[%s0 + $0x20] sm:$0xff]
  %v52 = vld [vmem:[%s0 + $0x28] sm:$0xff]
  %v53 = vld [vmem:[%s0 + $0x30] sm:$0xff]
  %v54 = vld [vmem:[%s0 + $0x38] sm:$0xff]
  %v55 = vld [vmem:[%s0 + $0x40] sm:$0xff]
  %v56 = vld [vmem:[%s0 + $0x48] sm:$0xff]
  %v57 = vld [vmem:[%s0 + $0x50] sm:$0xff]
  %v58 = vld [vmem:[%s0 + $0x58] sm:$0xff]
  %v59 = vld [vmem:[%s0 + $0x60] sm:$0xff]
  %v60 = vld [vmem:[%s0 + $0x68] sm:$0xff]
  %v61 = vld [vmem:[%s0 + $0x70] sm:$0xff]
  %v62 = vld [vmem:[%s0 + $0x78] sm:$0xff]
  %v63 = vld [vmem:[%s0 + $0x80] sm:$0xff]
  %v64 = vld [vmem:[%s0 + $0x88] sm:$0xff]
  %v65 = vld [vmem:[%s0 + $0x90] sm:$0xff]
  %v66 = vld [vmem:[%s0 + $0x98] sm:$0xff]
  %v67 = vld [vmem:[%s0 + $0xa0] sm:$0xff]
  %v68 = vld [vmem:[%s0 + $0xa8] sm:$0xff]
  %v69 = vld [vmem:[%s0 + $0xb0] sm:$0xff]
  %v70 = vld [vmem:[%s0 + $0xb8] sm:$0xff]
  %v71 = vld [vmem:[%s0 + $0xc0] sm:$0xff]
  %v72 = vld [vmem:[%s0 + $0xc8] sm:$0xff]
  %v73 = vld [vmem:[%s0 + $0xd0] sm:$0xff]
  %v74 = vld [vmem:[%s0 + $0xd8] sm:$0xff]
  %v75 = vld [vmem:[%s0 + $0xe0] sm:$0xff]
  %v76 = vld [vmem:[%s0 + $0xe8] sm:$0xff]
  %v77 = vld [vmem:[%s0 + $0xf0] sm:$0xff]
  %v78 = vld [vmem:[%s0 + $0xf8] sm:$0xff]
  %v79 = vld [vmem:[%s0 + $0x100] sm:$0xff]
  %v80 = vld [vmem:[%s0 + $0x108] sm:$0xff]
  %v81 = vld [vmem:[%s0 + $0x110] sm:$0xff]
  %v82 = vld [vmem:[%s0 + $0x118] sm:$0xff]
  %v83 = vld [vmem:[%s0 + $0x120] sm:$0xff]
  %v84 = vld [vmem:[%s0 + $0x128] sm:$0xff]
  %v85 = vld [vmem:[%s0 + $0x130] sm:$0xff]
  %v86 = vld [vmem:[%s0 + $0x138] sm:$0xff]
  %v87 = vld [vmem:[%s0 + $0x140] sm:$0xff]
  %v88 = vld [vmem:[%s0 + $0x148] sm:$0xff]
  %v89 = vld [vmem:[%s0 + $0x150] sm:$0xff]
  %v90 = vld [vmem:[%s0 + $0x158] sm:$0xff]
  %v91 = vld [vmem:[%s0 + $0x160] sm:$0xff]
  %v92 = vld [vmem:[%s0 + $0x168] sm:$0xff]
  %v93 = vld [vmem:[%s0 + $0x170] sm:$0xff]
  %v94 = vld [vmem:[%s0 + $0x178] sm:$0xff]
  %v95 = vld [vmem:[%s0 + $0x180] sm:$0xff]
  %v96 = vld [vmem:[%s0 + $0x188] sm:$0xff]
  %v97 = vld [vmem:[%s0 + $0x190] sm:$0xff]
  %v98 = vld [vmem:[%s0 + $0x198] sm:$0xff]
  %v99 = vld [vmem:[%s0 + $0x1a0] sm:$0xff]
  %v100 = vld [vmem:[%s0 + $0x1a8] sm:$0xff]
  %v101 = vld [vmem:[%s0 + $0x1b0] sm:$0xff]
  %v102 = vld [vmem:[%s0 + $0x1b8] sm:$0xff]
  %v103 = vld [vmem:[%s0 + $0x1c0] sm:$0xff]
  %v104 = vld [vmem:[%s0 + $0x1c8] sm:$0xff]
  %v105 = vld [vmem:[%s0 + $0x1d0] sm:$0xff]
  %v106 = vld [vmem:[%s0 + $0x1d8] sm:$0xff]
  %v107 = vld [vmem:[%s0 + $0x1e0] sm:$0xff]
  %v108 = vld [vmem:[%s0 + $0x1e8] sm:$0xff]
  %v109 = vld [vmem:[%s0 + $0x1f0] sm:$0xff]
  %v110 = vld [vmem:[%s0 + $0x1f8] sm:$0xff]
  %v111 = vpack.c.bf16 %v48, %v47
  %v112 = vpack.c.bf16 %v50, %v49
  %v113 = vpack.c.bf16 %v52, %v51
  %v114 = vpack.c.bf16 %v54, %v53
  %v115 = vpack.c.bf16 %v56, %v55
  %v116 = vpack.c.bf16 %v58, %v57
  %v117 = vpack.c.bf16 %v60, %v59
  %v118 = vpack.c.bf16 %v62, %v61
  %v119 = vpack.c.bf16 %v64, %v63
  %v120 = vpack.c.bf16 %v66, %v65
  %v121 = vpack.c.bf16 %v68, %v67
  %v122 = vpack.c.bf16 %v70, %v69
  %v123 = vpack.c.bf16 %v72, %v71
  %v124 = vpack.c.bf16 %v74, %v73
  %v125 = vpack.c.bf16 %v76, %v75
  %v126 = vpack.c.bf16 %v78, %v77
  %v127 = vpack.c.bf16 %v80, %v79
  %v128 = vpack.c.bf16 %v82, %v81
  %v129 = vpack.c.bf16 %v84, %v83
  %v130 = vpack.c.bf16 %v86, %v85
  %v131 = vpack.c.bf16 %v88, %v87
  %v132 = vpack.c.bf16 %v90, %v89
  %v133 = vpack.c.bf16 %v92, %v91
  %v134 = vpack.c.bf16 %v94, %v93
  %v135 = vpack.c.bf16 %v96, %v95
  %v136 = vpack.c.bf16 %v98, %v97
  %v137 = vpack.c.bf16 %v100, %v99
  %v138 = vpack.c.bf16 %v102, %v101
  %v139 = vpack.c.bf16 %v104, %v103
  %v140 = vpack.c.bf16 %v106, %v105
  %v141 = vpack.c.bf16 %v108, %v107
  %v142 = vpack.c.bf16 %v110, %v109
  %v143 = vld [vmem:[%s1] sm:$0xf]
  %v144 = vld [vmem:[%s1 + $0x4] sm:$0xf]
  %v145 = vld [vmem:[%s1 + $0x8] sm:$0xf]
  %v146 = vld [vmem:[%s1 + $0xc] sm:$0xf]
  %v147 = vld [vmem:[%s2] sm:$0x1]
  %v149 = vperm.slane %v147, 0
  %v155 = vunpack.c.l.b16 %v143
  %v156 = vunpack.c.l.b16 %v144
  %v157 = vunpack.c.l.b16 %v145
  %v158 = vunpack.c.l.b16 %v146
  %v159 = vpack.c.b16 %v156, %v155
  %v160 = vpack.c.b16 %v158, %v157
  %vm163 = vcmask 261120
  %v165 = vsel %vm163, %v111, 0
  %v168 = vsel %vm163, %v112, 0
  %v171 = vsel %vm163, %v113, 0
  %v174 = vsel %vm163, %v114, 0
  %v177 = vsel %vm163, %v115, 0
  %v180 = vsel %vm163, %v116, 0
  %v183 = vsel %vm163, %v117, 0
  %v186 = vsel %vm163, %v118, 0
  %v189 = vsel %vm163, %v119, 0
  %v192 = vsel %vm163, %v120, 0
  %v195 = vsel %vm163, %v121, 0
  %v198 = vsel %vm163, %v122, 0
  %v201 = vsel %vm163, %v123, 0
  %v204 = vsel %vm163, %v124, 0
  %v207 = vsel %vm163, %v125, 0
  %v210 = vsel %vm163, %v126, 0
  %v213 = vsel %vm163, %v127, 0
  %v216 = vsel %vm163, %v128, 0
  %v219 = vsel %vm163, %v129, 0
  %v222 = vsel %vm163, %v130, 0
  %v225 = vsel %vm163, %v131, 0
  %v228 = vsel %vm163, %v132, 0
  %v231 = vsel %vm163, %v133, 0
  %v234 = vsel %vm163, %v134, 0
  %v237 = vsel %vm163, %v135, 0
  %v240 = vsel %vm163, %v136, 0
  %v243 = vsel %vm163, %v137, 0
  %v246 = vsel %vm163, %v138, 0
  %v249 = vsel %vm163, %v139, 0
  %v252 = vsel %vm163, %v140, 0
  %v255 = vsel %vm163, %v141, 0
  %v258 = vsel %vm163, %v142, 0
  %260 = vmatpush.bf16.msra.mxu0 0
  %261 = vmatpush.bf16.msra.mxu0 0
  %262 = vmatpush.bf16.msra.mxu0 0
  %263 = vmatpush.bf16.msra.mxu0 0
  %264 = vmatpush.bf16.msra.mxu0 0
  %265 = vmatpush.bf16.msra.mxu0 0
  %266 = vmatpush.bf16.msra.mxu0 %v160
  %267 = vmatpush.bf16.msra.mxu0 %v159
  %268 = vmatmul.bf16.gmra.mxu0 %v165
  %v269 = vpop.f32.mrf.mxu0
  %v270 = vadd.f32 %v149, %v269
  %v271 = vpop.f32.mrf.mxu0
  %v272 = vadd.f32 %v149, %v271
  %273 = vmatmul.bf16.gmra.mxu0 %v168
  %v274 = vpop.f32.mrf.mxu0
  %v275 = vadd.f32 %v149, %v274
  %v276 = vpop.f32.mrf.mxu0
  %v277 = vadd.f32 %v149, %v276
  %278 = vmatmul.bf16.gmra.mxu0 %v171
  %v279 = vpop.f32.mrf.mxu0
  %v280 = vadd.f32 %v149, %v279
  %v281 = vpop.f32.mrf.mxu0
  %v282 = vadd.f32 %v149, %v281
  %283 = vmatmul.bf16.gmra.mxu0 %v174
  %v284 = vpop.f32.mrf.mxu0
  %v285 = vadd.f32 %v149, %v284
  %v286 = vpop.f32.mrf.mxu0
  %v287 = vadd.f32 %v149, %v286
  %288 = vmatmul.bf16.gmra.mxu0 %v177
  %v289 = vpop.f32.mrf.mxu0
  %v290 = vadd.f32 %v149, %v289
  %v291 = vpop.f32.mrf.mxu0
  %v292 = vadd.f32 %v149, %v291
  %293 = vmatmul.bf16.gmra.mxu0 %v180
  %v294 = vpop.f32.mrf.mxu0
  %v295 = vadd.f32 %v149, %v294
  %v296 = vpop.f32.mrf.mxu0
  %v297 = vadd.f32 %v149, %v296
  %298 = vmatmul.bf16.gmra.mxu0 %v183
  %v299 = vpop.f32.mrf.mxu0
  %v300 = vadd.f32 %v149, %v299
  %v301 = vpop.f32.mrf.mxu0
  %v302 = vadd.f32 %v149, %v301
  %303 = vmatmul.bf16.gmra.mxu0 %v186
  %v304 = vpop.f32.mrf.mxu0
  %v305 = vadd.f32 %v149, %v304
  %v306 = vpop.f32.mrf.mxu0
  %v307 = vadd.f32 %v149, %v306
  %308 = vmatmul.bf16.gmra.mxu0 %v189
  %v309 = vpop.f32.mrf.mxu0
  %v310 = vadd.f32 %v149, %v309
  %v311 = vpop.f32.mrf.mxu0
  %v312 = vadd.f32 %v149, %v311
  %313 = vmatmul.bf16.gmra.mxu0 %v192
  %v314 = vpop.f32.mrf.mxu0
  %v315 = vadd.f32 %v149, %v314
  %v316 = vpop.f32.mrf.mxu0
  %v317 = vadd.f32 %v149, %v316
  %318 = vmatmul.bf16.gmra.mxu0 %v195
  %v319 = vpop.f32.mrf.mxu0
  %v320 = vadd.f32 %v149, %v319
  %v321 = vpop.f32.mrf.mxu0
  %v322 = vadd.f32 %v149, %v321
  %323 = vmatmul.bf16.gmra.mxu0 %v198
  %v324 = vpop.f32.mrf.mxu0
  %v325 = vadd.f32 %v149, %v324
  %v326 = vpop.f32.mrf.mxu0
  %v327 = vadd.f32 %v149, %v326
  %328 = vmatmul.bf16.gmra.mxu0 %v201
  %v329 = vpop.f32.mrf.mxu0
  %v330 = vadd.f32 %v149, %v329
  %v331 = vpop.f32.mrf.mxu0
  %v332 = vadd.f32 %v149, %v331
  %333 = vmatmul.bf16.gmra.mxu0 %v204
  %v334 = vpop.f32.mrf.mxu0
  %v335 = vadd.f32 %v149, %v334
  %v336 = vpop.f32.mrf.mxu0
  %v337 = vadd.f32 %v149, %v336
  %338 = vmatmul.bf16.gmra.mxu0 %v207
  %v339 = vpop.f32.mrf.mxu0
  %v340 = vadd.f32 %v149, %v339
  %v341 = vpop.f32.mrf.mxu0
  %v342 = vadd.f32 %v149, %v341
  %343 = vmatmul.bf16.gmra.mxu0 %v210
  %v344 = vpop.f32.mrf.mxu0
  %v345 = vadd.f32 %v149, %v344
  %v346 = vpop.f32.mrf.mxu0
  %v347 = vadd.f32 %v149, %v346
  %348 = vmatmul.bf16.gmra.mxu0 %v213
  %v349 = vpop.f32.mrf.mxu0
  %v350 = vadd.f32 %v149, %v349
  %v351 = vpop.f32.mrf.mxu0
  %v352 = vadd.f32 %v149, %v351
  %353 = vmatmul.bf16.gmra.mxu0 %v216
  %v354 = vpop.f32.mrf.mxu0
  %v355 = vadd.f32 %v149, %v354
  %v356 = vpop.f32.mrf.mxu0
  %v357 = vadd.f32 %v149, %v356
  %358 = vmatmul.bf16.gmra.mxu0 %v219
  %v359 = vpop.f32.mrf.mxu0
  %v360 = vadd.f32 %v149, %v359
  %v361 = vpop.f32.mrf.mxu0
  %v362 = vadd.f32 %v149, %v361
  %363 = vmatmul.bf16.gmra.mxu0 %v222
  %v364 = vpop.f32.mrf.mxu0
  %v365 = vadd.f32 %v149, %v364
  %v366 = vpop.f32.mrf.mxu0
  %v367 = vadd.f32 %v149, %v366
  %368 = vmatmul.bf16.gmra.mxu0 %v225
  %v369 = vpop.f32.mrf.mxu0
  %v370 = vadd.f32 %v149, %v369
  %v371 = vpop.f32.mrf.mxu0
  %v372 = vadd.f32 %v149, %v371
  %373 = vmatmul.bf16.gmra.mxu0 %v228
  %v374 = vpop.f32.mrf.mxu0
  %v375 = vadd.f32 %v149, %v374
  %v376 = vpop.f32.mrf.mxu0
  %v377 = vadd.f32 %v149, %v376
  %378 = vmatmul.bf16.gmra.mxu0 %v231
  %v379 = vpop.f32.mrf.mxu0
  %v380 = vadd.f32 %v149, %v379
  %v381 = vpop.f32.mrf.mxu0
  %v382 = vadd.f32 %v149, %v381
  %383 = vmatmul.bf16.gmra.mxu0 %v234
  %v384 = vpop.f32.mrf.mxu0
  %v385 = vadd.f32 %v149, %v384
  %v386 = vpop.f32.mrf.mxu0
  %v387 = vadd.f32 %v149, %v386
  %388 = vmatmul.bf16.gmra.mxu0 %v237
  %v389 = vpop.f32.mrf.mxu0
  %v390 = vadd.f32 %v149, %v389
  %v391 = vpop.f32.mrf.mxu0
  %v392 = vadd.f32 %v149, %v391
  %393 = vmatmul.bf16.gmra.mxu0 %v240
  %v394 = vpop.f32.mrf.mxu0
  %v395 = vadd.f32 %v149, %v394
  %v396 = vpop.f32.mrf.mxu0
  %v397 = vadd.f32 %v149, %v396
  %398 = vmatmul.bf16.gmra.mxu0 %v243
  %v399 = vpop.f32.mrf.mxu0
  %v400 = vadd.f32 %v149, %v399
  %v401 = vpop.f32.mrf.mxu0
  %v402 = vadd.f32 %v149, %v401
  %403 = vmatmul.bf16.gmra.mxu0 %v246
  %v404 = vpop.f32.mrf.mxu0
  %v405 = vadd.f32 %v149, %v404
  %v406 = vpop.f32.mrf.mxu0
  %v407 = vadd.f32 %v149, %v406
  %408 = vmatmul.bf16.gmra.mxu0 %v249
  %v409 = vpop.f32.mrf.mxu0
  %v410 = vadd.f32 %v149, %v409
  %v411 = vpop.f32.mrf.mxu0
  %v412 = vadd.f32 %v149, %v411
  %413 = vmatmul.bf16.gmra.mxu0 %v252
  %v414 = vpop.f32.mrf.mxu0
  %v415 = vadd.f32 %v149, %v414
  %v416 = vpop.f32.mrf.mxu0
  %v417 = vadd.f32 %v149, %v416
  %418 = vmatmul.bf16.gmra.mxu0 %v255
  %v419 = vpop.f32.mrf.mxu0
  %v420 = vadd.f32 %v149, %v419
  %v421 = vpop.f32.mrf.mxu0
  %v422 = vadd.f32 %v149, %v421
  %423 = vmatmul.bf16.gmra.mxu0 %v258
  %v424 = vpop.f32.mrf.mxu0
  %v425 = vadd.f32 %v149, %v424
  %v426 = vpop.f32.mrf.mxu0
  %v427 = vadd.f32 %v149, %v426
  %428 = vdwg.mxu0
  %v429 = vmax.f32 %v270, 0.0
  %v430 = vmax.f32 %v272, 0.0
  %v431 = vmax.f32 %v275, 0.0
  %v432 = vmax.f32 %v277, 0.0
  %v433 = vmax.f32 %v280, 0.0
  %v434 = vmax.f32 %v282, 0.0
  %v435 = vmax.f32 %v285, 0.0
  %v436 = vmax.f32 %v287, 0.0
  %v437 = vmax.f32 %v290, 0.0
  %v438 = vmax.f32 %v292, 0.0
  %v439 = vmax.f32 %v295, 0.0
  %v440 = vmax.f32 %v297, 0.0
  %v441 = vmax.f32 %v300, 0.0
  %v442 = vmax.f32 %v302, 0.0
  %v443 = vmax.f32 %v305, 0.0
  %v444 = vmax.f32 %v307, 0.0
  %v445 = vmax.f32 %v310, 0.0
  %v446 = vmax.f32 %v312, 0.0
  %v447 = vmax.f32 %v315, 0.0
  %v448 = vmax.f32 %v317, 0.0
  %v449 = vmax.f32 %v320, 0.0
  %v450 = vmax.f32 %v322, 0.0
  %v451 = vmax.f32 %v325, 0.0
  %v452 = vmax.f32 %v327, 0.0
  %v453 = vmax.f32 %v330, 0.0
  %v454 = vmax.f32 %v332, 0.0
  %v455 = vmax.f32 %v335, 0.0
  %v456 = vmax.f32 %v337, 0.0
  %v457 = vmax.f32 %v340, 0.0
  %v458 = vmax.f32 %v342, 0.0
  %v459 = vmax.f32 %v345, 0.0
  %v460 = vmax.f32 %v347, 0.0
  %v461 = vmax.f32 %v350, 0.0
  %v462 = vmax.f32 %v352, 0.0
  %v463 = vmax.f32 %v355, 0.0
  %v464 = vmax.f32 %v357, 0.0
  %v465 = vmax.f32 %v360, 0.0
  %v466 = vmax.f32 %v362, 0.0
  %v467 = vmax.f32 %v365, 0.0
  %v468 = vmax.f32 %v367, 0.0
  %v469 = vmax.f32 %v370, 0.0
  %v470 = vmax.f32 %v372, 0.0
  %v471 = vmax.f32 %v375, 0.0
  %v472 = vmax.f32 %v377, 0.0
  %v473 = vmax.f32 %v380, 0.0
  %v474 = vmax.f32 %v382, 0.0
  %v475 = vmax.f32 %v385, 0.0
  %v476 = vmax.f32 %v387, 0.0
  %v477 = vmax.f32 %v390, 0.0
  %v478 = vmax.f32 %v392, 0.0
  %v479 = vmax.f32 %v395, 0.0
  %v480 = vmax.f32 %v397, 0.0
  %v481 = vmax.f32 %v400, 0.0
  %v482 = vmax.f32 %v402, 0.0
  %v483 = vmax.f32 %v405, 0.0
  %v484 = vmax.f32 %v407, 0.0
  %v485 = vmax.f32 %v410, 0.0
  %v486 = vmax.f32 %v412, 0.0
  %v487 = vmax.f32 %v415, 0.0
  %v488 = vmax.f32 %v417, 0.0
  %v489 = vmax.f32 %v420, 0.0
  %v490 = vmax.f32 %v422, 0.0
  %v491 = vmax.f32 %v425, 0.0
  %v492 = vmax.f32 %v427, 0.0
  %v493 = vpack.c.bf16 %v430, %v429
  %v494 = vpack.c.bf16 %v432, %v431
  %v495 = vpack.c.bf16 %v434, %v433
  %v496 = vpack.c.bf16 %v436, %v435
  %v497 = vpack.c.bf16 %v438, %v437
  %v498 = vpack.c.bf16 %v440, %v439
  %v499 = vpack.c.bf16 %v442, %v441
  %v500 = vpack.c.bf16 %v444, %v443
  %v501 = vpack.c.bf16 %v446, %v445
  %v502 = vpack.c.bf16 %v448, %v447
  %v503 = vpack.c.bf16 %v450, %v449
  %v504 = vpack.c.bf16 %v452, %v451
  %v505 = vpack.c.bf16 %v454, %v453
  %v506 = vpack.c.bf16 %v456, %v455
  %v507 = vpack.c.bf16 %v458, %v457
  %v508 = vpack.c.bf16 %v460, %v459
  %v509 = vpack.c.bf16 %v462, %v461
  %v510 = vpack.c.bf16 %v464, %v463
  %v511 = vpack.c.bf16 %v466, %v465
  %v512 = vpack.c.bf16 %v468, %v467
  %v513 = vpack.c.bf16 %v470, %v469
  %v514 = vpack.c.bf16 %v472, %v471
  %v515 = vpack.c.bf16 %v474, %v473
  %v516 = vpack.c.bf16 %v476, %v475
  %v517 = vpack.c.bf16 %v478, %v477
  %v518 = vpack.c.bf16 %v480, %v479
  %v519 = vpack.c.bf16 %v482, %v481
  %v520 = vpack.c.bf16 %v484, %v483
  %v521 = vpack.c.bf16 %v486, %v485
  %v522 = vpack.c.bf16 %v488, %v487
  %v523 = vpack.c.bf16 %v490, %v489
  %v524 = vpack.c.bf16 %v492, %v491
  %v525 = vld [vmem:[%s3] sm:$0xf]
  %v526 = vld [vmem:[%s3 + $0x4] sm:$0xf]
  %v527 = vld [vmem:[%s3 + $0x8] sm:$0xf]
  %v528 = vld [vmem:[%s3 + $0xc] sm:$0xf]
  %v529 = vld [vmem:[%s3 + $0x10] sm:$0xf]
  %v530 = vld [vmem:[%s3 + $0x14] sm:$0xf]
  %v531 = vld [vmem:[%s3 + $0x18] sm:$0xf]
  %v532 = vld [vmem:[%s3 + $0x1c] sm:$0xf]
  %v533 = vld [vmem:[%s4] sm:$0x1]
  %v535 = vperm.slane %v533, 0
  %v545 = vunpack.c.l.b16 %v525
  %v546 = vunpack.c.l.b16 %v526
  %v547 = vunpack.c.l.b16 %v527
  %v548 = vunpack.c.l.b16 %v528
  %v549 = vunpack.c.l.b16 %v529
  %v550 = vunpack.c.l.b16 %v530
  %v551 = vunpack.c.l.b16 %v531
  %v552 = vunpack.c.l.b16 %v532
  %v553 = vpack.c.b16 %v546, %v545
  %v554 = vpack.c.b16 %v548, %v547
  %v555 = vpack.c.b16 %v550, %v549
  %v556 = vpack.c.b16 %v552, %v551
  %vm561 = vcmask 523264
  %v563 = vsel %vm561, %v493, 0
  %v566 = vsel %vm561, %v494, 0
  %v569 = vsel %vm561, %v495, 0
  %v572 = vsel %vm561, %v496, 0
  %v575 = vsel %vm561, %v497, 0
  %v578 = vsel %vm561, %v498, 0
  %v581 = vsel %vm561, %v499, 0
  %v584 = vsel %vm561, %v500, 0
  %v587 = vsel %vm561, %v501, 0
  %v590 = vsel %vm561, %v502, 0
  %v593 = vsel %vm561, %v503, 0
  %v596 = vsel %vm561, %v504, 0
  %v599 = vsel %vm561, %v505, 0
  %v602 = vsel %vm561, %v506, 0
  %v605 = vsel %vm561, %v507, 0
  %v608 = vsel %vm561, %v508, 0
  %v611 = vsel %vm561, %v509, 0
  %v614 = vsel %vm561, %v510, 0
  %v617 = vsel %vm561, %v511, 0
  %v620 = vsel %vm561, %v512, 0
  %v623 = vsel %vm561, %v513, 0
  %v626 = vsel %vm561, %v514, 0
  %v629 = vsel %vm561, %v515, 0
  %v632 = vsel %vm561, %v516, 0
  %v635 = vsel %vm561, %v517, 0
  %v638 = vsel %vm561, %v518, 0
  %v641 = vsel %vm561, %v519, 0
  %v644 = vsel %vm561, %v520, 0
  %v647 = vsel %vm561, %v521, 0
  %v650 = vsel %vm561, %v522, 0
  %v653 = vsel %vm561, %v523, 0
  %v656 = vsel %vm561, %v524, 0
  %658 = vmatpush.bf16.msra.mxu0 0
  %659 = vmatpush.bf16.msra.mxu0 0
  %660 = vmatpush.bf16.msra.mxu0 0
  %661 = vmatpush.bf16.msra.mxu0 0
  %662 = vmatpush.bf16.msra.mxu0 %v556
  %663 = vmatpush.bf16.msra.mxu0 %v555
  %664 = vmatpush.bf16.msra.mxu0 %v554
  %665 = vmatpush.bf16.msra.mxu0 %v553
  %666 = vmatmul.bf16.gmra.mxu0 %v563
  %v667 = vpop.f32.mrf.mxu0
  %v668 = vadd.f32 %v535, %v667
  %v669 = vpop.f32.mrf.mxu0
  %v670 = vadd.f32 %v535, %v669
  %671 = vmatmul.bf16.gmra.mxu0 %v566
  %v672 = vpop.f32.mrf.mxu0
  %v673 = vadd.f32 %v535, %v672
  %v674 = vpop.f32.mrf.mxu0
  %v675 = vadd.f32 %v535, %v674
  %676 = vmatmul.bf16.gmra.mxu0 %v569
  %v677 = vpop.f32.mrf.mxu0
  %v678 = vadd.f32 %v535, %v677
  %v679 = vpop.f32.mrf.mxu0
  %v680 = vadd.f32 %v535, %v679
  %681 = vmatmul.bf16.gmra.mxu0 %v572
  %v682 = vpop.f32.mrf.mxu0
  %v683 = vadd.f32 %v535, %v682
  %v684 = vpop.f32.mrf.mxu0
  %v685 = vadd.f32 %v535, %v684
  %686 = vmatmul.bf16.gmra.mxu0 %v575
  %v687 = vpop.f32.mrf.mxu0
  %v688 = vadd.f32 %v535, %v687
  %v689 = vpop.f32.mrf.mxu0
  %v690 = vadd.f32 %v535, %v689
  %691 = vmatmul.bf16.gmra.mxu0 %v578
  %v692 = vpop.f32.mrf.mxu0
  %v693 = vadd.f32 %v535, %v692
  %v694 = vpop.f32.mrf.mxu0
  %v695 = vadd.f32 %v535, %v694
  %696 = vmatmul.bf16.gmra.mxu0 %v581
  %v697 = vpop.f32.mrf.mxu0
  %v698 = vadd.f32 %v535, %v697
  %v699 = vpop.f32.mrf.mxu0
  %v700 = vadd.f32 %v535, %v699
  %701 = vmatmul.bf16.gmra.mxu0 %v584
  %v702 = vpop.f32.mrf.mxu0
  %v703 = vadd.f32 %v535, %v702
  %v704 = vpop.f32.mrf.mxu0
  %v705 = vadd.f32 %v535, %v704
  %706 = vmatmul.bf16.gmra.mxu0 %v587
  %v707 = vpop.f32.mrf.mxu0
  %v708 = vadd.f32 %v535, %v707
  %v709 = vpop.f32.mrf.mxu0
  %v710 = vadd.f32 %v535, %v709
  %711 = vmatmul.bf16.gmra.mxu0 %v590
  %v712 = vpop.f32.mrf.mxu0
  %v713 = vadd.f32 %v535, %v712
  %v714 = vpop.f32.mrf.mxu0
  %v715 = vadd.f32 %v535, %v714
  %716 = vmatmul.bf16.gmra.mxu0 %v593
  %v717 = vpop.f32.mrf.mxu0
  %v718 = vadd.f32 %v535, %v717
  %v719 = vpop.f32.mrf.mxu0
  %v720 = vadd.f32 %v535, %v719
  %721 = vmatmul.bf16.gmra.mxu0 %v596
  %v722 = vpop.f32.mrf.mxu0
  %v723 = vadd.f32 %v535, %v722
  %v724 = vpop.f32.mrf.mxu0
  %v725 = vadd.f32 %v535, %v724
  %726 = vmatmul.bf16.gmra.mxu0 %v599
  %v727 = vpop.f32.mrf.mxu0
  %v728 = vadd.f32 %v535, %v727
  %v729 = vpop.f32.mrf.mxu0
  %v730 = vadd.f32 %v535, %v729
  %731 = vmatmul.bf16.gmra.mxu0 %v602
  %v732 = vpop.f32.mrf.mxu0
  %v733 = vadd.f32 %v535, %v732
  %v734 = vpop.f32.mrf.mxu0
  %v735 = vadd.f32 %v535, %v734
  %736 = vmatmul.bf16.gmra.mxu0 %v605
  %v737 = vpop.f32.mrf.mxu0
  %v738 = vadd.f32 %v535, %v737
  %v739 = vpop.f32.mrf.mxu0
  %v740 = vadd.f32 %v535, %v739
  %741 = vmatmul.bf16.gmra.mxu0 %v608
  %v742 = vpop.f32.mrf.mxu0
  %v743 = vadd.f32 %v535, %v742
  %v744 = vpop.f32.mrf.mxu0
  %v745 = vadd.f32 %v535, %v744
  %746 = vmatmul.bf16.gmra.mxu0 %v611
  %v747 = vpop.f32.mrf.mxu0
  %v748 = vadd.f32 %v535, %v747
  %v749 = vpop.f32.mrf.mxu0
  %v750 = vadd.f32 %v535, %v749
  %751 = vmatmul.bf16.gmra.mxu0 %v614
  %v752 = vpop.f32.mrf.mxu0
  %v753 = vadd.f32 %v535, %v752
  %v754 = vpop.f32.mrf.mxu0
  %v755 = vadd.f32 %v535, %v754
  %756 = vmatmul.bf16.gmra.mxu0 %v617
  %v757 = vpop.f32.mrf.mxu0
  %v758 = vadd.f32 %v535, %v757
  %v759 = vpop.f32.mrf.mxu0
  %v760 = vadd.f32 %v535, %v759
  %761 = vmatmul.bf16.gmra.mxu0 %v620
  %v762 = vpop.f32.mrf.mxu0
  %v763 = vadd.f32 %v535, %v762
  %v764 = vpop.f32.mrf.mxu0
  %v765 = vadd.f32 %v535, %v764
  %766 = vmatmul.bf16.gmra.mxu0 %v623
  %v767 = vpop.f32.mrf.mxu0
  %v768 = vadd.f32 %v535, %v767
  %v769 = vpop.f32.mrf.mxu0
  %v770 = vadd.f32 %v535, %v769
  %771 = vmatmul.bf16.gmra.mxu0 %v626
  %v772 = vpop.f32.mrf.mxu0
  %v773 = vadd.f32 %v535, %v772
  %v774 = vpop.f32.mrf.mxu0
  %v775 = vadd.f32 %v535, %v774
  %776 = vmatmul.bf16.gmra.mxu0 %v629
  %v777 = vpop.f32.mrf.mxu0
  %v778 = vadd.f32 %v535, %v777
  %v779 = vpop.f32.mrf.mxu0
  %v780 = vadd.f32 %v535, %v779
  %781 = vmatmul.bf16.gmra.mxu0 %v632
  %v782 = vpop.f32.mrf.mxu0
  %v783 = vadd.f32 %v535, %v782
  %v784 = vpop.f32.mrf.mxu0
  %v785 = vadd.f32 %v535, %v784
  %786 = vmatmul.bf16.gmra.mxu0 %v635
  %v787 = vpop.f32.mrf.mxu0
  %v788 = vadd.f32 %v535, %v787
  %v789 = vpop.f32.mrf.mxu0
  %v790 = vadd.f32 %v535, %v789
  %791 = vmatmul.bf16.gmra.mxu0 %v638
  %v792 = vpop.f32.mrf.mxu0
  %v793 = vadd.f32 %v535, %v792
  %v794 = vpop.f32.mrf.mxu0
  %v795 = vadd.f32 %v535, %v794
  %796 = vmatmul.bf16.gmra.mxu0 %v641
  %v797 = vpop.f32.mrf.mxu0
  %v798 = vadd.f32 %v535, %v797
  %v799 = vpop.f32.mrf.mxu0
  %v800 = vadd.f32 %v535, %v799
  %801 = vmatmul.bf16.gmra.mxu0 %v644
  %v802 = vpop.f32.mrf.mxu0
  %v803 = vadd.f32 %v535, %v802
  %v804 = vpop.f32.mrf.mxu0
  %v805 = vadd.f32 %v535, %v804
  %806 = vmatmul.bf16.gmra.mxu0 %v647
  %v807 = vpop.f32.mrf.mxu0
  %v808 = vadd.f32 %v535, %v807
  %v809 = vpop.f32.mrf.mxu0
  %v810 = vadd.f32 %v535, %v809
  %811 = vmatmul.bf16.gmra.mxu0 %v650
  %v812 = vpop.f32.mrf.mxu0
  %v813 = vadd.f32 %v535, %v812
  %v814 = vpop.f32.mrf.mxu0
  %v815 = vadd.f32 %v535, %v814
  %816 = vmatmul.bf16.gmra.mxu0 %v653
  %v817 = vpop.f32.mrf.mxu0
  %v818 = vadd.f32 %v535, %v817
  %v819 = vpop.f32.mrf.mxu0
  %v820 = vadd.f32 %v535, %v819
  %821 = vmatmul.bf16.gmra.mxu0 %v656
  %v822 = vpop.f32.mrf.mxu0
  %v823 = vadd.f32 %v535, %v822
  %v824 = vpop.f32.mrf.mxu0
  %v825 = vadd.f32 %v535, %v824
  %826 = vdwg.mxu0
  %v827 = vmax.f32 %v668, 0.0
  %v828 = vmax.f32 %v670, 0.0
  %v829 = vmax.f32 %v673, 0.0
  %v830 = vmax.f32 %v675, 0.0
  %v831 = vmax.f32 %v678, 0.0
  %v832 = vmax.f32 %v680, 0.0
  %v833 = vmax.f32 %v683, 0.0
  %v834 = vmax.f32 %v685, 0.0
  %v835 = vmax.f32 %v688, 0.0
  %v836 = vmax.f32 %v690, 0.0
  %v837 = vmax.f32 %v693, 0.0
  %v838 = vmax.f32 %v695, 0.0
  %v839 = vmax.f32 %v698, 0.0
  %v840 = vmax.f32 %v700, 0.0
  %v841 = vmax.f32 %v703, 0.0
  %v842 = vmax.f32 %v705, 0.0
  %v843 = vmax.f32 %v708, 0.0
  %v844 = vmax.f32 %v710, 0.0
  %v845 = vmax.f32 %v713, 0.0
  %v846 = vmax.f32 %v715, 0.0
  %v847 = vmax.f32 %v718, 0.0
  %v848 = vmax.f32 %v720, 0.0
  %v849 = vmax.f32 %v723, 0.0
  %v850 = vmax.f32 %v725, 0.0
  %v851 = vmax.f32 %v728, 0.0
  %v852 = vmax.f32 %v730, 0.0
  %v853 = vmax.f32 %v733, 0.0
  %v854 = vmax.f32 %v735, 0.0
  %v855 = vmax.f32 %v738, 0.0
  %v856 = vmax.f32 %v740, 0.0
  %v857 = vmax.f32 %v743, 0.0
  %v858 = vmax.f32 %v745, 0.0
  %v859 = vmax.f32 %v748, 0.0
  %v860 = vmax.f32 %v750, 0.0
  %v861 = vmax.f32 %v753, 0.0
  %v862 = vmax.f32 %v755, 0.0
  %v863 = vmax.f32 %v758, 0.0
  %v864 = vmax.f32 %v760, 0.0
  %v865 = vmax.f32 %v763, 0.0
  %v866 = vmax.f32 %v765, 0.0
  %v867 = vmax.f32 %v768, 0.0
  %v868 = vmax.f32 %v770, 0.0
  %v869 = vmax.f32 %v773, 0.0
  %v870 = vmax.f32 %v775, 0.0
  %v871 = vmax.f32 %v778, 0.0
  %v872 = vmax.f32 %v780, 0.0
  %v873 = vmax.f32 %v783, 0.0
  %v874 = vmax.f32 %v785, 0.0
  %v875 = vmax.f32 %v788, 0.0
  %v876 = vmax.f32 %v790, 0.0
  %v877 = vmax.f32 %v793, 0.0
  %v878 = vmax.f32 %v795, 0.0
  %v879 = vmax.f32 %v798, 0.0
  %v880 = vmax.f32 %v800, 0.0
  %v881 = vmax.f32 %v803, 0.0
  %v882 = vmax.f32 %v805, 0.0
  %v883 = vmax.f32 %v808, 0.0
  %v884 = vmax.f32 %v810, 0.0
  %v885 = vmax.f32 %v813, 0.0
  %v886 = vmax.f32 %v815, 0.0
  %v887 = vmax.f32 %v818, 0.0
  %v888 = vmax.f32 %v820, 0.0
  %v889 = vmax.f32 %v823, 0.0
  %v890 = vmax.f32 %v825, 0.0
  %v891 = vpack.c.bf16 %v828, %v827
  %v892 = vpack.c.bf16 %v830, %v829
  %v893 = vpack.c.bf16 %v832, %v831
  %v894 = vpack.c.bf16 %v834, %v833
  %v895 = vpack.c.bf16 %v836, %v835
  %v896 = vpack.c.bf16 %v838, %v837
  %v897 = vpack.c.bf16 %v840, %v839
  %v898 = vpack.c.bf16 %v842, %v841
  %v899 = vpack.c.bf16 %v844, %v843
  %v900 = vpack.c.bf16 %v846, %v845
  %v901 = vpack.c.bf16 %v848, %v847
  %v902 = vpack.c.bf16 %v850, %v849
  %v903 = vpack.c.bf16 %v852, %v851
  %v904 = vpack.c.bf16 %v854, %v853
  %v905 = vpack.c.bf16 %v856, %v855
  %v906 = vpack.c.bf16 %v858, %v857
  %v907 = vpack.c.bf16 %v860, %v859
  %v908 = vpack.c.bf16 %v862, %v861
  %v909 = vpack.c.bf16 %v864, %v863
  %v910 = vpack.c.bf16 %v866, %v865
  %v911 = vpack.c.bf16 %v868, %v867
  %v912 = vpack.c.bf16 %v870, %v869
  %v913 = vpack.c.bf16 %v872, %v871
  %v914 = vpack.c.bf16 %v874, %v873
  %v915 = vpack.c.bf16 %v876, %v875
  %v916 = vpack.c.bf16 %v878, %v877
  %v917 = vpack.c.bf16 %v880, %v879
  %v918 = vpack.c.bf16 %v882, %v881
  %v919 = vpack.c.bf16 %v884, %v883
  %v920 = vpack.c.bf16 %v886, %v885
  %v921 = vpack.c.bf16 %v888, %v887
  %v922 = vpack.c.bf16 %v890, %v889
  %v923 = vld [vmem:[%s5] sm:$0xf]
  %v924 = vld [vmem:[%s5 + $0x4] sm:$0xf]
  %v925 = vld [vmem:[%s5 + $0x8] sm:$0xf]
  %v926 = vld [vmem:[%s5 + $0xc] sm:$0xf]
  %v927 = vld [vmem:[%s5 + $0x10] sm:$0xf]
  %v928 = vld [vmem:[%s5 + $0x14] sm:$0xf]
  %v929 = vld [vmem:[%s5 + $0x18] sm:$0xf]
  %v930 = vld [vmem:[%s5 + $0x1c] sm:$0xf]
  %v931 = vld [vmem:[%s6] sm:$0x1]
  %v933 = vperm.slane %v931, 0
  %v943 = vunpack.c.l.b16 %v923
  %v944 = vunpack.c.l.b16 %v924
  %v945 = vunpack.c.l.b16 %v925
  %v946 = vunpack.c.l.b16 %v926
  %v947 = vunpack.c.l.b16 %v927
  %v948 = vunpack.c.l.b16 %v928
  %v949 = vunpack.c.l.b16 %v929
  %v950 = vunpack.c.l.b16 %v930
  %v951 = vpack.c.b16 %v944, %v943
  %v952 = vpack.c.b16 %v946, %v945
  %v953 = vpack.c.b16 %v948, %v947
  %v954 = vpack.c.b16 %v950, %v949
  %v960 = vsel %vm561, %v891, 0
  %v963 = vsel %vm561, %v892, 0
  %v966 = vsel %vm561, %v893, 0
  %v969 = vsel %vm561, %v894, 0
  %v972 = vsel %vm561, %v895, 0
  %v975 = vsel %vm561, %v896, 0
  %v978 = vsel %vm561, %v897, 0
  %v981 = vsel %vm561, %v898, 0
  %v984 = vsel %vm561, %v899, 0
  %v987 = vsel %vm561, %v900, 0
  %v990 = vsel %vm561, %v901, 0
  %v993 = vsel %vm561, %v902, 0
  %v996 = vsel %vm561, %v903, 0
  %v999 = vsel %vm561, %v904, 0
  %v1002 = vsel %vm561, %v905, 0
  %v1005 = vsel %vm561, %v906, 0
  %v1008 = vsel %vm561, %v907, 0
  %v1011 = vsel %vm561, %v908, 0
  %v1014 = vsel %vm561, %v909, 0
  %v1017 = vsel %vm561, %v910, 0
  %v1020 = vsel %vm561, %v911, 0
  %v1023 = vsel %vm561, %v912, 0
  %v1026 = vsel %vm561, %v913, 0
  %v1029 = vsel %vm561, %v914, 0
  %v1032 = vsel %vm561, %v915, 0
  %v1035 = vsel %vm561, %v916, 0
  %v1038 = vsel %vm561, %v917, 0
  %v1041 = vsel %vm561, %v918, 0
  %v1044 = vsel %vm561, %v919, 0
  %v1047 = vsel %vm561, %v920, 0
  %v1050 = vsel %vm561, %v921, 0
  %v1053 = vsel %vm561, %v922, 0
  %1055 = vmatpush.bf16.msra.mxu0 0
  %1056 = vmatpush.bf16.msra.mxu0 0
  %1057 = vmatpush.bf16.msra.mxu0 0
  %1058 = vmatpush.bf16.msra.mxu0 0
  %1059 = vmatpush.bf16.msra.mxu0 %v954
  %1060 = vmatpush.bf16.msra.mxu0 %v953
  %1061 = vmatpush.bf16.msra.mxu0 %v952
  %1062 = vmatpush.bf16.msra.mxu0 %v951
  %1063 = vmatmul.bf16.gmra.mxu0 %v960
  %v1064 = vpop.f32.mrf.mxu0
  %v1065 = vadd.f32 %v933, %v1064
  %v1066 = vpop.f32.mrf.mxu0
  %v1067 = vadd.f32 %v933, %v1066
  %1068 = vmatmul.bf16.gmra.mxu0 %v963
  %v1069 = vpop.f32.mrf.mxu0
  %v1070 = vadd.f32 %v933, %v1069
  %v1071 = vpop.f32.mrf.mxu0
  %v1072 = vadd.f32 %v933, %v1071
  %1073 = vmatmul.bf16.gmra.mxu0 %v966
  %v1074 = vpop.f32.mrf.mxu0
  %v1075 = vadd.f32 %v933, %v1074
  %v1076 = vpop.f32.mrf.mxu0
  %v1077 = vadd.f32 %v933, %v1076
  %1078 = vmatmul.bf16.gmra.mxu0 %v969
  %v1079 = vpop.f32.mrf.mxu0
  %v1080 = vadd.f32 %v933, %v1079
  %v1081 = vpop.f32.mrf.mxu0
  %v1082 = vadd.f32 %v933, %v1081
  %1083 = vmatmul.bf16.gmra.mxu0 %v972
  %v1084 = vpop.f32.mrf.mxu0
  %v1085 = vadd.f32 %v933, %v1084
  %v1086 = vpop.f32.mrf.mxu0
  %v1087 = vadd.f32 %v933, %v1086
  %1088 = vmatmul.bf16.gmra.mxu0 %v975
  %v1089 = vpop.f32.mrf.mxu0
  %v1090 = vadd.f32 %v933, %v1089
  %v1091 = vpop.f32.mrf.mxu0
  %v1092 = vadd.f32 %v933, %v1091
  %1093 = vmatmul.bf16.gmra.mxu0 %v978
  %v1094 = vpop.f32.mrf.mxu0
  %v1095 = vadd.f32 %v933, %v1094
  %v1096 = vpop.f32.mrf.mxu0
  %v1097 = vadd.f32 %v933, %v1096
  %1098 = vmatmul.bf16.gmra.mxu0 %v981
  %v1099 = vpop.f32.mrf.mxu0
  %v1100 = vadd.f32 %v933, %v1099
  %v1101 = vpop.f32.mrf.mxu0
  %v1102 = vadd.f32 %v933, %v1101
  %1103 = vmatmul.bf16.gmra.mxu0 %v984
  %v1104 = vpop.f32.mrf.mxu0
  %v1105 = vadd.f32 %v933, %v1104
  %v1106 = vpop.f32.mrf.mxu0
  %v1107 = vadd.f32 %v933, %v1106
  %1108 = vmatmul.bf16.gmra.mxu0 %v987
  %v1109 = vpop.f32.mrf.mxu0
  %v1110 = vadd.f32 %v933, %v1109
  %v1111 = vpop.f32.mrf.mxu0
  %v1112 = vadd.f32 %v933, %v1111
  %1113 = vmatmul.bf16.gmra.mxu0 %v990
  %v1114 = vpop.f32.mrf.mxu0
  %v1115 = vadd.f32 %v933, %v1114
  %v1116 = vpop.f32.mrf.mxu0
  %v1117 = vadd.f32 %v933, %v1116
  %1118 = vmatmul.bf16.gmra.mxu0 %v993
  %v1119 = vpop.f32.mrf.mxu0
  %v1120 = vadd.f32 %v933, %v1119
  %v1121 = vpop.f32.mrf.mxu0
  %v1122 = vadd.f32 %v933, %v1121
  %1123 = vmatmul.bf16.gmra.mxu0 %v996
  %v1124 = vpop.f32.mrf.mxu0
  %v1125 = vadd.f32 %v933, %v1124
  %v1126 = vpop.f32.mrf.mxu0
  %v1127 = vadd.f32 %v933, %v1126
  %1128 = vmatmul.bf16.gmra.mxu0 %v999
  %v1129 = vpop.f32.mrf.mxu0
  %v1130 = vadd.f32 %v933, %v1129
  %v1131 = vpop.f32.mrf.mxu0
  %v1132 = vadd.f32 %v933, %v1131
  %1133 = vmatmul.bf16.gmra.mxu0 %v1002
  %v1134 = vpop.f32.mrf.mxu0
  %v1135 = vadd.f32 %v933, %v1134
  %v1136 = vpop.f32.mrf.mxu0
  %v1137 = vadd.f32 %v933, %v1136
  %1138 = vmatmul.bf16.gmra.mxu0 %v1005
  %v1139 = vpop.f32.mrf.mxu0
  %v1140 = vadd.f32 %v933, %v1139
  %v1141 = vpop.f32.mrf.mxu0
  %v1142 = vadd.f32 %v933, %v1141
  %1143 = vmatmul.bf16.gmra.mxu0 %v1008
  %v1144 = vpop.f32.mrf.mxu0
  %v1145 = vadd.f32 %v933, %v1144
  %v1146 = vpop.f32.mrf.mxu0
  %v1147 = vadd.f32 %v933, %v1146
  %1148 = vmatmul.bf16.gmra.mxu0 %v1011
  %v1149 = vpop.f32.mrf.mxu0
  %v1150 = vadd.f32 %v933, %v1149
  %v1151 = vpop.f32.mrf.mxu0
  %v1152 = vadd.f32 %v933, %v1151
  %1153 = vmatmul.bf16.gmra.mxu0 %v1014
  %v1154 = vpop.f32.mrf.mxu0
  %v1155 = vadd.f32 %v933, %v1154
  %v1156 = vpop.f32.mrf.mxu0
  %v1157 = vadd.f32 %v933, %v1156
  %1158 = vmatmul.bf16.gmra.mxu0 %v1017
  %v1159 = vpop.f32.mrf.mxu0
  %v1160 = vadd.f32 %v933, %v1159
  %v1161 = vpop.f32.mrf.mxu0
  %v1162 = vadd.f32 %v933, %v1161
  %1163 = vmatmul.bf16.gmra.mxu0 %v1020
  %v1164 = vpop.f32.mrf.mxu0
  %v1165 = vadd.f32 %v933, %v1164
  %v1166 = vpop.f32.mrf.mxu0
  %v1167 = vadd.f32 %v933, %v1166
  %1168 = vmatmul.bf16.gmra.mxu0 %v1023
  %v1169 = vpop.f32.mrf.mxu0
  %v1170 = vadd.f32 %v933, %v1169
  %v1171 = vpop.f32.mrf.mxu0
  %v1172 = vadd.f32 %v933, %v1171
  %1173 = vmatmul.bf16.gmra.mxu0 %v1026
  %v1174 = vpop.f32.mrf.mxu0
  %v1175 = vadd.f32 %v933, %v1174
  %v1176 = vpop.f32.mrf.mxu0
  %v1177 = vadd.f32 %v933, %v1176
  %1178 = vmatmul.bf16.gmra.mxu0 %v1029
  %v1179 = vpop.f32.mrf.mxu0
  %v1180 = vadd.f32 %v933, %v1179
  %v1181 = vpop.f32.mrf.mxu0
  %v1182 = vadd.f32 %v933, %v1181
  %1183 = vmatmul.bf16.gmra.mxu0 %v1032
  %v1184 = vpop.f32.mrf.mxu0
  %v1185 = vadd.f32 %v933, %v1184
  %v1186 = vpop.f32.mrf.mxu0
  %v1187 = vadd.f32 %v933, %v1186
  %1188 = vmatmul.bf16.gmra.mxu0 %v1035
  %v1189 = vpop.f32.mrf.mxu0
  %v1190 = vadd.f32 %v933, %v1189
  %v1191 = vpop.f32.mrf.mxu0
  %v1192 = vadd.f32 %v933, %v1191
  %1193 = vmatmul.bf16.gmra.mxu0 %v1038
  %v1194 = vpop.f32.mrf.mxu0
  %v1195 = vadd.f32 %v933, %v1194
  %v1196 = vpop.f32.mrf.mxu0
  %v1197 = vadd.f32 %v933, %v1196
  %1198 = vmatmul.bf16.gmra.mxu0 %v1041
  %v1199 = vpop.f32.mrf.mxu0
  %v1200 = vadd.f32 %v933, %v1199
  %v1201 = vpop.f32.mrf.mxu0
  %v1202 = vadd.f32 %v933, %v1201
  %1203 = vmatmul.bf16.gmra.mxu0 %v1044
  %v1204 = vpop.f32.mrf.mxu0
  %v1205 = vadd.f32 %v933, %v1204
  %v1206 = vpop.f32.mrf.mxu0
  %v1207 = vadd.f32 %v933, %v1206
  %1208 = vmatmul.bf16.gmra.mxu0 %v1047
  %v1209 = vpop.f32.mrf.mxu0
  %v1210 = vadd.f32 %v933, %v1209
  %v1211 = vpop.f32.mrf.mxu0
  %v1212 = vadd.f32 %v933, %v1211
  %1213 = vmatmul.bf16.gmra.mxu0 %v1050
  %v1214 = vpop.f32.mrf.mxu0
  %v1215 = vadd.f32 %v933, %v1214
  %v1216 = vpop.f32.mrf.mxu0
  %v1217 = vadd.f32 %v933, %v1216
  %1218 = vmatmul.bf16.gmra.mxu0 %v1053
  %v1219 = vpop.f32.mrf.mxu0
  %v1220 = vadd.f32 %v933, %v1219
  %v1221 = vpop.f32.mrf.mxu0
  %v1222 = vadd.f32 %v933, %v1221
  %1223 = vdwg.mxu0
  %v1224 = vmax.f32 %v1065, -30.0
  %v1225 = vmax.f32 %v1067, -30.0
  %v1226 = vmax.f32 %v1070, -30.0
  %v1227 = vmax.f32 %v1072, -30.0
  %v1228 = vmax.f32 %v1075, -30.0
  %v1229 = vmax.f32 %v1077, -30.0
  %v1230 = vmax.f32 %v1080, -30.0
  %v1231 = vmax.f32 %v1082, -30.0
  %v1232 = vmax.f32 %v1085, -30.0
  %v1233 = vmax.f32 %v1087, -30.0
  %v1234 = vmax.f32 %v1090, -30.0
  %v1235 = vmax.f32 %v1092, -30.0
  %v1236 = vmax.f32 %v1095, -30.0
  %v1237 = vmax.f32 %v1097, -30.0
  %v1238 = vmax.f32 %v1100, -30.0
  %v1239 = vmax.f32 %v1102, -30.0
  %v1240 = vmax.f32 %v1105, -30.0
  %v1241 = vmax.f32 %v1107, -30.0
  %v1242 = vmax.f32 %v1110, -30.0
  %v1243 = vmax.f32 %v1112, -30.0
  %v1244 = vmax.f32 %v1115, -30.0
  %v1245 = vmax.f32 %v1117, -30.0
  %v1246 = vmax.f32 %v1120, -30.0
  %v1247 = vmax.f32 %v1122, -30.0
  %v1248 = vmax.f32 %v1125, -30.0
  %v1249 = vmax.f32 %v1127, -30.0
  %v1250 = vmax.f32 %v1130, -30.0
  %v1251 = vmax.f32 %v1132, -30.0
  %v1252 = vmax.f32 %v1135, -30.0
  %v1253 = vmax.f32 %v1137, -30.0
  %v1254 = vmax.f32 %v1140, -30.0
  %v1255 = vmax.f32 %v1142, -30.0
  %v1256 = vmax.f32 %v1145, -30.0
  %v1257 = vmax.f32 %v1147, -30.0
  %v1258 = vmax.f32 %v1150, -30.0
  %v1259 = vmax.f32 %v1152, -30.0
  %v1260 = vmax.f32 %v1155, -30.0
  %v1261 = vmax.f32 %v1157, -30.0
  %v1262 = vmax.f32 %v1160, -30.0
  %v1263 = vmax.f32 %v1162, -30.0
  %v1264 = vmax.f32 %v1165, -30.0
  %v1265 = vmax.f32 %v1167, -30.0
  %v1266 = vmax.f32 %v1170, -30.0
  %v1267 = vmax.f32 %v1172, -30.0
  %v1268 = vmax.f32 %v1175, -30.0
  %v1269 = vmax.f32 %v1177, -30.0
  %v1270 = vmax.f32 %v1180, -30.0
  %v1271 = vmax.f32 %v1182, -30.0
  %v1272 = vmax.f32 %v1185, -30.0
  %v1273 = vmax.f32 %v1187, -30.0
  %v1274 = vmax.f32 %v1190, -30.0
  %v1275 = vmax.f32 %v1192, -30.0
  %v1276 = vmax.f32 %v1195, -30.0
  %v1277 = vmax.f32 %v1197, -30.0
  %v1278 = vmax.f32 %v1200, -30.0
  %v1279 = vmax.f32 %v1202, -30.0
  %v1280 = vmax.f32 %v1205, -30.0
  %v1281 = vmax.f32 %v1207, -30.0
  %v1282 = vmax.f32 %v1210, -30.0
  %v1283 = vmax.f32 %v1212, -30.0
  %v1284 = vmax.f32 %v1215, -30.0
  %v1285 = vmax.f32 %v1217, -30.0
  %v1286 = vmax.f32 %v1220, -30.0
  %v1287 = vmax.f32 %v1222, -30.0
  %v1288 = vmin.f32 %v1224, 30.0
  %v1289 = vmin.f32 %v1225, 30.0
  %v1290 = vmin.f32 %v1226, 30.0
  %v1291 = vmin.f32 %v1227, 30.0
  %v1292 = vmin.f32 %v1228, 30.0
  %v1293 = vmin.f32 %v1229, 30.0
  %v1294 = vmin.f32 %v1230, 30.0
  %v1295 = vmin.f32 %v1231, 30.0
  %v1296 = vmin.f32 %v1232, 30.0
  %v1297 = vmin.f32 %v1233, 30.0
  %v1298 = vmin.f32 %v1234, 30.0
  %v1299 = vmin.f32 %v1235, 30.0
  %v1300 = vmin.f32 %v1236, 30.0
  %v1301 = vmin.f32 %v1237, 30.0
  %v1302 = vmin.f32 %v1238, 30.0
  %v1303 = vmin.f32 %v1239, 30.0
  %v1304 = vmin.f32 %v1240, 30.0
  %v1305 = vmin.f32 %v1241, 30.0
  %v1306 = vmin.f32 %v1242, 30.0
  %v1307 = vmin.f32 %v1243, 30.0
  %v1308 = vmin.f32 %v1244, 30.0
  %v1309 = vmin.f32 %v1245, 30.0
  %v1310 = vmin.f32 %v1246, 30.0
  %v1311 = vmin.f32 %v1247, 30.0
  %v1312 = vmin.f32 %v1248, 30.0
  %v1313 = vmin.f32 %v1249, 30.0
  %v1314 = vmin.f32 %v1250, 30.0
  %v1315 = vmin.f32 %v1251, 30.0
  %v1316 = vmin.f32 %v1252, 30.0
  %v1317 = vmin.f32 %v1253, 30.0
  %v1318 = vmin.f32 %v1254, 30.0
  %v1319 = vmin.f32 %v1255, 30.0
  %v1320 = vmin.f32 %v1256, 30.0
  %v1321 = vmin.f32 %v1257, 30.0
  %v1322 = vmin.f32 %v1258, 30.0
  %v1323 = vmin.f32 %v1259, 30.0
  %v1324 = vmin.f32 %v1260, 30.0
  %v1325 = vmin.f32 %v1261, 30.0
  %v1326 = vmin.f32 %v1262, 30.0
  %v1327 = vmin.f32 %v1263, 30.0
  %v1328 = vmin.f32 %v1264, 30.0
  %v1329 = vmin.f32 %v1265, 30.0
  %v1330 = vmin.f32 %v1266, 30.0
  %v1331 = vmin.f32 %v1267, 30.0
  %v1332 = vmin.f32 %v1268, 30.0
  %v1333 = vmin.f32 %v1269, 30.0
  %v1334 = vmin.f32 %v1270, 30.0
  %v1335 = vmin.f32 %v1271, 30.0
  %v1336 = vmin.f32 %v1272, 30.0
  %v1337 = vmin.f32 %v1273, 30.0
  %v1338 = vmin.f32 %v1274, 30.0
  %v1339 = vmin.f32 %v1275, 30.0
  %v1340 = vmin.f32 %v1276, 30.0
  %v1341 = vmin.f32 %v1277, 30.0
  %v1342 = vmin.f32 %v1278, 30.0
  %v1343 = vmin.f32 %v1279, 30.0
  %v1344 = vmin.f32 %v1280, 30.0
  %v1345 = vmin.f32 %v1281, 30.0
  %v1346 = vmin.f32 %v1282, 30.0
  %v1347 = vmin.f32 %v1283, 30.0
  %v1348 = vmin.f32 %v1284, 30.0
  %v1349 = vmin.f32 %v1285, 30.0
  %v1350 = vmin.f32 %v1286, 30.0
  %v1351 = vmin.f32 %v1287, 30.0
  %v1352 = vsub.f32 0.0, %v1288
  %v1353 = vsub.f32 0.0, %v1289
  %v1354 = vsub.f32 0.0, %v1290
  %v1355 = vsub.f32 0.0, %v1291
  %v1356 = vsub.f32 0.0, %v1292
  %v1357 = vsub.f32 0.0, %v1293
  %v1358 = vsub.f32 0.0, %v1294
  %v1359 = vsub.f32 0.0, %v1295
  %v1360 = vsub.f32 0.0, %v1296
  %v1361 = vsub.f32 0.0, %v1297
  %v1362 = vsub.f32 0.0, %v1298
  %v1363 = vsub.f32 0.0, %v1299
  %v1364 = vsub.f32 0.0, %v1300
  %v1365 = vsub.f32 0.0, %v1301
  %v1366 = vsub.f32 0.0, %v1302
  %v1367 = vsub.f32 0.0, %v1303
  %v1368 = vsub.f32 0.0, %v1304
  %v1369 = vsub.f32 0.0, %v1305
  %v1370 = vsub.f32 0.0, %v1306
  %v1371 = vsub.f32 0.0, %v1307
  %v1372 = vsub.f32 0.0, %v1308
  %v1373 = vsub.f32 0.0, %v1309
  %v1374 = vsub.f32 0.0, %v1310
  %v1375 = vsub.f32 0.0, %v1311
  %v1376 = vsub.f32 0.0, %v1312
  %v1377 = vsub.f32 0.0, %v1313
  %v1378 = vsub.f32 0.0, %v1314
  %v1379 = vsub.f32 0.0, %v1315
  %v1380 = vsub.f32 0.0, %v1316
  %v1381 = vsub.f32 0.0, %v1317
  %v1382 = vsub.f32 0.0, %v1318
  %v1383 = vsub.f32 0.0, %v1319
  %v1384 = vsub.f32 0.0, %v1320
  %v1385 = vsub.f32 0.0, %v1321
  %v1386 = vsub.f32 0.0, %v1322
  %v1387 = vsub.f32 0.0, %v1323
  %v1388 = vsub.f32 0.0, %v1324
  %v1389 = vsub.f32 0.0, %v1325
  %v1390 = vsub.f32 0.0, %v1326
  %v1391 = vsub.f32 0.0, %v1327
  %v1392 = vsub.f32 0.0, %v1328
  %v1393 = vsub.f32 0.0, %v1329
  %v1394 = vsub.f32 0.0, %v1330
  %v1395 = vsub.f32 0.0, %v1331
  %v1396 = vsub.f32 0.0, %v1332
  %v1397 = vsub.f32 0.0, %v1333
  %v1398 = vsub.f32 0.0, %v1334
  %v1399 = vsub.f32 0.0, %v1335
  %v1400 = vsub.f32 0.0, %v1336
  %v1401 = vsub.f32 0.0, %v1337
  %v1402 = vsub.f32 0.0, %v1338
  %v1403 = vsub.f32 0.0, %v1339
  %v1404 = vsub.f32 0.0, %v1340
  %v1405 = vsub.f32 0.0, %v1341
  %v1406 = vsub.f32 0.0, %v1342
  %v1407 = vsub.f32 0.0, %v1343
  %v1408 = vsub.f32 0.0, %v1344
  %v1409 = vsub.f32 0.0, %v1345
  %v1410 = vsub.f32 0.0, %v1346
  %v1411 = vsub.f32 0.0, %v1347
  %v1412 = vsub.f32 0.0, %v1348
  %v1413 = vsub.f32 0.0, %v1349
  %v1414 = vsub.f32 0.0, %v1350
  %v1415 = vsub.f32 0.0, %v1351
  %v1416 = vmul.f32 %v1352, 1.442695
  %v1417 = vpow.pop %v1416
  %v1418 = vmul.f32 %v1353, 1.442695
  %v1419 = vpow.pop %v1418
  %v1420 = vmul.f32 %v1354, 1.442695
  %v1421 = vpow.pop %v1420
  %v1422 = vmul.f32 %v1355, 1.442695
  %v1423 = vpow.pop %v1422
  %v1424 = vmul.f32 %v1356, 1.442695
  %v1425 = vpow.pop %v1424
  %v1426 = vmul.f32 %v1357, 1.442695
  %v1427 = vpow.pop %v1426
  %v1428 = vmul.f32 %v1358, 1.442695
  %v1429 = vpow.pop %v1428
  %v1430 = vmul.f32 %v1359, 1.442695
  %v1431 = vpow.pop %v1430
  %v1432 = vmul.f32 %v1360, 1.442695
  %v1433 = vpow.pop %v1432
  %v1434 = vmul.f32 %v1361, 1.442695
  %v1435 = vpow.pop %v1434
  %v1436 = vmul.f32 %v1362, 1.442695
  %v1437 = vpow.pop %v1436
  %v1438 = vmul.f32 %v1363, 1.442695
  %v1439 = vpow.pop %v1438
  %v1440 = vmul.f32 %v1364, 1.442695
  %v1441 = vpow.pop %v1440
  %v1442 = vmul.f32 %v1365, 1.442695
  %v1443 = vpow.pop %v1442
  %v1444 = vmul.f32 %v1366, 1.442695
  %v1445 = vpow.pop %v1444
  %v1446 = vmul.f32 %v1367, 1.442695
  %v1447 = vpow.pop %v1446
  %v1448 = vmul.f32 %v1368, 1.442695
  %v1449 = vpow.pop %v1448
  %v1450 = vmul.f32 %v1369, 1.442695
  %v1451 = vpow.pop %v1450
  %v1452 = vmul.f32 %v1370, 1.442695
  %v1453 = vpow.pop %v1452
  %v1454 = vmul.f32 %v1371, 1.442695
  %v1455 = vpow.pop %v1454
  %v1456 = vmul.f32 %v1372, 1.442695
  %v1457 = vpow.pop %v1456
  %v1458 = vmul.f32 %v1373, 1.442695
  %v1459 = vpow.pop %v1458
  %v1460 = vmul.f32 %v1374, 1.442695
  %v1461 = vpow.pop %v1460
  %v1462 = vmul.f32 %v1375, 1.442695
  %v1463 = vpow.pop %v1462
  %v1464 = vmul.f32 %v1376, 1.442695
  %v1465 = vpow.pop %v1464
  %v1466 = vmul.f32 %v1377, 1.442695
  %v1467 = vpow.pop %v1466
  %v1468 = vmul.f32 %v1378, 1.442695
  %v1469 = vpow.pop %v1468
  %v1470 = vmul.f32 %v1379, 1.442695
  %v1471 = vpow.pop %v1470
  %v1472 = vmul.f32 %v1380, 1.442695
  %v1473 = vpow.pop %v1472
  %v1474 = vmul.f32 %v1381, 1.442695
  %v1475 = vpow.pop %v1474
  %v1476 = vmul.f32 %v1382, 1.442695
  %v1477 = vpow.pop %v1476
  %v1478 = vmul.f32 %v1383, 1.442695
  %v1479 = vpow.pop %v1478
  %v1480 = vmul.f32 %v1384, 1.442695
  %v1481 = vpow.pop %v1480
  %v1482 = vmul.f32 %v1385, 1.442695
  %v1483 = vpow.pop %v1482
  %v1484 = vmul.f32 %v1386, 1.442695
  %v1485 = vpow.pop %v1484
  %v1486 = vmul.f32 %v1387, 1.442695
  %v1487 = vpow.pop %v1486
  %v1488 = vmul.f32 %v1388, 1.442695
  %v1489 = vpow.pop %v1488
  %v1490 = vmul.f32 %v1389, 1.442695
  %v1491 = vpow.pop %v1490
  %v1492 = vmul.f32 %v1390, 1.442695
  %v1493 = vpow.pop %v1492
  %v1494 = vmul.f32 %v1391, 1.442695
  %v1495 = vpow.pop %v1494
  %v1496 = vmul.f32 %v1392, 1.442695
  %v1497 = vpow.pop %v1496
  %v1498 = vmul.f32 %v1393, 1.442695
  %v1499 = vpow.pop %v1498
  %v1500 = vmul.f32 %v1394, 1.442695
  %v1501 = vpow.pop %v1500
  %v1502 = vmul.f32 %v1395, 1.442695
  %v1503 = vpow.pop %v1502
  %v1504 = vmul.f32 %v1396, 1.442695
  %v1505 = vpow.pop %v1504
  %v1506 = vmul.f32 %v1397, 1.442695
  %v1507 = vpow.pop %v1506
  %v1508 = vmul.f32 %v1398, 1.442695
  %v1509 = vpow.pop %v1508
  %v1510 = vmul.f32 %v1399, 1.442695
  %v1511 = vpow.pop %v1510
  %v1512 = vmul.f32 %v1400, 1.442695
  %v1513 = vpow.pop %v1512
  %v1514 = vmul.f32 %v1401, 1.442695
  %v1515 = vpow.pop %v1514
  %v1516 = vmul.f32 %v1402, 1.442695
  %v1517 = vpow.pop %v1516
  %v1518 = vmul.f32 %v1403, 1.442695
  %v1519 = vpow.pop %v1518
  %v1520 = vmul.f32 %v1404, 1.442695
  %v1521 = vpow.pop %v1520
  %v1522 = vmul.f32 %v1405, 1.442695
  %v1523 = vpow.pop %v1522
  %v1524 = vmul.f32 %v1406, 1.442695
  %v1525 = vpow.pop %v1524
  %v1526 = vmul.f32 %v1407, 1.442695
  %v1527 = vpow.pop %v1526
  %v1528 = vmul.f32 %v1408, 1.442695
  %v1529 = vpow.pop %v1528
  %v1530 = vmul.f32 %v1409, 1.442695
  %v1531 = vpow.pop %v1530
  %v1532 = vmul.f32 %v1410, 1.442695
  %v1533 = vpow.pop %v1532
  %v1534 = vmul.f32 %v1411, 1.442695
  %v1535 = vpow.pop %v1534
  %v1536 = vmul.f32 %v1412, 1.442695
  %v1537 = vpow.pop %v1536
  %v1538 = vmul.f32 %v1413, 1.442695
  %v1539 = vpow.pop %v1538
  %v1540 = vmul.f32 %v1414, 1.442695
  %v1541 = vpow.pop %v1540
  %v1542 = vmul.f32 %v1415, 1.442695
  %v1543 = vpow.pop %v1542
  %v1544 = vadd.f32 %v1417, 1.0
  %v1545 = vadd.f32 %v1419, 1.0
  %v1546 = vadd.f32 %v1421, 1.0
  %v1547 = vadd.f32 %v1423, 1.0
  %v1548 = vadd.f32 %v1425, 1.0
  %v1549 = vadd.f32 %v1427, 1.0
  %v1550 = vadd.f32 %v1429, 1.0
  %v1551 = vadd.f32 %v1431, 1.0
  %v1552 = vadd.f32 %v1433, 1.0
  %v1553 = vadd.f32 %v1435, 1.0
  %v1554 = vadd.f32 %v1437, 1.0
  %v1555 = vadd.f32 %v1439, 1.0
  %v1556 = vadd.f32 %v1441, 1.0
  %v1557 = vadd.f32 %v1443, 1.0
  %v1558 = vadd.f32 %v1445, 1.0
  %v1559 = vadd.f32 %v1447, 1.0
  %v1560 = vadd.f32 %v1449, 1.0
  %v1561 = vadd.f32 %v1451, 1.0
  %v1562 = vadd.f32 %v1453, 1.0
  %v1563 = vadd.f32 %v1455, 1.0
  %v1564 = vadd.f32 %v1457, 1.0
  %v1565 = vadd.f32 %v1459, 1.0
  %v1566 = vadd.f32 %v1461, 1.0
  %v1567 = vadd.f32 %v1463, 1.0
  %v1568 = vadd.f32 %v1465, 1.0
  %v1569 = vadd.f32 %v1467, 1.0
  %v1570 = vadd.f32 %v1469, 1.0
  %v1571 = vadd.f32 %v1471, 1.0
  %v1572 = vadd.f32 %v1473, 1.0
  %v1573 = vadd.f32 %v1475, 1.0
  %v1574 = vadd.f32 %v1477, 1.0
  %v1575 = vadd.f32 %v1479, 1.0
  %v1576 = vadd.f32 %v1481, 1.0
  %v1577 = vadd.f32 %v1483, 1.0
  %v1578 = vadd.f32 %v1485, 1.0
  %v1579 = vadd.f32 %v1487, 1.0
  %v1580 = vadd.f32 %v1489, 1.0
  %v1581 = vadd.f32 %v1491, 1.0
  %v1582 = vadd.f32 %v1493, 1.0
  %v1583 = vadd.f32 %v1495, 1.0
  %v1584 = vadd.f32 %v1497, 1.0
  %v1585 = vadd.f32 %v1499, 1.0
  %v1586 = vadd.f32 %v1501, 1.0
  %v1587 = vadd.f32 %v1503, 1.0
  %v1588 = vadd.f32 %v1505, 1.0
  %v1589 = vadd.f32 %v1507, 1.0
  %v1590 = vadd.f32 %v1509, 1.0
  %v1591 = vadd.f32 %v1511, 1.0
  %v1592 = vadd.f32 %v1513, 1.0
  %v1593 = vadd.f32 %v1515, 1.0
  %v1594 = vadd.f32 %v1517, 1.0
  %v1595 = vadd.f32 %v1519, 1.0
  %v1596 = vadd.f32 %v1521, 1.0
  %v1597 = vadd.f32 %v1523, 1.0
  %v1598 = vadd.f32 %v1525, 1.0
  %v1599 = vadd.f32 %v1527, 1.0
  %v1600 = vadd.f32 %v1529, 1.0
  %v1601 = vadd.f32 %v1531, 1.0
  %v1602 = vadd.f32 %v1533, 1.0
  %v1603 = vadd.f32 %v1535, 1.0
  %v1604 = vadd.f32 %v1537, 1.0
  %v1605 = vadd.f32 %v1539, 1.0
  %v1606 = vadd.f32 %v1541, 1.0
  %v1607 = vadd.f32 %v1543, 1.0
  %v1608 = vrcp.pop %v1544
  %v1609 = vmul.f32 %v1544, %v1608
  %v1610 = vsub.f32 1.0, %v1609
  %v1611 = vmul.f32 %v1608, %v1610
  %v1612 = vadd.f32 %v1608, %v1611
  %vm1613 = vweird.f32 %v1544
  %vm1614 = vweird.f32 %v1608
  %vm1615 = vmor %vm1613, %vm1614
  %v1616 = vsel %vm1615, %v1608, %v1612
  %v1617 = vand.u32 2147483647, %v1544
  %vm1618 = vcmp.eq.f32.partialorder %v1617, 8.507059e+37
  %v1619 = vand.u32 %v1544, 2147483648
  %v1620 = vor.u32 1.1754944e-38, %v1619
  %v1621 = vsel %vm1618, %v1620, %v1616
  %v1622 = vmul.f32 1.0, %v1621
  %v1623 = vrcp.pop %v1545
  %v1624 = vmul.f32 %v1545, %v1623
  %v1625 = vsub.f32 1.0, %v1624
  %v1626 = vmul.f32 %v1623, %v1625
  %v1627 = vadd.f32 %v1623, %v1626
  %vm1628 = vweird.f32 %v1545
  %vm1629 = vweird.f32 %v1623
  %vm1630 = vmor %vm1628, %vm1629
  %v1631 = vsel %vm1630, %v1623, %v1627
  %v1632 = vand.u32 2147483647, %v1545
  %vm1633 = vcmp.eq.f32.partialorder %v1632, 8.507059e+37
  %v1634 = vand.u32 %v1545, 2147483648
  %v1635 = vor.u32 1.1754944e-38, %v1634
  %v1636 = vsel %vm1633, %v1635, %v1631
  %v1637 = vmul.f32 1.0, %v1636
  %v1638 = vrcp.pop %v1546
  %v1639 = vmul.f32 %v1546, %v1638
  %v1640 = vsub.f32 1.0, %v1639
  %v1641 = vmul.f32 %v1638, %v1640
  %v1642 = vadd.f32 %v1638, %v1641
  %vm1643 = vweird.f32 %v1546
  %vm1644 = vweird.f32 %v1638
  %vm1645 = vmor %vm1643, %vm1644
  %v1646 = vsel %vm1645, %v1638, %v1642
  %v1647 = vand.u32 2147483647, %v1546
  %vm1648 = vcmp.eq.f32.partialorder %v1647, 8.507059e+37
  %v1649 = vand.u32 %v1546, 2147483648
  %v1650 = vor.u32 1.1754944e-38, %v1649
  %v1651 = vsel %vm1648, %v1650, %v1646
  %v1652 = vmul.f32 1.0, %v1651
  %v1653 = vrcp.pop %v1547
  %v1654 = vmul.f32 %v1547, %v1653
  %v1655 = vsub.f32 1.0, %v1654
  %v1656 = vmul.f32 %v1653, %v1655
  %v1657 = vadd.f32 %v1653, %v1656
  %vm1658 = vweird.f32 %v1547
  %vm1659 = vweird.f32 %v1653
  %vm1660 = vmor %vm1658, %vm1659
  %v1661 = vsel %vm1660, %v1653, %v1657
  %v1662 = vand.u32 2147483647, %v1547
  %vm1663 = vcmp.eq.f32.partialorder %v1662, 8.507059e+37
  %v1664 = vand.u32 %v1547, 2147483648
  %v1665 = vor.u32 1.1754944e-38, %v1664
  %v1666 = vsel %vm1663, %v1665, %v1661
  %v1667 = vmul.f32 1.0, %v1666
  %v1668 = vrcp.pop %v1548
  %v1669 = vmul.f32 %v1548, %v1668
  %v1670 = vsub.f32 1.0, %v1669
  %v1671 = vmul.f32 %v1668, %v1670
  %v1672 = vadd.f32 %v1668, %v1671
  %vm1673 = vweird.f32 %v1548
  %vm1674 = vweird.f32 %v1668
  %vm1675 = vmor %vm1673, %vm1674
  %v1676 = vsel %vm1675, %v1668, %v1672
  %v1677 = vand.u32 2147483647, %v1548
  %vm1678 = vcmp.eq.f32.partialorder %v1677, 8.507059e+37
  %v1679 = vand.u32 %v1548, 2147483648
  %v1680 = vor.u32 1.1754944e-38, %v1679
  %v1681 = vsel %vm1678, %v1680, %v1676
  %v1682 = vmul.f32 1.0, %v1681
  %v1683 = vrcp.pop %v1549
  %v1684 = vmul.f32 %v1549, %v1683
  %v1685 = vsub.f32 1.0, %v1684
  %v1686 = vmul.f32 %v1683, %v1685
  %v1687 = vadd.f32 %v1683, %v1686
  %vm1688 = vweird.f32 %v1549
  %vm1689 = vweird.f32 %v1683
  %vm1690 = vmor %vm1688, %vm1689
  %v1691 = vsel %vm1690, %v1683, %v1687
  %v1692 = vand.u32 2147483647, %v1549
  %vm1693 = vcmp.eq.f32.partialorder %v1692, 8.507059e+37
  %v1694 = vand.u32 %v1549, 2147483648
  %v1695 = vor.u32 1.1754944e-38, %v1694
  %v1696 = vsel %vm1693, %v1695, %v1691
  %v1697 = vmul.f32 1.0, %v1696
  %v1698 = vrcp.pop %v1550
  %v1699 = vmul.f32 %v1550, %v1698
  %v1700 = vsub.f32 1.0, %v1699
  %v1701 = vmul.f32 %v1698, %v1700
  %v1702 = vadd.f32 %v1698, %v1701
  %vm1703 = vweird.f32 %v1550
  %vm1704 = vweird.f32 %v1698
  %vm1705 = vmor %vm1703, %vm1704
  %v1706 = vsel %vm1705, %v1698, %v1702
  %v1707 = vand.u32 2147483647, %v1550
  %vm1708 = vcmp.eq.f32.partialorder %v1707, 8.507059e+37
  %v1709 = vand.u32 %v1550, 2147483648
  %v1710 = vor.u32 1.1754944e-38, %v1709
  %v1711 = vsel %vm1708, %v1710, %v1706
  %v1712 = vmul.f32 1.0, %v1711
  %v1713 = vrcp.pop %v1551
  %v1714 = vmul.f32 %v1551, %v1713
  %v1715 = vsub.f32 1.0, %v1714
  %v1716 = vmul.f32 %v1713, %v1715
  %v1717 = vadd.f32 %v1713, %v1716
  %vm1718 = vweird.f32 %v1551
  %vm1719 = vweird.f32 %v1713
  %vm1720 = vmor %vm1718, %vm1719
  %v1721 = vsel %vm1720, %v1713, %v1717
  %v1722 = vand.u32 2147483647, %v1551
  %vm1723 = vcmp.eq.f32.partialorder %v1722, 8.507059e+37
  %v1724 = vand.u32 %v1551, 2147483648
  %v1725 = vor.u32 1.1754944e-38, %v1724
  %v1726 = vsel %vm1723, %v1725, %v1721
  %v1727 = vmul.f32 1.0, %v1726
  %v1728 = vrcp.pop %v1552
  %v1729 = vmul.f32 %v1552, %v1728
  %v1730 = vsub.f32 1.0, %v1729
  %v1731 = vmul.f32 %v1728, %v1730
  %v1732 = vadd.f32 %v1728, %v1731
  %vm1733 = vweird.f32 %v1552
  %vm1734 = vweird.f32 %v1728
  %vm1735 = vmor %vm1733, %vm1734
  %v1736 = vsel %vm1735, %v1728, %v1732
  %v1737 = vand.u32 2147483647, %v1552
  %vm1738 = vcmp.eq.f32.partialorder %v1737, 8.507059e+37
  %v1739 = vand.u32 %v1552, 2147483648
  %v1740 = vor.u32 1.1754944e-38, %v1739
  %v1741 = vsel %vm1738, %v1740, %v1736
  %v1742 = vmul.f32 1.0, %v1741
  %v1743 = vrcp.pop %v1553
  %v1744 = vmul.f32 %v1553, %v1743
  %v1745 = vsub.f32 1.0, %v1744
  %v1746 = vmul.f32 %v1743, %v1745
  %v1747 = vadd.f32 %v1743, %v1746
  %vm1748 = vweird.f32 %v1553
  %vm1749 = vweird.f32 %v1743
  %vm1750 = vmor %vm1748, %vm1749
  %v1751 = vsel %vm1750, %v1743, %v1747
  %v1752 = vand.u32 2147483647, %v1553
  %vm1753 = vcmp.eq.f32.partialorder %v1752, 8.507059e+37
  %v1754 = vand.u32 %v1553, 2147483648
  %v1755 = vor.u32 1.1754944e-38, %v1754
  %v1756 = vsel %vm1753, %v1755, %v1751
  %v1757 = vmul.f32 1.0, %v1756
  %v1758 = vrcp.pop %v1554
  %v1759 = vmul.f32 %v1554, %v1758
  %v1760 = vsub.f32 1.0, %v1759
  %v1761 = vmul.f32 %v1758, %v1760
  %v1762 = vadd.f32 %v1758, %v1761
  %vm1763 = vweird.f32 %v1554
  %vm1764 = vweird.f32 %v1758
  %vm1765 = vmor %vm1763, %vm1764
  %v1766 = vsel %vm1765, %v1758, %v1762
  %v1767 = vand.u32 2147483647, %v1554
  %vm1768 = vcmp.eq.f32.partialorder %v1767, 8.507059e+37
  %v1769 = vand.u32 %v1554, 2147483648
  %v1770 = vor.u32 1.1754944e-38, %v1769
  %v1771 = vsel %vm1768, %v1770, %v1766
  %v1772 = vmul.f32 1.0, %v1771
  %v1773 = vrcp.pop %v1555
  %v1774 = vmul.f32 %v1555, %v1773
  %v1775 = vsub.f32 1.0, %v1774
  %v1776 = vmul.f32 %v1773, %v1775
  %v1777 = vadd.f32 %v1773, %v1776
  %vm1778 = vweird.f32 %v1555
  %vm1779 = vweird.f32 %v1773
  %vm1780 = vmor %vm1778, %vm1779
  %v1781 = vsel %vm1780, %v1773, %v1777
  %v1782 = vand.u32 2147483647, %v1555
  %vm1783 = vcmp.eq.f32.partialorder %v1782, 8.507059e+37
  %v1784 = vand.u32 %v1555, 2147483648
  %v1785 = vor.u32 1.1754944e-38, %v1784
  %v1786 = vsel %vm1783, %v1785, %v1781
  %v1787 = vmul.f32 1.0, %v1786
  %v1788 = vrcp.pop %v1556
  %v1789 = vmul.f32 %v1556, %v1788
  %v1790 = vsub.f32 1.0, %v1789
  %v1791 = vmul.f32 %v1788, %v1790
  %v1792 = vadd.f32 %v1788, %v1791
  %vm1793 = vweird.f32 %v1556
  %vm1794 = vweird.f32 %v1788
  %vm1795 = vmor %vm1793, %vm1794
  %v1796 = vsel %vm1795, %v1788, %v1792
  %v1797 = vand.u32 2147483647, %v1556
  %vm1798 = vcmp.eq.f32.partialorder %v1797, 8.507059e+37
  %v1799 = vand.u32 %v1556, 2147483648
  %v1800 = vor.u32 1.1754944e-38, %v1799
  %v1801 = vsel %vm1798, %v1800, %v1796
  %v1802 = vmul.f32 1.0, %v1801
  %v1803 = vrcp.pop %v1557
  %v1804 = vmul.f32 %v1557, %v1803
  %v1805 = vsub.f32 1.0, %v1804
  %v1806 = vmul.f32 %v1803, %v1805
  %v1807 = vadd.f32 %v1803, %v1806
  %vm1808 = vweird.f32 %v1557
  %vm1809 = vweird.f32 %v1803
  %vm1810 = vmor %vm1808, %vm1809
  %v1811 = vsel %vm1810, %v1803, %v1807
  %v1812 = vand.u32 2147483647, %v1557
  %vm1813 = vcmp.eq.f32.partialorder %v1812, 8.507059e+37
  %v1814 = vand.u32 %v1557, 2147483648
  %v1815 = vor.u32 1.1754944e-38, %v1814
  %v1816 = vsel %vm1813, %v1815, %v1811
  %v1817 = vmul.f32 1.0, %v1816
  %v1818 = vrcp.pop %v1558
  %v1819 = vmul.f32 %v1558, %v1818
  %v1820 = vsub.f32 1.0, %v1819
  %v1821 = vmul.f32 %v1818, %v1820
  %v1822 = vadd.f32 %v1818, %v1821
  %vm1823 = vweird.f32 %v1558
  %vm1824 = vweird.f32 %v1818
  %vm1825 = vmor %vm1823, %vm1824
  %v1826 = vsel %vm1825, %v1818, %v1822
  %v1827 = vand.u32 2147483647, %v1558
  %vm1828 = vcmp.eq.f32.partialorder %v1827, 8.507059e+37
  %v1829 = vand.u32 %v1558, 2147483648
  %v1830 = vor.u32 1.1754944e-38, %v1829
  %v1831 = vsel %vm1828, %v1830, %v1826
  %v1832 = vmul.f32 1.0, %v1831
  %v1833 = vrcp.pop %v1559
  %v1834 = vmul.f32 %v1559, %v1833
  %v1835 = vsub.f32 1.0, %v1834
  %v1836 = vmul.f32 %v1833, %v1835
  %v1837 = vadd.f32 %v1833, %v1836
  %vm1838 = vweird.f32 %v1559
  %vm1839 = vweird.f32 %v1833
  %vm1840 = vmor %vm1838, %vm1839
  %v1841 = vsel %vm1840, %v1833, %v1837
  %v1842 = vand.u32 2147483647, %v1559
  %vm1843 = vcmp.eq.f32.partialorder %v1842, 8.507059e+37
  %v1844 = vand.u32 %v1559, 2147483648
  %v1845 = vor.u32 1.1754944e-38, %v1844
  %v1846 = vsel %vm1843, %v1845, %v1841
  %v1847 = vmul.f32 1.0, %v1846
  %v1848 = vrcp.pop %v1560
  %v1849 = vmul.f32 %v1560, %v1848
  %v1850 = vsub.f32 1.0, %v1849
  %v1851 = vmul.f32 %v1848, %v1850
  %v1852 = vadd.f32 %v1848, %v1851
  %vm1853 = vweird.f32 %v1560
  %vm1854 = vweird.f32 %v1848
  %vm1855 = vmor %vm1853, %vm1854
  %v1856 = vsel %vm1855, %v1848, %v1852
  %v1857 = vand.u32 2147483647, %v1560
  %vm1858 = vcmp.eq.f32.partialorder %v1857, 8.507059e+37
  %v1859 = vand.u32 %v1560, 2147483648
  %v1860 = vor.u32 1.1754944e-38, %v1859
  %v1861 = vsel %vm1858, %v1860, %v1856
  %v1862 = vmul.f32 1.0, %v1861
  %v1863 = vrcp.pop %v1561
  %v1864 = vmul.f32 %v1561, %v1863
  %v1865 = vsub.f32 1.0, %v1864
  %v1866 = vmul.f32 %v1863, %v1865
  %v1867 = vadd.f32 %v1863, %v1866
  %vm1868 = vweird.f32 %v1561
  %vm1869 = vweird.f32 %v1863
  %vm1870 = vmor %vm1868, %vm1869
  %v1871 = vsel %vm1870, %v1863, %v1867
  %v1872 = vand.u32 2147483647, %v1561
  %vm1873 = vcmp.eq.f32.partialorder %v1872, 8.507059e+37
  %v1874 = vand.u32 %v1561, 2147483648
  %v1875 = vor.u32 1.1754944e-38, %v1874
  %v1876 = vsel %vm1873, %v1875, %v1871
  %v1877 = vmul.f32 1.0, %v1876
  %v1878 = vrcp.pop %v1562
  %v1879 = vmul.f32 %v1562, %v1878
  %v1880 = vsub.f32 1.0, %v1879
  %v1881 = vmul.f32 %v1878, %v1880
  %v1882 = vadd.f32 %v1878, %v1881
  %vm1883 = vweird.f32 %v1562
  %vm1884 = vweird.f32 %v1878
  %vm1885 = vmor %vm1883, %vm1884
  %v1886 = vsel %vm1885, %v1878, %v1882
  %v1887 = vand.u32 2147483647, %v1562
  %vm1888 = vcmp.eq.f32.partialorder %v1887, 8.507059e+37
  %v1889 = vand.u32 %v1562, 2147483648
  %v1890 = vor.u32 1.1754944e-38, %v1889
  %v1891 = vsel %vm1888, %v1890, %v1886
  %v1892 = vmul.f32 1.0, %v1891
  %v1893 = vrcp.pop %v1563
  %v1894 = vmul.f32 %v1563, %v1893
  %v1895 = vsub.f32 1.0, %v1894
  %v1896 = vmul.f32 %v1893, %v1895
  %v1897 = vadd.f32 %v1893, %v1896
  %vm1898 = vweird.f32 %v1563
  %vm1899 = vweird.f32 %v1893
  %vm1900 = vmor %vm1898, %vm1899
  %v1901 = vsel %vm1900, %v1893, %v1897
  %v1902 = vand.u32 2147483647, %v1563
  %vm1903 = vcmp.eq.f32.partialorder %v1902, 8.507059e+37
  %v1904 = vand.u32 %v1563, 2147483648
  %v1905 = vor.u32 1.1754944e-38, %v1904
  %v1906 = vsel %vm1903, %v1905, %v1901
  %v1907 = vmul.f32 1.0, %v1906
  %v1908 = vrcp.pop %v1564
  %v1909 = vmul.f32 %v1564, %v1908
  %v1910 = vsub.f32 1.0, %v1909
  %v1911 = vmul.f32 %v1908, %v1910
  %v1912 = vadd.f32 %v1908, %v1911
  %vm1913 = vweird.f32 %v1564
  %vm1914 = vweird.f32 %v1908
  %vm1915 = vmor %vm1913, %vm1914
  %v1916 = vsel %vm1915, %v1908, %v1912
  %v1917 = vand.u32 2147483647, %v1564
  %vm1918 = vcmp.eq.f32.partialorder %v1917, 8.507059e+37
  %v1919 = vand.u32 %v1564, 2147483648
  %v1920 = vor.u32 1.1754944e-38, %v1919
  %v1921 = vsel %vm1918, %v1920, %v1916
  %v1922 = vmul.f32 1.0, %v1921
  %v1923 = vrcp.pop %v1565
  %v1924 = vmul.f32 %v1565, %v1923
  %v1925 = vsub.f32 1.0, %v1924
  %v1926 = vmul.f32 %v1923, %v1925
  %v1927 = vadd.f32 %v1923, %v1926
  %vm1928 = vweird.f32 %v1565
  %vm1929 = vweird.f32 %v1923
  %vm1930 = vmor %vm1928, %vm1929
  %v1931 = vsel %vm1930, %v1923, %v1927
  %v1932 = vand.u32 2147483647, %v1565
  %vm1933 = vcmp.eq.f32.partialorder %v1932, 8.507059e+37
  %v1934 = vand.u32 %v1565, 2147483648
  %v1935 = vor.u32 1.1754944e-38, %v1934
  %v1936 = vsel %vm1933, %v1935, %v1931
  %v1937 = vmul.f32 1.0, %v1936
  %v1938 = vrcp.pop %v1566
  %v1939 = vmul.f32 %v1566, %v1938
  %v1940 = vsub.f32 1.0, %v1939
  %v1941 = vmul.f32 %v1938, %v1940
  %v1942 = vadd.f32 %v1938, %v1941
  %vm1943 = vweird.f32 %v1566
  %vm1944 = vweird.f32 %v1938
  %vm1945 = vmor %vm1943, %vm1944
  %v1946 = vsel %vm1945, %v1938, %v1942
  %v1947 = vand.u32 2147483647, %v1566
  %vm1948 = vcmp.eq.f32.partialorder %v1947, 8.507059e+37
  %v1949 = vand.u32 %v1566, 2147483648
  %v1950 = vor.u32 1.1754944e-38, %v1949
  %v1951 = vsel %vm1948, %v1950, %v1946
  %v1952 = vmul.f32 1.0, %v1951
  %v1953 = vrcp.pop %v1567
  %v1954 = vmul.f32 %v1567, %v1953
  %v1955 = vsub.f32 1.0, %v1954
  %v1956 = vmul.f32 %v1953, %v1955
  %v1957 = vadd.f32 %v1953, %v1956
  %vm1958 = vweird.f32 %v1567
  %vm1959 = vweird.f32 %v1953
  %vm1960 = vmor %vm1958, %vm1959
  %v1961 = vsel %vm1960, %v1953, %v1957
  %v1962 = vand.u32 2147483647, %v1567
  %vm1963 = vcmp.eq.f32.partialorder %v1962, 8.507059e+37
  %v1964 = vand.u32 %v1567, 2147483648
  %v1965 = vor.u32 1.1754944e-38, %v1964
  %v1966 = vsel %vm1963, %v1965, %v1961
  %v1967 = vmul.f32 1.0, %v1966
  %v1968 = vrcp.pop %v1568
  %v1969 = vmul.f32 %v1568, %v1968
  %v1970 = vsub.f32 1.0, %v1969
  %v1971 = vmul.f32 %v1968, %v1970
  %v1972 = vadd.f32 %v1968, %v1971
  %vm1973 = vweird.f32 %v1568
  %vm1974 = vweird.f32 %v1968
  %vm1975 = vmor %vm1973, %vm1974
  %v1976 = vsel %vm1975, %v1968, %v1972
  %v1977 = vand.u32 2147483647, %v1568
  %vm1978 = vcmp.eq.f32.partialorder %v1977, 8.507059e+37
  %v1979 = vand.u32 %v1568, 2147483648
  %v1980 = vor.u32 1.1754944e-38, %v1979
  %v1981 = vsel %vm1978, %v1980, %v1976
  %v1982 = vmul.f32 1.0, %v1981
  %v1983 = vrcp.pop %v1569
  %v1984 = vmul.f32 %v1569, %v1983
  %v1985 = vsub.f32 1.0, %v1984
  %v1986 = vmul.f32 %v1983, %v1985
  %v1987 = vadd.f32 %v1983, %v1986
  %vm1988 = vweird.f32 %v1569
  %vm1989 = vweird.f32 %v1983
  %vm1990 = vmor %vm1988, %vm1989
  %v1991 = vsel %vm1990, %v1983, %v1987
  %v1992 = vand.u32 2147483647, %v1569
  %vm1993 = vcmp.eq.f32.partialorder %v1992, 8.507059e+37
  %v1994 = vand.u32 %v1569, 2147483648
  %v1995 = vor.u32 1.1754944e-38, %v1994
  %v1996 = vsel %vm1993, %v1995, %v1991
  %v1997 = vmul.f32 1.0, %v1996
  %v1998 = vrcp.pop %v1570
  %v1999 = vmul.f32 %v1570, %v1998
  %v2000 = vsub.f32 1.0, %v1999
  %v2001 = vmul.f32 %v1998, %v2000
  %v2002 = vadd.f32 %v1998, %v2001
  %vm2003 = vweird.f32 %v1570
  %vm2004 = vweird.f32 %v1998
  %vm2005 = vmor %vm2003, %vm2004
  %v2006 = vsel %vm2005, %v1998, %v2002
  %v2007 = vand.u32 2147483647, %v1570
  %vm2008 = vcmp.eq.f32.partialorder %v2007, 8.507059e+37
  %v2009 = vand.u32 %v1570, 2147483648
  %v2010 = vor.u32 1.1754944e-38, %v2009
  %v2011 = vsel %vm2008, %v2010, %v2006
  %v2012 = vmul.f32 1.0, %v2011
  %v2013 = vrcp.pop %v1571
  %v2014 = vmul.f32 %v1571, %v2013
  %v2015 = vsub.f32 1.0, %v2014
  %v2016 = vmul.f32 %v2013, %v2015
  %v2017 = vadd.f32 %v2013, %v2016
  %vm2018 = vweird.f32 %v1571
  %vm2019 = vweird.f32 %v2013
  %vm2020 = vmor %vm2018, %vm2019
  %v2021 = vsel %vm2020, %v2013, %v2017
  %v2022 = vand.u32 2147483647, %v1571
  %vm2023 = vcmp.eq.f32.partialorder %v2022, 8.507059e+37
  %v2024 = vand.u32 %v1571, 2147483648
  %v2025 = vor.u32 1.1754944e-38, %v2024
  %v2026 = vsel %vm2023, %v2025, %v2021
  %v2027 = vmul.f32 1.0, %v2026
  %v2028 = vrcp.pop %v1572
  %v2029 = vmul.f32 %v1572, %v2028
  %v2030 = vsub.f32 1.0, %v2029
  %v2031 = vmul.f32 %v2028, %v2030
  %v2032 = vadd.f32 %v2028, %v2031
  %vm2033 = vweird.f32 %v1572
  %vm2034 = vweird.f32 %v2028
  %vm2035 = vmor %vm2033, %vm2034
  %v2036 = vsel %vm2035, %v2028, %v2032
  %v2037 = vand.u32 2147483647, %v1572
  %vm2038 = vcmp.eq.f32.partialorder %v2037, 8.507059e+37
  %v2039 = vand.u32 %v1572, 2147483648
  %v2040 = vor.u32 1.1754944e-38, %v2039
  %v2041 = vsel %vm2038, %v2040, %v2036
  %v2042 = vmul.f32 1.0, %v2041
  %v2043 = vrcp.pop %v1573
  %v2044 = vmul.f32 %v1573, %v2043
  %v2045 = vsub.f32 1.0, %v2044
  %v2046 = vmul.f32 %v2043, %v2045
  %v2047 = vadd.f32 %v2043, %v2046
  %vm2048 = vweird.f32 %v1573
  %vm2049 = vweird.f32 %v2043
  %vm2050 = vmor %vm2048, %vm2049
  %v2051 = vsel %vm2050, %v2043, %v2047
  %v2052 = vand.u32 2147483647, %v1573
  %vm2053 = vcmp.eq.f32.partialorder %v2052, 8.507059e+37
  %v2054 = vand.u32 %v1573, 2147483648
  %v2055 = vor.u32 1.1754944e-38, %v2054
  %v2056 = vsel %vm2053, %v2055, %v2051
  %v2057 = vmul.f32 1.0, %v2056
  %v2058 = vrcp.pop %v1574
  %v2059 = vmul.f32 %v1574, %v2058
  %v2060 = vsub.f32 1.0, %v2059
  %v2061 = vmul.f32 %v2058, %v2060
  %v2062 = vadd.f32 %v2058, %v2061
  %vm2063 = vweird.f32 %v1574
  %vm2064 = vweird.f32 %v2058
  %vm2065 = vmor %vm2063, %vm2064
  %v2066 = vsel %vm2065, %v2058, %v2062
  %v2067 = vand.u32 2147483647, %v1574
  %vm2068 = vcmp.eq.f32.partialorder %v2067, 8.507059e+37
  %v2069 = vand.u32 %v1574, 2147483648
  %v2070 = vor.u32 1.1754944e-38, %v2069
  %v2071 = vsel %vm2068, %v2070, %v2066
  %v2072 = vmul.f32 1.0, %v2071
  %v2073 = vrcp.pop %v1575
  %v2074 = vmul.f32 %v1575, %v2073
  %v2075 = vsub.f32 1.0, %v2074
  %v2076 = vmul.f32 %v2073, %v2075
  %v2077 = vadd.f32 %v2073, %v2076
  %vm2078 = vweird.f32 %v1575
  %vm2079 = vweird.f32 %v2073
  %vm2080 = vmor %vm2078, %vm2079
  %v2081 = vsel %vm2080, %v2073, %v2077
  %v2082 = vand.u32 2147483647, %v1575
  %vm2083 = vcmp.eq.f32.partialorder %v2082, 8.507059e+37
  %v2084 = vand.u32 %v1575, 2147483648
  %v2085 = vor.u32 1.1754944e-38, %v2084
  %v2086 = vsel %vm2083, %v2085, %v2081
  %v2087 = vmul.f32 1.0, %v2086
  %v2088 = vrcp.pop %v1576
  %v2089 = vmul.f32 %v1576, %v2088
  %v2090 = vsub.f32 1.0, %v2089
  %v2091 = vmul.f32 %v2088, %v2090
  %v2092 = vadd.f32 %v2088, %v2091
  %vm2093 = vweird.f32 %v1576
  %vm2094 = vweird.f32 %v2088
  %vm2095 = vmor %vm2093, %vm2094
  %v2096 = vsel %vm2095, %v2088, %v2092
  %v2097 = vand.u32 2147483647, %v1576
  %vm2098 = vcmp.eq.f32.partialorder %v2097, 8.507059e+37
  %v2099 = vand.u32 %v1576, 2147483648
  %v2100 = vor.u32 1.1754944e-38, %v2099
  %v2101 = vsel %vm2098, %v2100, %v2096
  %v2102 = vmul.f32 1.0, %v2101
  %v2103 = vrcp.pop %v1577
  %v2104 = vmul.f32 %v1577, %v2103
  %v2105 = vsub.f32 1.0, %v2104
  %v2106 = vmul.f32 %v2103, %v2105
  %v2107 = vadd.f32 %v2103, %v2106
  %vm2108 = vweird.f32 %v1577
  %vm2109 = vweird.f32 %v2103
  %vm2110 = vmor %vm2108, %vm2109
  %v2111 = vsel %vm2110, %v2103, %v2107
  %v2112 = vand.u32 2147483647, %v1577
  %vm2113 = vcmp.eq.f32.partialorder %v2112, 8.507059e+37
  %v2114 = vand.u32 %v1577, 2147483648
  %v2115 = vor.u32 1.1754944e-38, %v2114
  %v2116 = vsel %vm2113, %v2115, %v2111
  %v2117 = vmul.f32 1.0, %v2116
  %v2118 = vrcp.pop %v1578
  %v2119 = vmul.f32 %v1578, %v2118
  %v2120 = vsub.f32 1.0, %v2119
  %v2121 = vmul.f32 %v2118, %v2120
  %v2122 = vadd.f32 %v2118, %v2121
  %vm2123 = vweird.f32 %v1578
  %vm2124 = vweird.f32 %v2118
  %vm2125 = vmor %vm2123, %vm2124
  %v2126 = vsel %vm2125, %v2118, %v2122
  %v2127 = vand.u32 2147483647, %v1578
  %vm2128 = vcmp.eq.f32.partialorder %v2127, 8.507059e+37
  %v2129 = vand.u32 %v1578, 2147483648
  %v2130 = vor.u32 1.1754944e-38, %v2129
  %v2131 = vsel %vm2128, %v2130, %v2126
  %v2132 = vmul.f32 1.0, %v2131
  %v2133 = vrcp.pop %v1579
  %v2134 = vmul.f32 %v1579, %v2133
  %v2135 = vsub.f32 1.0, %v2134
  %v2136 = vmul.f32 %v2133, %v2135
  %v2137 = vadd.f32 %v2133, %v2136
  %vm2138 = vweird.f32 %v1579
  %vm2139 = vweird.f32 %v2133
  %vm2140 = vmor %vm2138, %vm2139
  %v2141 = vsel %vm2140, %v2133, %v2137
  %v2142 = vand.u32 2147483647, %v1579
  %vm2143 = vcmp.eq.f32.partialorder %v2142, 8.507059e+37
  %v2144 = vand.u32 %v1579, 2147483648
  %v2145 = vor.u32 1.1754944e-38, %v2144
  %v2146 = vsel %vm2143, %v2145, %v2141
  %v2147 = vmul.f32 1.0, %v2146
  %v2148 = vrcp.pop %v1580
  %v2149 = vmul.f32 %v1580, %v2148
  %v2150 = vsub.f32 1.0, %v2149
  %v2151 = vmul.f32 %v2148, %v2150
  %v2152 = vadd.f32 %v2148, %v2151
  %vm2153 = vweird.f32 %v1580
  %vm2154 = vweird.f32 %v2148
  %vm2155 = vmor %vm2153, %vm2154
  %v2156 = vsel %vm2155, %v2148, %v2152
  %v2157 = vand.u32 2147483647, %v1580
  %vm2158 = vcmp.eq.f32.partialorder %v2157, 8.507059e+37
  %v2159 = vand.u32 %v1580, 2147483648
  %v2160 = vor.u32 1.1754944e-38, %v2159
  %v2161 = vsel %vm2158, %v2160, %v2156
  %v2162 = vmul.f32 1.0, %v2161
  %v2163 = vrcp.pop %v1581
  %v2164 = vmul.f32 %v1581, %v2163
  %v2165 = vsub.f32 1.0, %v2164
  %v2166 = vmul.f32 %v2163, %v2165
  %v2167 = vadd.f32 %v2163, %v2166
  %vm2168 = vweird.f32 %v1581
  %vm2169 = vweird.f32 %v2163
  %vm2170 = vmor %vm2168, %vm2169
  %v2171 = vsel %vm2170, %v2163, %v2167
  %v2172 = vand.u32 2147483647, %v1581
  %vm2173 = vcmp.eq.f32.partialorder %v2172, 8.507059e+37
  %v2174 = vand.u32 %v1581, 2147483648
  %v2175 = vor.u32 1.1754944e-38, %v2174
  %v2176 = vsel %vm2173, %v2175, %v2171
  %v2177 = vmul.f32 1.0, %v2176
  %v2178 = vrcp.pop %v1582
  %v2179 = vmul.f32 %v1582, %v2178
  %v2180 = vsub.f32 1.0, %v2179
  %v2181 = vmul.f32 %v2178, %v2180
  %v2182 = vadd.f32 %v2178, %v2181
  %vm2183 = vweird.f32 %v1582
  %vm2184 = vweird.f32 %v2178
  %vm2185 = vmor %vm2183, %vm2184
  %v2186 = vsel %vm2185, %v2178, %v2182
  %v2187 = vand.u32 2147483647, %v1582
  %vm2188 = vcmp.eq.f32.partialorder %v2187, 8.507059e+37
  %v2189 = vand.u32 %v1582, 2147483648
  %v2190 = vor.u32 1.1754944e-38, %v2189
  %v2191 = vsel %vm2188, %v2190, %v2186
  %v2192 = vmul.f32 1.0, %v2191
  %v2193 = vrcp.pop %v1583
  %v2194 = vmul.f32 %v1583, %v2193
  %v2195 = vsub.f32 1.0, %v2194
  %v2196 = vmul.f32 %v2193, %v2195
  %v2197 = vadd.f32 %v2193, %v2196
  %vm2198 = vweird.f32 %v1583
  %vm2199 = vweird.f32 %v2193
  %vm2200 = vmor %vm2198, %vm2199
  %v2201 = vsel %vm2200, %v2193, %v2197
  %v2202 = vand.u32 2147483647, %v1583
  %vm2203 = vcmp.eq.f32.partialorder %v2202, 8.507059e+37
  %v2204 = vand.u32 %v1583, 2147483648
  %v2205 = vor.u32 1.1754944e-38, %v2204
  %v2206 = vsel %vm2203, %v2205, %v2201
  %v2207 = vmul.f32 1.0, %v2206
  %v2208 = vrcp.pop %v1584
  %v2209 = vmul.f32 %v1584, %v2208
  %v2210 = vsub.f32 1.0, %v2209
  %v2211 = vmul.f32 %v2208, %v2210
  %v2212 = vadd.f32 %v2208, %v2211
  %vm2213 = vweird.f32 %v1584
  %vm2214 = vweird.f32 %v2208
  %vm2215 = vmor %vm2213, %vm2214
  %v2216 = vsel %vm2215, %v2208, %v2212
  %v2217 = vand.u32 2147483647, %v1584
  %vm2218 = vcmp.eq.f32.partialorder %v2217, 8.507059e+37
  %v2219 = vand.u32 %v1584, 2147483648
  %v2220 = vor.u32 1.1754944e-38, %v2219
  %v2221 = vsel %vm2218, %v2220, %v2216
  %v2222 = vmul.f32 1.0, %v2221
  %v2223 = vrcp.pop %v1585
  %v2224 = vmul.f32 %v1585, %v2223
  %v2225 = vsub.f32 1.0, %v2224
  %v2226 = vmul.f32 %v2223, %v2225
  %v2227 = vadd.f32 %v2223, %v2226
  %vm2228 = vweird.f32 %v1585
  %vm2229 = vweird.f32 %v2223
  %vm2230 = vmor %vm2228, %vm2229
  %v2231 = vsel %vm2230, %v2223, %v2227
  %v2232 = vand.u32 2147483647, %v1585
  %vm2233 = vcmp.eq.f32.partialorder %v2232, 8.507059e+37
  %v2234 = vand.u32 %v1585, 2147483648
  %v2235 = vor.u32 1.1754944e-38, %v2234
  %v2236 = vsel %vm2233, %v2235, %v2231
  %v2237 = vmul.f32 1.0, %v2236
  %v2238 = vrcp.pop %v1586
  %v2239 = vmul.f32 %v1586, %v2238
  %v2240 = vsub.f32 1.0, %v2239
  %v2241 = vmul.f32 %v2238, %v2240
  %v2242 = vadd.f32 %v2238, %v2241
  %vm2243 = vweird.f32 %v1586
  %vm2244 = vweird.f32 %v2238
  %vm2245 = vmor %vm2243, %vm2244
  %v2246 = vsel %vm2245, %v2238, %v2242
  %v2247 = vand.u32 2147483647, %v1586
  %vm2248 = vcmp.eq.f32.partialorder %v2247, 8.507059e+37
  %v2249 = vand.u32 %v1586, 2147483648
  %v2250 = vor.u32 1.1754944e-38, %v2249
  %v2251 = vsel %vm2248, %v2250, %v2246
  %v2252 = vmul.f32 1.0, %v2251
  %v2253 = vrcp.pop %v1587
  %v2254 = vmul.f32 %v1587, %v2253
  %v2255 = vsub.f32 1.0, %v2254
  %v2256 = vmul.f32 %v2253, %v2255
  %v2257 = vadd.f32 %v2253, %v2256
  %vm2258 = vweird.f32 %v1587
  %vm2259 = vweird.f32 %v2253
  %vm2260 = vmor %vm2258, %vm2259
  %v2261 = vsel %vm2260, %v2253, %v2257
  %v2262 = vand.u32 2147483647, %v1587
  %vm2263 = vcmp.eq.f32.partialorder %v2262, 8.507059e+37
  %v2264 = vand.u32 %v1587, 2147483648
  %v2265 = vor.u32 1.1754944e-38, %v2264
  %v2266 = vsel %vm2263, %v2265, %v2261
  %v2267 = vmul.f32 1.0, %v2266
  %v2268 = vrcp.pop %v1588
  %v2269 = vmul.f32 %v1588, %v2268
  %v2270 = vsub.f32 1.0, %v2269
  %v2271 = vmul.f32 %v2268, %v2270
  %v2272 = vadd.f32 %v2268, %v2271
  %vm2273 = vweird.f32 %v1588
  %vm2274 = vweird.f32 %v2268
  %vm2275 = vmor %vm2273, %vm2274
  %v2276 = vsel %vm2275, %v2268, %v2272
  %v2277 = vand.u32 2147483647, %v1588
  %vm2278 = vcmp.eq.f32.partialorder %v2277, 8.507059e+37
  %v2279 = vand.u32 %v1588, 2147483648
  %v2280 = vor.u32 1.1754944e-38, %v2279
  %v2281 = vsel %vm2278, %v2280, %v2276
  %v2282 = vmul.f32 1.0, %v2281
  %v2283 = vrcp.pop %v1589
  %v2284 = vmul.f32 %v1589, %v2283
  %v2285 = vsub.f32 1.0, %v2284
  %v2286 = vmul.f32 %v2283, %v2285
  %v2287 = vadd.f32 %v2283, %v2286
  %vm2288 = vweird.f32 %v1589
  %vm2289 = vweird.f32 %v2283
  %vm2290 = vmor %vm2288, %vm2289
  %v2291 = vsel %vm2290, %v2283, %v2287
  %v2292 = vand.u32 2147483647, %v1589
  %vm2293 = vcmp.eq.f32.partialorder %v2292, 8.507059e+37
  %v2294 = vand.u32 %v1589, 2147483648
  %v2295 = vor.u32 1.1754944e-38, %v2294
  %v2296 = vsel %vm2293, %v2295, %v2291
  %v2297 = vmul.f32 1.0, %v2296
  %v2298 = vrcp.pop %v1590
  %v2299 = vmul.f32 %v1590, %v2298
  %v2300 = vsub.f32 1.0, %v2299
  %v2301 = vmul.f32 %v2298, %v2300
  %v2302 = vadd.f32 %v2298, %v2301
  %vm2303 = vweird.f32 %v1590
  %vm2304 = vweird.f32 %v2298
  %vm2305 = vmor %vm2303, %vm2304
  %v2306 = vsel %vm2305, %v2298, %v2302
  %v2307 = vand.u32 2147483647, %v1590
  %vm2308 = vcmp.eq.f32.partialorder %v2307, 8.507059e+37
  %v2309 = vand.u32 %v1590, 2147483648
  %v2310 = vor.u32 1.1754944e-38, %v2309
  %v2311 = vsel %vm2308, %v2310, %v2306
  %v2312 = vmul.f32 1.0, %v2311
  %v2313 = vrcp.pop %v1591
  %v2314 = vmul.f32 %v1591, %v2313
  %v2315 = vsub.f32 1.0, %v2314
  %v2316 = vmul.f32 %v2313, %v2315
  %v2317 = vadd.f32 %v2313, %v2316
  %vm2318 = vweird.f32 %v1591
  %vm2319 = vweird.f32 %v2313
  %vm2320 = vmor %vm2318, %vm2319
  %v2321 = vsel %vm2320, %v2313, %v2317
  %v2322 = vand.u32 2147483647, %v1591
  %vm2323 = vcmp.eq.f32.partialorder %v2322, 8.507059e+37
  %v2324 = vand.u32 %v1591, 2147483648
  %v2325 = vor.u32 1.1754944e-38, %v2324
  %v2326 = vsel %vm2323, %v2325, %v2321
  %v2327 = vmul.f32 1.0, %v2326
  %v2328 = vrcp.pop %v1592
  %v2329 = vmul.f32 %v1592, %v2328
  %v2330 = vsub.f32 1.0, %v2329
  %v2331 = vmul.f32 %v2328, %v2330
  %v2332 = vadd.f32 %v2328, %v2331
  %vm2333 = vweird.f32 %v1592
  %vm2334 = vweird.f32 %v2328
  %vm2335 = vmor %vm2333, %vm2334
  %v2336 = vsel %vm2335, %v2328, %v2332
  %v2337 = vand.u32 2147483647, %v1592
  %vm2338 = vcmp.eq.f32.partialorder %v2337, 8.507059e+37
  %v2339 = vand.u32 %v1592, 2147483648
  %v2340 = vor.u32 1.1754944e-38, %v2339
  %v2341 = vsel %vm2338, %v2340, %v2336
  %v2342 = vmul.f32 1.0, %v2341
  %v2343 = vrcp.pop %v1593
  %v2344 = vmul.f32 %v1593, %v2343
  %v2345 = vsub.f32 1.0, %v2344
  %v2346 = vmul.f32 %v2343, %v2345
  %v2347 = vadd.f32 %v2343, %v2346
  %vm2348 = vweird.f32 %v1593
  %vm2349 = vweird.f32 %v2343
  %vm2350 = vmor %vm2348, %vm2349
  %v2351 = vsel %vm2350, %v2343, %v2347
  %v2352 = vand.u32 2147483647, %v1593
  %vm2353 = vcmp.eq.f32.partialorder %v2352, 8.507059e+37
  %v2354 = vand.u32 %v1593, 2147483648
  %v2355 = vor.u32 1.1754944e-38, %v2354
  %v2356 = vsel %vm2353, %v2355, %v2351
  %v2357 = vmul.f32 1.0, %v2356
  %v2358 = vrcp.pop %v1594
  %v2359 = vmul.f32 %v1594, %v2358
  %v2360 = vsub.f32 1.0, %v2359
  %v2361 = vmul.f32 %v2358, %v2360
  %v2362 = vadd.f32 %v2358, %v2361
  %vm2363 = vweird.f32 %v1594
  %vm2364 = vweird.f32 %v2358
  %vm2365 = vmor %vm2363, %vm2364
  %v2366 = vsel %vm2365, %v2358, %v2362
  %v2367 = vand.u32 2147483647, %v1594
  %vm2368 = vcmp.eq.f32.partialorder %v2367, 8.507059e+37
  %v2369 = vand.u32 %v1594, 2147483648
  %v2370 = vor.u32 1.1754944e-38, %v2369
  %v2371 = vsel %vm2368, %v2370, %v2366
  %v2372 = vmul.f32 1.0, %v2371
  %v2373 = vrcp.pop %v1595
  %v2374 = vmul.f32 %v1595, %v2373
  %v2375 = vsub.f32 1.0, %v2374
  %v2376 = vmul.f32 %v2373, %v2375
  %v2377 = vadd.f32 %v2373, %v2376
  %vm2378 = vweird.f32 %v1595
  %vm2379 = vweird.f32 %v2373
  %vm2380 = vmor %vm2378, %vm2379
  %v2381 = vsel %vm2380, %v2373, %v2377
  %v2382 = vand.u32 2147483647, %v1595
  %vm2383 = vcmp.eq.f32.partialorder %v2382, 8.507059e+37
  %v2384 = vand.u32 %v1595, 2147483648
  %v2385 = vor.u32 1.1754944e-38, %v2384
  %v2386 = vsel %vm2383, %v2385, %v2381
  %v2387 = vmul.f32 1.0, %v2386
  %v2388 = vrcp.pop %v1596
  %v2389 = vmul.f32 %v1596, %v2388
  %v2390 = vsub.f32 1.0, %v2389
  %v2391 = vmul.f32 %v2388, %v2390
  %v2392 = vadd.f32 %v2388, %v2391
  %vm2393 = vweird.f32 %v1596
  %vm2394 = vweird.f32 %v2388
  %vm2395 = vmor %vm2393, %vm2394
  %v2396 = vsel %vm2395, %v2388, %v2392
  %v2397 = vand.u32 2147483647, %v1596
  %vm2398 = vcmp.eq.f32.partialorder %v2397, 8.507059e+37
  %v2399 = vand.u32 %v1596, 2147483648
  %v2400 = vor.u32 1.1754944e-38, %v2399
  %v2401 = vsel %vm2398, %v2400, %v2396
  %v2402 = vmul.f32 1.0, %v2401
  %v2403 = vrcp.pop %v1597
  %v2404 = vmul.f32 %v1597, %v2403
  %v2405 = vsub.f32 1.0, %v2404
  %v2406 = vmul.f32 %v2403, %v2405
  %v2407 = vadd.f32 %v2403, %v2406
  %vm2408 = vweird.f32 %v1597
  %vm2409 = vweird.f32 %v2403
  %vm2410 = vmor %vm2408, %vm2409
  %v2411 = vsel %vm2410, %v2403, %v2407
  %v2412 = vand.u32 2147483647, %v1597
  %vm2413 = vcmp.eq.f32.partialorder %v2412, 8.507059e+37
  %v2414 = vand.u32 %v1597, 2147483648
  %v2415 = vor.u32 1.1754944e-38, %v2414
  %v2416 = vsel %vm2413, %v2415, %v2411
  %v2417 = vmul.f32 1.0, %v2416
  %v2418 = vrcp.pop %v1598
  %v2419 = vmul.f32 %v1598, %v2418
  %v2420 = vsub.f32 1.0, %v2419
  %v2421 = vmul.f32 %v2418, %v2420
  %v2422 = vadd.f32 %v2418, %v2421
  %vm2423 = vweird.f32 %v1598
  %vm2424 = vweird.f32 %v2418
  %vm2425 = vmor %vm2423, %vm2424
  %v2426 = vsel %vm2425, %v2418, %v2422
  %v2427 = vand.u32 2147483647, %v1598
  %vm2428 = vcmp.eq.f32.partialorder %v2427, 8.507059e+37
  %v2429 = vand.u32 %v1598, 2147483648
  %v2430 = vor.u32 1.1754944e-38, %v2429
  %v2431 = vsel %vm2428, %v2430, %v2426
  %v2432 = vmul.f32 1.0, %v2431
  %v2433 = vrcp.pop %v1599
  %v2434 = vmul.f32 %v1599, %v2433
  %v2435 = vsub.f32 1.0, %v2434
  %v2436 = vmul.f32 %v2433, %v2435
  %v2437 = vadd.f32 %v2433, %v2436
  %vm2438 = vweird.f32 %v1599
  %vm2439 = vweird.f32 %v2433
  %vm2440 = vmor %vm2438, %vm2439
  %v2441 = vsel %vm2440, %v2433, %v2437
  %v2442 = vand.u32 2147483647, %v1599
  %vm2443 = vcmp.eq.f32.partialorder %v2442, 8.507059e+37
  %v2444 = vand.u32 %v1599, 2147483648
  %v2445 = vor.u32 1.1754944e-38, %v2444
  %v2446 = vsel %vm2443, %v2445, %v2441
  %v2447 = vmul.f32 1.0, %v2446
  %v2448 = vrcp.pop %v1600
  %v2449 = vmul.f32 %v1600, %v2448
  %v2450 = vsub.f32 1.0, %v2449
  %v2451 = vmul.f32 %v2448, %v2450
  %v2452 = vadd.f32 %v2448, %v2451
  %vm2453 = vweird.f32 %v1600
  %vm2454 = vweird.f32 %v2448
  %vm2455 = vmor %vm2453, %vm2454
  %v2456 = vsel %vm2455, %v2448, %v2452
  %v2457 = vand.u32 2147483647, %v1600
  %vm2458 = vcmp.eq.f32.partialorder %v2457, 8.507059e+37
  %v2459 = vand.u32 %v1600, 2147483648
  %v2460 = vor.u32 1.1754944e-38, %v2459
  %v2461 = vsel %vm2458, %v2460, %v2456
  %v2462 = vmul.f32 1.0, %v2461
  %v2463 = vrcp.pop %v1601
  %v2464 = vmul.f32 %v1601, %v2463
  %v2465 = vsub.f32 1.0, %v2464
  %v2466 = vmul.f32 %v2463, %v2465
  %v2467 = vadd.f32 %v2463, %v2466
  %vm2468 = vweird.f32 %v1601
  %vm2469 = vweird.f32 %v2463
  %vm2470 = vmor %vm2468, %vm2469
  %v2471 = vsel %vm2470, %v2463, %v2467
  %v2472 = vand.u32 2147483647, %v1601
  %vm2473 = vcmp.eq.f32.partialorder %v2472, 8.507059e+37
  %v2474 = vand.u32 %v1601, 2147483648
  %v2475 = vor.u32 1.1754944e-38, %v2474
  %v2476 = vsel %vm2473, %v2475, %v2471
  %v2477 = vmul.f32 1.0, %v2476
  %v2478 = vrcp.pop %v1602
  %v2479 = vmul.f32 %v1602, %v2478
  %v2480 = vsub.f32 1.0, %v2479
  %v2481 = vmul.f32 %v2478, %v2480
  %v2482 = vadd.f32 %v2478, %v2481
  %vm2483 = vweird.f32 %v1602
  %vm2484 = vweird.f32 %v2478
  %vm2485 = vmor %vm2483, %vm2484
  %v2486 = vsel %vm2485, %v2478, %v2482
  %v2487 = vand.u32 2147483647, %v1602
  %vm2488 = vcmp.eq.f32.partialorder %v2487, 8.507059e+37
  %v2489 = vand.u32 %v1602, 2147483648
  %v2490 = vor.u32 1.1754944e-38, %v2489
  %v2491 = vsel %vm2488, %v2490, %v2486
  %v2492 = vmul.f32 1.0, %v2491
  %v2493 = vrcp.pop %v1603
  %v2494 = vmul.f32 %v1603, %v2493
  %v2495 = vsub.f32 1.0, %v2494
  %v2496 = vmul.f32 %v2493, %v2495
  %v2497 = vadd.f32 %v2493, %v2496
  %vm2498 = vweird.f32 %v1603
  %vm2499 = vweird.f32 %v2493
  %vm2500 = vmor %vm2498, %vm2499
  %v2501 = vsel %vm2500, %v2493, %v2497
  %v2502 = vand.u32 2147483647, %v1603
  %vm2503 = vcmp.eq.f32.partialorder %v2502, 8.507059e+37
  %v2504 = vand.u32 %v1603, 2147483648
  %v2505 = vor.u32 1.1754944e-38, %v2504
  %v2506 = vsel %vm2503, %v2505, %v2501
  %v2507 = vmul.f32 1.0, %v2506
  %v2508 = vrcp.pop %v1604
  %v2509 = vmul.f32 %v1604, %v2508
  %v2510 = vsub.f32 1.0, %v2509
  %v2511 = vmul.f32 %v2508, %v2510
  %v2512 = vadd.f32 %v2508, %v2511
  %vm2513 = vweird.f32 %v1604
  %vm2514 = vweird.f32 %v2508
  %vm2515 = vmor %vm2513, %vm2514
  %v2516 = vsel %vm2515, %v2508, %v2512
  %v2517 = vand.u32 2147483647, %v1604
  %vm2518 = vcmp.eq.f32.partialorder %v2517, 8.507059e+37
  %v2519 = vand.u32 %v1604, 2147483648
  %v2520 = vor.u32 1.1754944e-38, %v2519
  %v2521 = vsel %vm2518, %v2520, %v2516
  %v2522 = vmul.f32 1.0, %v2521
  %v2523 = vrcp.pop %v1605
  %v2524 = vmul.f32 %v1605, %v2523
  %v2525 = vsub.f32 1.0, %v2524
  %v2526 = vmul.f32 %v2523, %v2525
  %v2527 = vadd.f32 %v2523, %v2526
  %vm2528 = vweird.f32 %v1605
  %vm2529 = vweird.f32 %v2523
  %vm2530 = vmor %vm2528, %vm2529
  %v2531 = vsel %vm2530, %v2523, %v2527
  %v2532 = vand.u32 2147483647, %v1605
  %vm2533 = vcmp.eq.f32.partialorder %v2532, 8.507059e+37
  %v2534 = vand.u32 %v1605, 2147483648
  %v2535 = vor.u32 1.1754944e-38, %v2534
  %v2536 = vsel %vm2533, %v2535, %v2531
  %v2537 = vmul.f32 1.0, %v2536
  %v2538 = vrcp.pop %v1606
  %v2539 = vmul.f32 %v1606, %v2538
  %v2540 = vsub.f32 1.0, %v2539
  %v2541 = vmul.f32 %v2538, %v2540
  %v2542 = vadd.f32 %v2538, %v2541
  %vm2543 = vweird.f32 %v1606
  %vm2544 = vweird.f32 %v2538
  %vm2545 = vmor %vm2543, %vm2544
  %v2546 = vsel %vm2545, %v2538, %v2542
  %v2547 = vand.u32 2147483647, %v1606
  %vm2548 = vcmp.eq.f32.partialorder %v2547, 8.507059e+37
  %v2549 = vand.u32 %v1606, 2147483648
  %v2550 = vor.u32 1.1754944e-38, %v2549
  %v2551 = vsel %vm2548, %v2550, %v2546
  %v2552 = vmul.f32 1.0, %v2551
  %v2553 = vrcp.pop %v1607
  %v2554 = vmul.f32 %v1607, %v2553
  %v2555 = vsub.f32 1.0, %v2554
  %v2556 = vmul.f32 %v2553, %v2555
  %v2557 = vadd.f32 %v2553, %v2556
  %vm2558 = vweird.f32 %v1607
  %vm2559 = vweird.f32 %v2553
  %vm2560 = vmor %vm2558, %vm2559
  %v2561 = vsel %vm2560, %v2553, %v2557
  %v2562 = vand.u32 2147483647, %v1607
  %vm2563 = vcmp.eq.f32.partialorder %v2562, 8.507059e+37
  %v2564 = vand.u32 %v1607, 2147483648
  %v2565 = vor.u32 1.1754944e-38, %v2564
  %v2566 = vsel %vm2563, %v2565, %v2561
  %v2567 = vmul.f32 1.0, %v2566
  %v2568 = vld [vmem:[%s7] sm:$0xf]
  %v2569 = vld [vmem:[%s7 + $0x4] sm:$0xf]
  %v2570 = vld [vmem:[%s7 + $0x8] sm:$0xf]
  %v2571 = vld [vmem:[%s7 + $0xc] sm:$0xf]
  %v2572 = vld [vmem:[%s8] sm:$0x1]
  %v2574 = vperm.slane %v2572, 0
  %v2580 = vunpack.c.l.b16 %v2568
  %v2581 = vunpack.c.l.b16 %v2569
  %v2582 = vunpack.c.l.b16 %v2570
  %v2583 = vunpack.c.l.b16 %v2571
  %v2584 = vpack.c.b16 %v2581, %v2580
  %v2585 = vpack.c.b16 %v2583, %v2582
  %2588 = vmatpush.bf16.msra.mxu0 0
  %2589 = vmatpush.bf16.msra.mxu0 0
  %2590 = vmatpush.bf16.msra.mxu0 0
  %2591 = vmatpush.bf16.msra.mxu0 0
  %2592 = vmatpush.bf16.msra.mxu0 0
  %2593 = vmatpush.bf16.msra.mxu0 0
  %2594 = vmatpush.bf16.msra.mxu0 %v2585
  %2595 = vmatpush.bf16.msra.mxu0 %v2584
  %2596 = vmatmul.bf16.gmra.mxu0 %v165
  %v2597 = vpop.f32.mrf.mxu0
  %v2598 = vadd.f32 %v2574, %v2597
  %v2599 = vpop.f32.mrf.mxu0
  %v2600 = vadd.f32 %v2574, %v2599
  %2601 = vmatmul.bf16.gmra.mxu0 %v168
  %v2602 = vpop.f32.mrf.mxu0
  %v2603 = vadd.f32 %v2574, %v2602
  %v2604 = vpop.f32.mrf.mxu0
  %v2605 = vadd.f32 %v2574, %v2604
  %2606 = vmatmul.bf16.gmra.mxu0 %v171
  %v2607 = vpop.f32.mrf.mxu0
  %v2608 = vadd.f32 %v2574, %v2607
  %v2609 = vpop.f32.mrf.mxu0
  %v2610 = vadd.f32 %v2574, %v2609
  %2611 = vmatmul.bf16.gmra.mxu0 %v174
  %v2612 = vpop.f32.mrf.mxu0
  %v2613 = vadd.f32 %v2574, %v2612
  %v2614 = vpop.f32.mrf.mxu0
  %v2615 = vadd.f32 %v2574, %v2614
  %2616 = vmatmul.bf16.gmra.mxu0 %v177
  %v2617 = vpop.f32.mrf.mxu0
  %v2618 = vadd.f32 %v2574, %v2617
  %v2619 = vpop.f32.mrf.mxu0
  %v2620 = vadd.f32 %v2574, %v2619
  %2621 = vmatmul.bf16.gmra.mxu0 %v180
  %v2622 = vpop.f32.mrf.mxu0
  %v2623 = vadd.f32 %v2574, %v2622
  %v2624 = vpop.f32.mrf.mxu0
  %v2625 = vadd.f32 %v2574, %v2624
  %2626 = vmatmul.bf16.gmra.mxu0 %v183
  %v2627 = vpop.f32.mrf.mxu0
  %v2628 = vadd.f32 %v2574, %v2627
  %v2629 = vpop.f32.mrf.mxu0
  %v2630 = vadd.f32 %v2574, %v2629
  %2631 = vmatmul.bf16.gmra.mxu0 %v186
  %v2632 = vpop.f32.mrf.mxu0
  %v2633 = vadd.f32 %v2574, %v2632
  %v2634 = vpop.f32.mrf.mxu0
  %v2635 = vadd.f32 %v2574, %v2634
  %2636 = vmatmul.bf16.gmra.mxu0 %v189
  %v2637 = vpop.f32.mrf.mxu0
  %v2638 = vadd.f32 %v2574, %v2637
  %v2639 = vpop.f32.mrf.mxu0
  %v2640 = vadd.f32 %v2574, %v2639
  %2641 = vmatmul.bf16.gmra.mxu0 %v192
  %v2642 = vpop.f32.mrf.mxu0
  %v2643 = vadd.f32 %v2574, %v2642
  %v2644 = vpop.f32.mrf.mxu0
  %v2645 = vadd.f32 %v2574, %v2644
  %2646 = vmatmul.bf16.gmra.mxu0 %v195
  %v2647 = vpop.f32.mrf.mxu0
  %v2648 = vadd.f32 %v2574, %v2647
  %v2649 = vpop.f32.mrf.mxu0
  %v2650 = vadd.f32 %v2574, %v2649
  %2651 = vmatmul.bf16.gmra.mxu0 %v198
  %v2652 = vpop.f32.mrf.mxu0
  %v2653 = vadd.f32 %v2574, %v2652
  %v2654 = vpop.f32.mrf.mxu0
  %v2655 = vadd.f32 %v2574, %v2654
  %2656 = vmatmul.bf16.gmra.mxu0 %v201
  %v2657 = vpop.f32.mrf.mxu0
  %v2658 = vadd.f32 %v2574, %v2657
  %v2659 = vpop.f32.mrf.mxu0
  %v2660 = vadd.f32 %v2574, %v2659
  %2661 = vmatmul.bf16.gmra.mxu0 %v204
  %v2662 = vpop.f32.mrf.mxu0
  %v2663 = vadd.f32 %v2574, %v2662
  %v2664 = vpop.f32.mrf.mxu0
  %v2665 = vadd.f32 %v2574, %v2664
  %2666 = vmatmul.bf16.gmra.mxu0 %v207
  %v2667 = vpop.f32.mrf.mxu0
  %v2668 = vadd.f32 %v2574, %v2667
  %v2669 = vpop.f32.mrf.mxu0
  %v2670 = vadd.f32 %v2574, %v2669
  %2671 = vmatmul.bf16.gmra.mxu0 %v210
  %v2672 = vpop.f32.mrf.mxu0
  %v2673 = vadd.f32 %v2574, %v2672
  %v2674 = vpop.f32.mrf.mxu0
  %v2675 = vadd.f32 %v2574, %v2674
  %2676 = vmatmul.bf16.gmra.mxu0 %v213
  %v2677 = vpop.f32.mrf.mxu0
  %v2678 = vadd.f32 %v2574, %v2677
  %v2679 = vpop.f32.mrf.mxu0
  %v2680 = vadd.f32 %v2574, %v2679
  %2681 = vmatmul.bf16.gmra.mxu0 %v216
  %v2682 = vpop.f32.mrf.mxu0
  %v2683 = vadd.f32 %v2574, %v2682
  %v2684 = vpop.f32.mrf.mxu0
  %v2685 = vadd.f32 %v2574, %v2684
  %2686 = vmatmul.bf16.gmra.mxu0 %v219
  %v2687 = vpop.f32.mrf.mxu0
  %v2688 = vadd.f32 %v2574, %v2687
  %v2689 = vpop.f32.mrf.mxu0
  %v2690 = vadd.f32 %v2574, %v2689
  %2691 = vmatmul.bf16.gmra.mxu0 %v222
  %v2692 = vpop.f32.mrf.mxu0
  %v2693 = vadd.f32 %v2574, %v2692
  %v2694 = vpop.f32.mrf.mxu0
  %v2695 = vadd.f32 %v2574, %v2694
  %2696 = vmatmul.bf16.gmra.mxu0 %v225
  %v2697 = vpop.f32.mrf.mxu0
  %v2698 = vadd.f32 %v2574, %v2697
  %v2699 = vpop.f32.mrf.mxu0
  %v2700 = vadd.f32 %v2574, %v2699
  %2701 = vmatmul.bf16.gmra.mxu0 %v228
  %v2702 = vpop.f32.mrf.mxu0
  %v2703 = vadd.f32 %v2574, %v2702
  %v2704 = vpop.f32.mrf.mxu0
  %v2705 = vadd.f32 %v2574, %v2704
  %2706 = vmatmul.bf16.gmra.mxu0 %v231
  %v2707 = vpop.f32.mrf.mxu0
  %v2708 = vadd.f32 %v2574, %v2707
  %v2709 = vpop.f32.mrf.mxu0
  %v2710 = vadd.f32 %v2574, %v2709
  %2711 = vmatmul.bf16.gmra.mxu0 %v234
  %v2712 = vpop.f32.mrf.mxu0
  %v2713 = vadd.f32 %v2574, %v2712
  %v2714 = vpop.f32.mrf.mxu0
  %v2715 = vadd.f32 %v2574, %v2714
  %2716 = vmatmul.bf16.gmra.mxu0 %v237
  %v2717 = vpop.f32.mrf.mxu0
  %v2718 = vadd.f32 %v2574, %v2717
  %v2719 = vpop.f32.mrf.mxu0
  %v2720 = vadd.f32 %v2574, %v2719
  %2721 = vmatmul.bf16.gmra.mxu0 %v240
  %v2722 = vpop.f32.mrf.mxu0
  %v2723 = vadd.f32 %v2574, %v2722
  %v2724 = vpop.f32.mrf.mxu0
  %v2725 = vadd.f32 %v2574, %v2724
  %2726 = vmatmul.bf16.gmra.mxu0 %v243
  %v2727 = vpop.f32.mrf.mxu0
  %v2728 = vadd.f32 %v2574, %v2727
  %v2729 = vpop.f32.mrf.mxu0
  %v2730 = vadd.f32 %v2574, %v2729
  %2731 = vmatmul.bf16.gmra.mxu0 %v246
  %v2732 = vpop.f32.mrf.mxu0
  %v2733 = vadd.f32 %v2574, %v2732
  %v2734 = vpop.f32.mrf.mxu0
  %v2735 = vadd.f32 %v2574, %v2734
  %2736 = vmatmul.bf16.gmra.mxu0 %v249
  %v2737 = vpop.f32.mrf.mxu0
  %v2738 = vadd.f32 %v2574, %v2737
  %v2739 = vpop.f32.mrf.mxu0
  %v2740 = vadd.f32 %v2574, %v2739
  %2741 = vmatmul.bf16.gmra.mxu0 %v252
  %v2742 = vpop.f32.mrf.mxu0
  %v2743 = vadd.f32 %v2574, %v2742
  %v2744 = vpop.f32.mrf.mxu0
  %v2745 = vadd.f32 %v2574, %v2744
  %2746 = vmatmul.bf16.gmra.mxu0 %v255
  %v2747 = vpop.f32.mrf.mxu0
  %v2748 = vadd.f32 %v2574, %v2747
  %v2749 = vpop.f32.mrf.mxu0
  %v2750 = vadd.f32 %v2574, %v2749
  %2751 = vmatmul.bf16.gmra.mxu0 %v258
  %v2752 = vpop.f32.mrf.mxu0
  %v2753 = vadd.f32 %v2574, %v2752
  %v2754 = vpop.f32.mrf.mxu0
  %v2755 = vadd.f32 %v2574, %v2754
  %2756 = vdwg.mxu0
  %v2757 = vmax.f32 %v2598, 0.0
  %v2758 = vmax.f32 %v2600, 0.0
  %v2759 = vmax.f32 %v2603, 0.0
  %v2760 = vmax.f32 %v2605, 0.0
  %v2761 = vmax.f32 %v2608, 0.0
  %v2762 = vmax.f32 %v2610, 0.0
  %v2763 = vmax.f32 %v2613, 0.0
  %v2764 = vmax.f32 %v2615, 0.0
  %v2765 = vmax.f32 %v2618, 0.0
  %v2766 = vmax.f32 %v2620, 0.0
  %v2767 = vmax.f32 %v2623, 0.0
  %v2768 = vmax.f32 %v2625, 0.0
  %v2769 = vmax.f32 %v2628, 0.0
  %v2770 = vmax.f32 %v2630, 0.0
  %v2771 = vmax.f32 %v2633, 0.0
  %v2772 = vmax.f32 %v2635, 0.0
  %v2773 = vmax.f32 %v2638, 0.0
  %v2774 = vmax.f32 %v2640, 0.0
  %v2775 = vmax.f32 %v2643, 0.0
  %v2776 = vmax.f32 %v2645, 0.0
  %v2777 = vmax.f32 %v2648, 0.0
  %v2778 = vmax.f32 %v2650, 0.0
  %v2779 = vmax.f32 %v2653, 0.0
  %v2780 = vmax.f32 %v2655, 0.0
  %v2781 = vmax.f32 %v2658, 0.0
  %v2782 = vmax.f32 %v2660, 0.0
  %v2783 = vmax.f32 %v2663, 0.0
  %v2784 = vmax.f32 %v2665, 0.0
  %v2785 = vmax.f32 %v2668, 0.0
  %v2786 = vmax.f32 %v2670, 0.0
  %v2787 = vmax.f32 %v2673, 0.0
  %v2788 = vmax.f32 %v2675, 0.0
  %v2789 = vmax.f32 %v2678, 0.0
  %v2790 = vmax.f32 %v2680, 0.0
  %v2791 = vmax.f32 %v2683, 0.0
  %v2792 = vmax.f32 %v2685, 0.0
  %v2793 = vmax.f32 %v2688, 0.0
  %v2794 = vmax.f32 %v2690, 0.0
  %v2795 = vmax.f32 %v2693, 0.0
  %v2796 = vmax.f32 %v2695, 0.0
  %v2797 = vmax.f32 %v2698, 0.0
  %v2798 = vmax.f32 %v2700, 0.0
  %v2799 = vmax.f32 %v2703, 0.0
  %v2800 = vmax.f32 %v2705, 0.0
  %v2801 = vmax.f32 %v2708, 0.0
  %v2802 = vmax.f32 %v2710, 0.0
  %v2803 = vmax.f32 %v2713, 0.0
  %v2804 = vmax.f32 %v2715, 0.0
  %v2805 = vmax.f32 %v2718, 0.0
  %v2806 = vmax.f32 %v2720, 0.0
  %v2807 = vmax.f32 %v2723, 0.0
  %v2808 = vmax.f32 %v2725, 0.0
  %v2809 = vmax.f32 %v2728, 0.0
  %v2810 = vmax.f32 %v2730, 0.0
  %v2811 = vmax.f32 %v2733, 0.0
  %v2812 = vmax.f32 %v2735, 0.0
  %v2813 = vmax.f32 %v2738, 0.0
  %v2814 = vmax.f32 %v2740, 0.0
  %v2815 = vmax.f32 %v2743, 0.0
  %v2816 = vmax.f32 %v2745, 0.0
  %v2817 = vmax.f32 %v2748, 0.0
  %v2818 = vmax.f32 %v2750, 0.0
  %v2819 = vmax.f32 %v2753, 0.0
  %v2820 = vmax.f32 %v2755, 0.0
  %v2821 = vpack.c.bf16 %v2758, %v2757
  %v2822 = vpack.c.bf16 %v2760, %v2759
  %v2823 = vpack.c.bf16 %v2762, %v2761
  %v2824 = vpack.c.bf16 %v2764, %v2763
  %v2825 = vpack.c.bf16 %v2766, %v2765
  %v2826 = vpack.c.bf16 %v2768, %v2767
  %v2827 = vpack.c.bf16 %v2770, %v2769
  %v2828 = vpack.c.bf16 %v2772, %v2771
  %v2829 = vpack.c.bf16 %v2774, %v2773
  %v2830 = vpack.c.bf16 %v2776, %v2775
  %v2831 = vpack.c.bf16 %v2778, %v2777
  %v2832 = vpack.c.bf16 %v2780, %v2779
  %v2833 = vpack.c.bf16 %v2782, %v2781
  %v2834 = vpack.c.bf16 %v2784, %v2783
  %v2835 = vpack.c.bf16 %v2786, %v2785
  %v2836 = vpack.c.bf16 %v2788, %v2787
  %v2837 = vpack.c.bf16 %v2790, %v2789
  %v2838 = vpack.c.bf16 %v2792, %v2791
  %v2839 = vpack.c.bf16 %v2794, %v2793
  %v2840 = vpack.c.bf16 %v2796, %v2795
  %v2841 = vpack.c.bf16 %v2798, %v2797
  %v2842 = vpack.c.bf16 %v2800, %v2799
  %v2843 = vpack.c.bf16 %v2802, %v2801
  %v2844 = vpack.c.bf16 %v2804, %v2803
  %v2845 = vpack.c.bf16 %v2806, %v2805
  %v2846 = vpack.c.bf16 %v2808, %v2807
  %v2847 = vpack.c.bf16 %v2810, %v2809
  %v2848 = vpack.c.bf16 %v2812, %v2811
  %v2849 = vpack.c.bf16 %v2814, %v2813
  %v2850 = vpack.c.bf16 %v2816, %v2815
  %v2851 = vpack.c.bf16 %v2818, %v2817
  %v2852 = vpack.c.bf16 %v2820, %v2819
  %v2853 = vld [vmem:[%s9] sm:$0xf]
  %v2854 = vld [vmem:[%s9 + $0x4] sm:$0xf]
  %v2855 = vld [vmem:[%s9 + $0x8] sm:$0xf]
  %v2856 = vld [vmem:[%s9 + $0xc] sm:$0xf]
  %v2857 = vld [vmem:[%s9 + $0x10] sm:$0xf]
  %v2858 = vld [vmem:[%s9 + $0x14] sm:$0xf]
  %v2859 = vld [vmem:[%s9 + $0x18] sm:$0xf]
  %v2860 = vld [vmem:[%s9 + $0x1c] sm:$0xf]
  %v2861 = vld [vmem:[%s10] sm:$0x1]
  %v2863 = vperm.slane %v2861, 0
  %v2873 = vunpack.c.l.b16 %v2853
  %v2874 = vunpack.c.l.b16 %v2854
  %v2875 = vunpack.c.l.b16 %v2855
  %v2876 = vunpack.c.l.b16 %v2856
  %v2877 = vunpack.c.l.b16 %v2857
  %v2878 = vunpack.c.l.b16 %v2858
  %v2879 = vunpack.c.l.b16 %v2859
  %v2880 = vunpack.c.l.b16 %v2860
  %v2881 = vpack.c.b16 %v2874, %v2873
  %v2882 = vpack.c.b16 %v2876, %v2875
  %v2883 = vpack.c.b16 %v2878, %v2877
  %v2884 = vpack.c.b16 %v2880, %v2879
  %v2890 = vsel %vm561, %v2821, 0
  %v2893 = vsel %vm561, %v2822, 0
  %v2896 = vsel %vm561, %v2823, 0
  %v2899 = vsel %vm561, %v2824, 0
  %v2902 = vsel %vm561, %v2825, 0
  %v2905 = vsel %vm561, %v2826, 0
  %v2908 = vsel %vm561, %v2827, 0
  %v2911 = vsel %vm561, %v2828, 0
  %v2914 = vsel %vm561, %v2829, 0
  %v2917 = vsel %vm561, %v2830, 0
  %v2920 = vsel %vm561, %v2831, 0
  %v2923 = vsel %vm561, %v2832, 0
  %v2926 = vsel %vm561, %v2833, 0
  %v2929 = vsel %vm561, %v2834, 0
  %v2932 = vsel %vm561, %v2835, 0
  %v2935 = vsel %vm561, %v2836, 0
  %v2938 = vsel %vm561, %v2837, 0
  %v2941 = vsel %vm561, %v2838, 0
  %v2944 = vsel %vm561, %v2839, 0
  %v2947 = vsel %vm561, %v2840, 0
  %v2950 = vsel %vm561, %v2841, 0
  %v2953 = vsel %vm561, %v2842, 0
  %v2956 = vsel %vm561, %v2843, 0
  %v2959 = vsel %vm561, %v2844, 0
  %v2962 = vsel %vm561, %v2845, 0
  %v2965 = vsel %vm561, %v2846, 0
  %v2968 = vsel %vm561, %v2847, 0
  %v2971 = vsel %vm561, %v2848, 0
  %v2974 = vsel %vm561, %v2849, 0
  %v2977 = vsel %vm561, %v2850, 0
  %v2980 = vsel %vm561, %v2851, 0
  %v2983 = vsel %vm561, %v2852, 0
  %2985 = vmatpush.bf16.msra.mxu0 0
  %2986 = vmatpush.bf16.msra.mxu0 0
  %2987 = vmatpush.bf16.msra.mxu0 0
  %2988 = vmatpush.bf16.msra.mxu0 0
  %2989 = vmatpush.bf16.msra.mxu0 %v2884
  %2990 = vmatpush.bf16.msra.mxu0 %v2883
  %2991 = vmatpush.bf16.msra.mxu0 %v2882
  %2992 = vmatpush.bf16.msra.mxu0 %v2881
  %2993 = vmatmul.bf16.gmra.mxu0 %v2890
  %v2994 = vpop.f32.mrf.mxu0
  %v2995 = vadd.f32 %v2863, %v2994
  %v2996 = vpop.f32.mrf.mxu0
  %v2997 = vadd.f32 %v2863, %v2996
  %2998 = vmatmul.bf16.gmra.mxu0 %v2893
  %v2999 = vpop.f32.mrf.mxu0
  %v3000 = vadd.f32 %v2863, %v2999
  %v3001 = vpop.f32.mrf.mxu0
  %v3002 = vadd.f32 %v2863, %v3001
  %3003 = vmatmul.bf16.gmra.mxu0 %v2896
  %v3004 = vpop.f32.mrf.mxu0
  %v3005 = vadd.f32 %v2863, %v3004
  %v3006 = vpop.f32.mrf.mxu0
  %v3007 = vadd.f32 %v2863, %v3006
  %3008 = vmatmul.bf16.gmra.mxu0 %v2899
  %v3009 = vpop.f32.mrf.mxu0
  %v3010 = vadd.f32 %v2863, %v3009
  %v3011 = vpop.f32.mrf.mxu0
  %v3012 = vadd.f32 %v2863, %v3011
  %3013 = vmatmul.bf16.gmra.mxu0 %v2902
  %v3014 = vpop.f32.mrf.mxu0
  %v3015 = vadd.f32 %v2863, %v3014
  %v3016 = vpop.f32.mrf.mxu0
  %v3017 = vadd.f32 %v2863, %v3016
  %3018 = vmatmul.bf16.gmra.mxu0 %v2905
  %v3019 = vpop.f32.mrf.mxu0
  %v3020 = vadd.f32 %v2863, %v3019
  %v3021 = vpop.f32.mrf.mxu0
  %v3022 = vadd.f32 %v2863, %v3021
  %3023 = vmatmul.bf16.gmra.mxu0 %v2908
  %v3024 = vpop.f32.mrf.mxu0
  %v3025 = vadd.f32 %v2863, %v3024
  %v3026 = vpop.f32.mrf.mxu0
  %v3027 = vadd.f32 %v2863, %v3026
  %3028 = vmatmul.bf16.gmra.mxu0 %v2911
  %v3029 = vpop.f32.mrf.mxu0
  %v3030 = vadd.f32 %v2863, %v3029
  %v3031 = vpop.f32.mrf.mxu0
  %v3032 = vadd.f32 %v2863, %v3031
  %3033 = vmatmul.bf16.gmra.mxu0 %v2914
  %v3034 = vpop.f32.mrf.mxu0
  %v3035 = vadd.f32 %v2863, %v3034
  %v3036 = vpop.f32.mrf.mxu0
  %v3037 = vadd.f32 %v2863, %v3036
  %3038 = vmatmul.bf16.gmra.mxu0 %v2917
  %v3039 = vpop.f32.mrf.mxu0
  %v3040 = vadd.f32 %v2863, %v3039
  %v3041 = vpop.f32.mrf.mxu0
  %v3042 = vadd.f32 %v2863, %v3041
  %3043 = vmatmul.bf16.gmra.mxu0 %v2920
  %v3044 = vpop.f32.mrf.mxu0
  %v3045 = vadd.f32 %v2863, %v3044
  %v3046 = vpop.f32.mrf.mxu0
  %v3047 = vadd.f32 %v2863, %v3046
  %3048 = vmatmul.bf16.gmra.mxu0 %v2923
  %v3049 = vpop.f32.mrf.mxu0
  %v3050 = vadd.f32 %v2863, %v3049
  %v3051 = vpop.f32.mrf.mxu0
  %v3052 = vadd.f32 %v2863, %v3051
  %3053 = vmatmul.bf16.gmra.mxu0 %v2926
  %v3054 = vpop.f32.mrf.mxu0
  %v3055 = vadd.f32 %v2863, %v3054
  %v3056 = vpop.f32.mrf.mxu0
  %v3057 = vadd.f32 %v2863, %v3056
  %3058 = vmatmul.bf16.gmra.mxu0 %v2929
  %v3059 = vpop.f32.mrf.mxu0
  %v3060 = vadd.f32 %v2863, %v3059
  %v3061 = vpop.f32.mrf.mxu0
  %v3062 = vadd.f32 %v2863, %v3061
  %3063 = vmatmul.bf16.gmra.mxu0 %v2932
  %v3064 = vpop.f32.mrf.mxu0
  %v3065 = vadd.f32 %v2863, %v3064
  %v3066 = vpop.f32.mrf.mxu0
  %v3067 = vadd.f32 %v2863, %v3066
  %3068 = vmatmul.bf16.gmra.mxu0 %v2935
  %v3069 = vpop.f32.mrf.mxu0
  %v3070 = vadd.f32 %v2863, %v3069
  %v3071 = vpop.f32.mrf.mxu0
  %v3072 = vadd.f32 %v2863, %v3071
  %3073 = vmatmul.bf16.gmra.mxu0 %v2938
  %v3074 = vpop.f32.mrf.mxu0
  %v3075 = vadd.f32 %v2863, %v3074
  %v3076 = vpop.f32.mrf.mxu0
  %v3077 = vadd.f32 %v2863, %v3076
  %3078 = vmatmul.bf16.gmra.mxu0 %v2941
  %v3079 = vpop.f32.mrf.mxu0
  %v3080 = vadd.f32 %v2863, %v3079
  %v3081 = vpop.f32.mrf.mxu0
  %v3082 = vadd.f32 %v2863, %v3081
  %3083 = vmatmul.bf16.gmra.mxu0 %v2944
  %v3084 = vpop.f32.mrf.mxu0
  %v3085 = vadd.f32 %v2863, %v3084
  %v3086 = vpop.f32.mrf.mxu0
  %v3087 = vadd.f32 %v2863, %v3086
  %3088 = vmatmul.bf16.gmra.mxu0 %v2947
  %v3089 = vpop.f32.mrf.mxu0
  %v3090 = vadd.f32 %v2863, %v3089
  %v3091 = vpop.f32.mrf.mxu0
  %v3092 = vadd.f32 %v2863, %v3091
  %3093 = vmatmul.bf16.gmra.mxu0 %v2950
  %v3094 = vpop.f32.mrf.mxu0
  %v3095 = vadd.f32 %v2863, %v3094
  %v3096 = vpop.f32.mrf.mxu0
  %v3097 = vadd.f32 %v2863, %v3096
  %3098 = vmatmul.bf16.gmra.mxu0 %v2953
  %v3099 = vpop.f32.mrf.mxu0
  %v3100 = vadd.f32 %v2863, %v3099
  %v3101 = vpop.f32.mrf.mxu0
  %v3102 = vadd.f32 %v2863, %v3101
  %3103 = vmatmul.bf16.gmra.mxu0 %v2956
  %v3104 = vpop.f32.mrf.mxu0
  %v3105 = vadd.f32 %v2863, %v3104
  %v3106 = vpop.f32.mrf.mxu0
  %v3107 = vadd.f32 %v2863, %v3106
  %3108 = vmatmul.bf16.gmra.mxu0 %v2959
  %v3109 = vpop.f32.mrf.mxu0
  %v3110 = vadd.f32 %v2863, %v3109
  %v3111 = vpop.f32.mrf.mxu0
  %v3112 = vadd.f32 %v2863, %v3111
  %3113 = vmatmul.bf16.gmra.mxu0 %v2962
  %v3114 = vpop.f32.mrf.mxu0
  %v3115 = vadd.f32 %v2863, %v3114
  %v3116 = vpop.f32.mrf.mxu0
  %v3117 = vadd.f32 %v2863, %v3116
  %3118 = vmatmul.bf16.gmra.mxu0 %v2965
  %v3119 = vpop.f32.mrf.mxu0
  %v3120 = vadd.f32 %v2863, %v3119
  %v3121 = vpop.f32.mrf.mxu0
  %v3122 = vadd.f32 %v2863, %v3121
  %3123 = vmatmul.bf16.gmra.mxu0 %v2968
  %v3124 = vpop.f32.mrf.mxu0
  %v3125 = vadd.f32 %v2863, %v3124
  %v3126 = vpop.f32.mrf.mxu0
  %v3127 = vadd.f32 %v2863, %v3126
  %3128 = vmatmul.bf16.gmra.mxu0 %v2971
  %v3129 = vpop.f32.mrf.mxu0
  %v3130 = vadd.f32 %v2863, %v3129
  %v3131 = vpop.f32.mrf.mxu0
  %v3132 = vadd.f32 %v2863, %v3131
  %3133 = vmatmul.bf16.gmra.mxu0 %v2974
  %v3134 = vpop.f32.mrf.mxu0
  %v3135 = vadd.f32 %v2863, %v3134
  %v3136 = vpop.f32.mrf.mxu0
  %v3137 = vadd.f32 %v2863, %v3136
  %3138 = vmatmul.bf16.gmra.mxu0 %v2977
  %v3139 = vpop.f32.mrf.mxu0
  %v3140 = vadd.f32 %v2863, %v3139
  %v3141 = vpop.f32.mrf.mxu0
  %v3142 = vadd.f32 %v2863, %v3141
  %3143 = vmatmul.bf16.gmra.mxu0 %v2980
  %v3144 = vpop.f32.mrf.mxu0
  %v3145 = vadd.f32 %v2863, %v3144
  %v3146 = vpop.f32.mrf.mxu0
  %v3147 = vadd.f32 %v2863, %v3146
  %3148 = vmatmul.bf16.gmra.mxu0 %v2983
  %v3149 = vpop.f32.mrf.mxu0
  %v3150 = vadd.f32 %v2863, %v3149
  %v3151 = vpop.f32.mrf.mxu0
  %v3152 = vadd.f32 %v2863, %v3151
  %3153 = vdwg.mxu0
  %v3154 = vmax.f32 %v2995, 0.0
  %v3155 = vmax.f32 %v2997, 0.0
  %v3156 = vmax.f32 %v3000, 0.0
  %v3157 = vmax.f32 %v3002, 0.0
  %v3158 = vmax.f32 %v3005, 0.0
  %v3159 = vmax.f32 %v3007, 0.0
  %v3160 = vmax.f32 %v3010, 0.0
  %v3161 = vmax.f32 %v3012, 0.0
  %v3162 = vmax.f32 %v3015, 0.0
  %v3163 = vmax.f32 %v3017, 0.0
  %v3164 = vmax.f32 %v3020, 0.0
  %v3165 = vmax.f32 %v3022, 0.0
  %v3166 = vmax.f32 %v3025, 0.0
  %v3167 = vmax.f32 %v3027, 0.0
  %v3168 = vmax.f32 %v3030, 0.0
  %v3169 = vmax.f32 %v3032, 0.0
  %v3170 = vmax.f32 %v3035, 0.0
  %v3171 = vmax.f32 %v3037, 0.0
  %v3172 = vmax.f32 %v3040, 0.0
  %v3173 = vmax.f32 %v3042, 0.0
  %v3174 = vmax.f32 %v3045, 0.0
  %v3175 = vmax.f32 %v3047, 0.0
  %v3176 = vmax.f32 %v3050, 0.0
  %v3177 = vmax.f32 %v3052, 0.0
  %v3178 = vmax.f32 %v3055, 0.0
  %v3179 = vmax.f32 %v3057, 0.0
  %v3180 = vmax.f32 %v3060, 0.0
  %v3181 = vmax.f32 %v3062, 0.0
  %v3182 = vmax.f32 %v3065, 0.0
  %v3183 = vmax.f32 %v3067, 0.0
  %v3184 = vmax.f32 %v3070, 0.0
  %v3185 = vmax.f32 %v3072, 0.0
  %v3186 = vmax.f32 %v3075, 0.0
  %v3187 = vmax.f32 %v3077, 0.0
  %v3188 = vmax.f32 %v3080, 0.0
  %v3189 = vmax.f32 %v3082, 0.0
  %v3190 = vmax.f32 %v3085, 0.0
  %v3191 = vmax.f32 %v3087, 0.0
  %v3192 = vmax.f32 %v3090, 0.0
  %v3193 = vmax.f32 %v3092, 0.0
  %v3194 = vmax.f32 %v3095, 0.0
  %v3195 = vmax.f32 %v3097, 0.0
  %v3196 = vmax.f32 %v3100, 0.0
  %v3197 = vmax.f32 %v3102, 0.0
  %v3198 = vmax.f32 %v3105, 0.0
  %v3199 = vmax.f32 %v3107, 0.0
  %v3200 = vmax.f32 %v3110, 0.0
  %v3201 = vmax.f32 %v3112, 0.0
  %v3202 = vmax.f32 %v3115, 0.0
  %v3203 = vmax.f32 %v3117, 0.0
  %v3204 = vmax.f32 %v3120, 0.0
  %v3205 = vmax.f32 %v3122, 0.0
  %v3206 = vmax.f32 %v3125, 0.0
  %v3207 = vmax.f32 %v3127, 0.0
  %v3208 = vmax.f32 %v3130, 0.0
  %v3209 = vmax.f32 %v3132, 0.0
  %v3210 = vmax.f32 %v3135, 0.0
  %v3211 = vmax.f32 %v3137, 0.0
  %v3212 = vmax.f32 %v3140, 0.0
  %v3213 = vmax.f32 %v3142, 0.0
  %v3214 = vmax.f32 %v3145, 0.0
  %v3215 = vmax.f32 %v3147, 0.0
  %v3216 = vmax.f32 %v3150, 0.0
  %v3217 = vmax.f32 %v3152, 0.0
  %v3218 = vpack.c.bf16 %v3155, %v3154
  %v3219 = vpack.c.bf16 %v3157, %v3156
  %v3220 = vpack.c.bf16 %v3159, %v3158
  %v3221 = vpack.c.bf16 %v3161, %v3160
  %v3222 = vpack.c.bf16 %v3163, %v3162
  %v3223 = vpack.c.bf16 %v3165, %v3164
  %v3224 = vpack.c.bf16 %v3167, %v3166
  %v3225 = vpack.c.bf16 %v3169, %v3168
  %v3226 = vpack.c.bf16 %v3171, %v3170
  %v3227 = vpack.c.bf16 %v3173, %v3172
  %v3228 = vpack.c.bf16 %v3175, %v3174
  %v3229 = vpack.c.bf16 %v3177, %v3176
  %v3230 = vpack.c.bf16 %v3179, %v3178
  %v3231 = vpack.c.bf16 %v3181, %v3180
  %v3232 = vpack.c.bf16 %v3183, %v3182
  %v3233 = vpack.c.bf16 %v3185, %v3184
  %v3234 = vpack.c.bf16 %v3187, %v3186
  %v3235 = vpack.c.bf16 %v3189, %v3188
  %v3236 = vpack.c.bf16 %v3191, %v3190
  %v3237 = vpack.c.bf16 %v3193, %v3192
  %v3238 = vpack.c.bf16 %v3195, %v3194
  %v3239 = vpack.c.bf16 %v3197, %v3196
  %v3240 = vpack.c.bf16 %v3199, %v3198
  %v3241 = vpack.c.bf16 %v3201, %v3200
  %v3242 = vpack.c.bf16 %v3203, %v3202
  %v3243 = vpack.c.bf16 %v3205, %v3204
  %v3244 = vpack.c.bf16 %v3207, %v3206
  %v3245 = vpack.c.bf16 %v3209, %v3208
  %v3246 = vpack.c.bf16 %v3211, %v3210
  %v3247 = vpack.c.bf16 %v3213, %v3212
  %v3248 = vpack.c.bf16 %v3215, %v3214
  %v3249 = vpack.c.bf16 %v3217, %v3216
  %v3250 = vld [vmem:[%s11] sm:$0xf]
  %v3251 = vld [vmem:[%s11 + $0x4] sm:$0xf]
  %v3252 = vld [vmem:[%s11 + $0x8] sm:$0xf]
  %v3253 = vld [vmem:[%s11 + $0xc] sm:$0xf]
  %v3254 = vld [vmem:[%s11 + $0x10] sm:$0xf]
  %v3255 = vld [vmem:[%s11 + $0x14] sm:$0xf]
  %v3256 = vld [vmem:[%s11 + $0x18] sm:$0xf]
  %v3257 = vld [vmem:[%s11 + $0x1c] sm:$0xf]
  %v3258 = vld [vmem:[%s12] sm:$0x1]
  %v3260 = vperm.slane %v3258, 0
  %v3270 = vunpack.c.l.b16 %v3250
  %v3271 = vunpack.c.l.b16 %v3251
  %v3272 = vunpack.c.l.b16 %v3252
  %v3273 = vunpack.c.l.b16 %v3253
  %v3274 = vunpack.c.l.b16 %v3254
  %v3275 = vunpack.c.l.b16 %v3255
  %v3276 = vunpack.c.l.b16 %v3256
  %v3277 = vunpack.c.l.b16 %v3257
  %v3278 = vpack.c.b16 %v3271, %v3270
  %v3279 = vpack.c.b16 %v3273, %v3272
  %v3280 = vpack.c.b16 %v3275, %v3274
  %v3281 = vpack.c.b16 %v3277, %v3276
  %v3287 = vsel %vm561, %v3218, 0
  %v3290 = vsel %vm561, %v3219, 0
  %v3293 = vsel %vm561, %v3220, 0
  %v3296 = vsel %vm561, %v3221, 0
  %v3299 = vsel %vm561, %v3222, 0
  %v3302 = vsel %vm561, %v3223, 0
  %v3305 = vsel %vm561, %v3224, 0
  %v3308 = vsel %vm561, %v3225, 0
  %v3311 = vsel %vm561, %v3226, 0
  %v3314 = vsel %vm561, %v3227, 0
  %v3317 = vsel %vm561, %v3228, 0
  %v3320 = vsel %vm561, %v3229, 0
  %v3323 = vsel %vm561, %v3230, 0
  %v3326 = vsel %vm561, %v3231, 0
  %v3329 = vsel %vm561, %v3232, 0
  %v3332 = vsel %vm561, %v3233, 0
  %v3335 = vsel %vm561, %v3234, 0
  %v3338 = vsel %vm561, %v3235, 0
  %v3341 = vsel %vm561, %v3236, 0
  %v3344 = vsel %vm561, %v3237, 0
  %v3347 = vsel %vm561, %v3238, 0
  %v3350 = vsel %vm561, %v3239, 0
  %v3353 = vsel %vm561, %v3240, 0
  %v3356 = vsel %vm561, %v3241, 0
  %v3359 = vsel %vm561, %v3242, 0
  %v3362 = vsel %vm561, %v3243, 0
  %v3365 = vsel %vm561, %v3244, 0
  %v3368 = vsel %vm561, %v3245, 0
  %v3371 = vsel %vm561, %v3246, 0
  %v3374 = vsel %vm561, %v3247, 0
  %v3377 = vsel %vm561, %v3248, 0
  %v3380 = vsel %vm561, %v3249, 0
  %3382 = vmatpush.bf16.msra.mxu0 0
  %3383 = vmatpush.bf16.msra.mxu0 0
  %3384 = vmatpush.bf16.msra.mxu0 0
  %3385 = vmatpush.bf16.msra.mxu0 0
  %3386 = vmatpush.bf16.msra.mxu0 %v3281
  %3387 = vmatpush.bf16.msra.mxu0 %v3280
  %3388 = vmatpush.bf16.msra.mxu0 %v3279
  %3389 = vmatpush.bf16.msra.mxu0 %v3278
  %3390 = vmatmul.bf16.gmra.mxu0 %v3287
  %v3391 = vpop.f32.mrf.mxu0
  %v3392 = vadd.f32 %v3260, %v3391
  %v3393 = vpop.f32.mrf.mxu0
  %v3394 = vadd.f32 %v3260, %v3393
  %3395 = vmatmul.bf16.gmra.mxu0 %v3290
  %v3396 = vpop.f32.mrf.mxu0
  %v3397 = vadd.f32 %v3260, %v3396
  %v3398 = vpop.f32.mrf.mxu0
  %v3399 = vadd.f32 %v3260, %v3398
  %3400 = vmatmul.bf16.gmra.mxu0 %v3293
  %v3401 = vpop.f32.mrf.mxu0
  %v3402 = vadd.f32 %v3260, %v3401
  %v3403 = vpop.f32.mrf.mxu0
  %v3404 = vadd.f32 %v3260, %v3403
  %3405 = vmatmul.bf16.gmra.mxu0 %v3296
  %v3406 = vpop.f32.mrf.mxu0
  %v3407 = vadd.f32 %v3260, %v3406
  %v3408 = vpop.f32.mrf.mxu0
  %v3409 = vadd.f32 %v3260, %v3408
  %3410 = vmatmul.bf16.gmra.mxu0 %v3299
  %v3411 = vpop.f32.mrf.mxu0
  %v3412 = vadd.f32 %v3260, %v3411
  %v3413 = vpop.f32.mrf.mxu0
  %v3414 = vadd.f32 %v3260, %v3413
  %3415 = vmatmul.bf16.gmra.mxu0 %v3302
  %v3416 = vpop.f32.mrf.mxu0
  %v3417 = vadd.f32 %v3260, %v3416
  %v3418 = vpop.f32.mrf.mxu0
  %v3419 = vadd.f32 %v3260, %v3418
  %3420 = vmatmul.bf16.gmra.mxu0 %v3305
  %v3421 = vpop.f32.mrf.mxu0
  %v3422 = vadd.f32 %v3260, %v3421
  %v3423 = vpop.f32.mrf.mxu0
  %v3424 = vadd.f32 %v3260, %v3423
  %3425 = vmatmul.bf16.gmra.mxu0 %v3308
  %v3426 = vpop.f32.mrf.mxu0
  %v3427 = vadd.f32 %v3260, %v3426
  %v3428 = vpop.f32.mrf.mxu0
  %v3429 = vadd.f32 %v3260, %v3428
  %3430 = vmatmul.bf16.gmra.mxu0 %v3311
  %v3431 = vpop.f32.mrf.mxu0
  %v3432 = vadd.f32 %v3260, %v3431
  %v3433 = vpop.f32.mrf.mxu0
  %v3434 = vadd.f32 %v3260, %v3433
  %3435 = vmatmul.bf16.gmra.mxu0 %v3314
  %v3436 = vpop.f32.mrf.mxu0
  %v3437 = vadd.f32 %v3260, %v3436
  %v3438 = vpop.f32.mrf.mxu0
  %v3439 = vadd.f32 %v3260, %v3438
  %3440 = vmatmul.bf16.gmra.mxu0 %v3317
  %v3441 = vpop.f32.mrf.mxu0
  %v3442 = vadd.f32 %v3260, %v3441
  %v3443 = vpop.f32.mrf.mxu0
  %v3444 = vadd.f32 %v3260, %v3443
  %3445 = vmatmul.bf16.gmra.mxu0 %v3320
  %v3446 = vpop.f32.mrf.mxu0
  %v3447 = vadd.f32 %v3260, %v3446
  %v3448 = vpop.f32.mrf.mxu0
  %v3449 = vadd.f32 %v3260, %v3448
  %3450 = vmatmul.bf16.gmra.mxu0 %v3323
  %v3451 = vpop.f32.mrf.mxu0
  %v3452 = vadd.f32 %v3260, %v3451
  %v3453 = vpop.f32.mrf.mxu0
  %v3454 = vadd.f32 %v3260, %v3453
  %3455 = vmatmul.bf16.gmra.mxu0 %v3326
  %v3456 = vpop.f32.mrf.mxu0
  %v3457 = vadd.f32 %v3260, %v3456
  %v3458 = vpop.f32.mrf.mxu0
  %v3459 = vadd.f32 %v3260, %v3458
  %3460 = vmatmul.bf16.gmra.mxu0 %v3329
  %v3461 = vpop.f32.mrf.mxu0
  %v3462 = vadd.f32 %v3260, %v3461
  %v3463 = vpop.f32.mrf.mxu0
  %v3464 = vadd.f32 %v3260, %v3463
  %3465 = vmatmul.bf16.gmra.mxu0 %v3332
  %v3466 = vpop.f32.mrf.mxu0
  %v3467 = vadd.f32 %v3260, %v3466
  %v3468 = vpop.f32.mrf.mxu0
  %v3469 = vadd.f32 %v3260, %v3468
  %3470 = vmatmul.bf16.gmra.mxu0 %v3335
  %v3471 = vpop.f32.mrf.mxu0
  %v3472 = vadd.f32 %v3260, %v3471
  %v3473 = vpop.f32.mrf.mxu0
  %v3474 = vadd.f32 %v3260, %v3473
  %3475 = vmatmul.bf16.gmra.mxu0 %v3338
  %v3476 = vpop.f32.mrf.mxu0
  %v3477 = vadd.f32 %v3260, %v3476
  %v3478 = vpop.f32.mrf.mxu0
  %v3479 = vadd.f32 %v3260, %v3478
  %3480 = vmatmul.bf16.gmra.mxu0 %v3341
  %v3481 = vpop.f32.mrf.mxu0
  %v3482 = vadd.f32 %v3260, %v3481
  %v3483 = vpop.f32.mrf.mxu0
  %v3484 = vadd.f32 %v3260, %v3483
  %3485 = vmatmul.bf16.gmra.mxu0 %v3344
  %v3486 = vpop.f32.mrf.mxu0
  %v3487 = vadd.f32 %v3260, %v3486
  %v3488 = vpop.f32.mrf.mxu0
  %v3489 = vadd.f32 %v3260, %v3488
  %3490 = vmatmul.bf16.gmra.mxu0 %v3347
  %v3491 = vpop.f32.mrf.mxu0
  %v3492 = vadd.f32 %v3260, %v3491
  %v3493 = vpop.f32.mrf.mxu0
  %v3494 = vadd.f32 %v3260, %v3493
  %3495 = vmatmul.bf16.gmra.mxu0 %v3350
  %v3496 = vpop.f32.mrf.mxu0
  %v3497 = vadd.f32 %v3260, %v3496
  %v3498 = vpop.f32.mrf.mxu0
  %v3499 = vadd.f32 %v3260, %v3498
  %3500 = vmatmul.bf16.gmra.mxu0 %v3353
  %v3501 = vpop.f32.mrf.mxu0
  %v3502 = vadd.f32 %v3260, %v3501
  %v3503 = vpop.f32.mrf.mxu0
  %v3504 = vadd.f32 %v3260, %v3503
  %3505 = vmatmul.bf16.gmra.mxu0 %v3356
  %v3506 = vpop.f32.mrf.mxu0
  %v3507 = vadd.f32 %v3260, %v3506
  %v3508 = vpop.f32.mrf.mxu0
  %v3509 = vadd.f32 %v3260, %v3508
  %3510 = vmatmul.bf16.gmra.mxu0 %v3359
  %v3511 = vpop.f32.mrf.mxu0
  %v3512 = vadd.f32 %v3260, %v3511
  %v3513 = vpop.f32.mrf.mxu0
  %v3514 = vadd.f32 %v3260, %v3513
  %3515 = vmatmul.bf16.gmra.mxu0 %v3362
  %v3516 = vpop.f32.mrf.mxu0
  %v3517 = vadd.f32 %v3260, %v3516
  %v3518 = vpop.f32.mrf.mxu0
  %v3519 = vadd.f32 %v3260, %v3518
  %3520 = vmatmul.bf16.gmra.mxu0 %v3365
  %v3521 = vpop.f32.mrf.mxu0
  %v3522 = vadd.f32 %v3260, %v3521
  %v3523 = vpop.f32.mrf.mxu0
  %v3524 = vadd.f32 %v3260, %v3523
  %3525 = vmatmul.bf16.gmra.mxu0 %v3368
  %v3526 = vpop.f32.mrf.mxu0
  %v3527 = vadd.f32 %v3260, %v3526
  %v3528 = vpop.f32.mrf.mxu0
  %v3529 = vadd.f32 %v3260, %v3528
  %3530 = vmatmul.bf16.gmra.mxu0 %v3371
  %v3531 = vpop.f32.mrf.mxu0
  %v3532 = vadd.f32 %v3260, %v3531
  %v3533 = vpop.f32.mrf.mxu0
  %v3534 = vadd.f32 %v3260, %v3533
  %3535 = vmatmul.bf16.gmra.mxu0 %v3374
  %v3536 = vpop.f32.mrf.mxu0
  %v3537 = vadd.f32 %v3260, %v3536
  %v3538 = vpop.f32.mrf.mxu0
  %v3539 = vadd.f32 %v3260, %v3538
  %3540 = vmatmul.bf16.gmra.mxu0 %v3377
  %v3541 = vpop.f32.mrf.mxu0
  %v3542 = vadd.f32 %v3260, %v3541
  %v3543 = vpop.f32.mrf.mxu0
  %v3544 = vadd.f32 %v3260, %v3543
  %3545 = vmatmul.bf16.gmra.mxu0 %v3380
  %v3546 = vpop.f32.mrf.mxu0
  %v3547 = vadd.f32 %v3260, %v3546
  %v3548 = vpop.f32.mrf.mxu0
  %v3549 = vadd.f32 %v3260, %v3548
  %3550 = vdwg.mxu0
  %v3551 = vmax.f32 %v3392, -30.0
  %v3552 = vmax.f32 %v3394, -30.0
  %v3553 = vmax.f32 %v3397, -30.0
  %v3554 = vmax.f32 %v3399, -30.0
  %v3555 = vmax.f32 %v3402, -30.0
  %v3556 = vmax.f32 %v3404, -30.0
  %v3557 = vmax.f32 %v3407, -30.0
  %v3558 = vmax.f32 %v3409, -30.0
  %v3559 = vmax.f32 %v3412, -30.0
  %v3560 = vmax.f32 %v3414, -30.0
  %v3561 = vmax.f32 %v3417, -30.0
  %v3562 = vmax.f32 %v3419, -30.0
  %v3563 = vmax.f32 %v3422, -30.0
  %v3564 = vmax.f32 %v3424, -30.0
  %v3565 = vmax.f32 %v3427, -30.0
  %v3566 = vmax.f32 %v3429, -30.0
  %v3567 = vmax.f32 %v3432, -30.0
  %v3568 = vmax.f32 %v3434, -30.0
  %v3569 = vmax.f32 %v3437, -30.0
  %v3570 = vmax.f32 %v3439, -30.0
  %v3571 = vmax.f32 %v3442, -30.0
  %v3572 = vmax.f32 %v3444, -30.0
  %v3573 = vmax.f32 %v3447, -30.0
  %v3574 = vmax.f32 %v3449, -30.0
  %v3575 = vmax.f32 %v3452, -30.0
  %v3576 = vmax.f32 %v3454, -30.0
  %v3577 = vmax.f32 %v3457, -30.0
  %v3578 = vmax.f32 %v3459, -30.0
  %v3579 = vmax.f32 %v3462, -30.0
  %v3580 = vmax.f32 %v3464, -30.0
  %v3581 = vmax.f32 %v3467, -30.0
  %v3582 = vmax.f32 %v3469, -30.0
  %v3583 = vmax.f32 %v3472, -30.0
  %v3584 = vmax.f32 %v3474, -30.0
  %v3585 = vmax.f32 %v3477, -30.0
  %v3586 = vmax.f32 %v3479, -30.0
  %v3587 = vmax.f32 %v3482, -30.0
  %v3588 = vmax.f32 %v3484, -30.0
  %v3589 = vmax.f32 %v3487, -30.0
  %v3590 = vmax.f32 %v3489, -30.0
  %v3591 = vmax.f32 %v3492, -30.0
  %v3592 = vmax.f32 %v3494, -30.0
  %v3593 = vmax.f32 %v3497, -30.0
  %v3594 = vmax.f32 %v3499, -30.0
  %v3595 = vmax.f32 %v3502, -30.0
  %v3596 = vmax.f32 %v3504, -30.0
  %v3597 = vmax.f32 %v3507, -30.0
  %v3598 = vmax.f32 %v3509, -30.0
  %v3599 = vmax.f32 %v3512, -30.0
  %v3600 = vmax.f32 %v3514, -30.0
  %v3601 = vmax.f32 %v3517, -30.0
  %v3602 = vmax.f32 %v3519, -30.0
  %v3603 = vmax.f32 %v3522, -30.0
  %v3604 = vmax.f32 %v3524, -30.0
  %v3605 = vmax.f32 %v3527, -30.0
  %v3606 = vmax.f32 %v3529, -30.0
  %v3607 = vmax.f32 %v3532, -30.0
  %v3608 = vmax.f32 %v3534, -30.0
  %v3609 = vmax.f32 %v3537, -30.0
  %v3610 = vmax.f32 %v3539, -30.0
  %v3611 = vmax.f32 %v3542, -30.0
  %v3612 = vmax.f32 %v3544, -30.0
  %v3613 = vmax.f32 %v3547, -30.0
  %v3614 = vmax.f32 %v3549, -30.0
  %v3615 = vmin.f32 %v3551, 30.0
  %v3616 = vmin.f32 %v3552, 30.0
  %v3617 = vmin.f32 %v3553, 30.0
  %v3618 = vmin.f32 %v3554, 30.0
  %v3619 = vmin.f32 %v3555, 30.0
  %v3620 = vmin.f32 %v3556, 30.0
  %v3621 = vmin.f32 %v3557, 30.0
  %v3622 = vmin.f32 %v3558, 30.0
  %v3623 = vmin.f32 %v3559, 30.0
  %v3624 = vmin.f32 %v3560, 30.0
  %v3625 = vmin.f32 %v3561, 30.0
  %v3626 = vmin.f32 %v3562, 30.0
  %v3627 = vmin.f32 %v3563, 30.0
  %v3628 = vmin.f32 %v3564, 30.0
  %v3629 = vmin.f32 %v3565, 30.0
  %v3630 = vmin.f32 %v3566, 30.0
  %v3631 = vmin.f32 %v3567, 30.0
  %v3632 = vmin.f32 %v3568, 30.0
  %v3633 = vmin.f32 %v3569, 30.0
  %v3634 = vmin.f32 %v3570, 30.0
  %v3635 = vmin.f32 %v3571, 30.0
  %v3636 = vmin.f32 %v3572, 30.0
  %v3637 = vmin.f32 %v3573, 30.0
  %v3638 = vmin.f32 %v3574, 30.0
  %v3639 = vmin.f32 %v3575, 30.0
  %v3640 = vmin.f32 %v3576, 30.0
  %v3641 = vmin.f32 %v3577, 30.0
  %v3642 = vmin.f32 %v3578, 30.0
  %v3643 = vmin.f32 %v3579, 30.0
  %v3644 = vmin.f32 %v3580, 30.0
  %v3645 = vmin.f32 %v3581, 30.0
  %v3646 = vmin.f32 %v3582, 30.0
  %v3647 = vmin.f32 %v3583, 30.0
  %v3648 = vmin.f32 %v3584, 30.0
  %v3649 = vmin.f32 %v3585, 30.0
  %v3650 = vmin.f32 %v3586, 30.0
  %v3651 = vmin.f32 %v3587, 30.0
  %v3652 = vmin.f32 %v3588, 30.0
  %v3653 = vmin.f32 %v3589, 30.0
  %v3654 = vmin.f32 %v3590, 30.0
  %v3655 = vmin.f32 %v3591, 30.0
  %v3656 = vmin.f32 %v3592, 30.0
  %v3657 = vmin.f32 %v3593, 30.0
  %v3658 = vmin.f32 %v3594, 30.0
  %v3659 = vmin.f32 %v3595, 30.0
  %v3660 = vmin.f32 %v3596, 30.0
  %v3661 = vmin.f32 %v3597, 30.0
  %v3662 = vmin.f32 %v3598, 30.0
  %v3663 = vmin.f32 %v3599, 30.0
  %v3664 = vmin.f32 %v3600, 30.0
  %v3665 = vmin.f32 %v3601, 30.0
  %v3666 = vmin.f32 %v3602, 30.0
  %v3667 = vmin.f32 %v3603, 30.0
  %v3668 = vmin.f32 %v3604, 30.0
  %v3669 = vmin.f32 %v3605, 30.0
  %v3670 = vmin.f32 %v3606, 30.0
  %v3671 = vmin.f32 %v3607, 30.0
  %v3672 = vmin.f32 %v3608, 30.0
  %v3673 = vmin.f32 %v3609, 30.0
  %v3674 = vmin.f32 %v3610, 30.0
  %v3675 = vmin.f32 %v3611, 30.0
  %v3676 = vmin.f32 %v3612, 30.0
  %v3677 = vmin.f32 %v3613, 30.0
  %v3678 = vmin.f32 %v3614, 30.0
  %v3679 = vsub.f32 0.0, %v3615
  %v3680 = vsub.f32 0.0, %v3616
  %v3681 = vsub.f32 0.0, %v3617
  %v3682 = vsub.f32 0.0, %v3618
  %v3683 = vsub.f32 0.0, %v3619
  %v3684 = vsub.f32 0.0, %v3620
  %v3685 = vsub.f32 0.0, %v3621
  %v3686 = vsub.f32 0.0, %v3622
  %v3687 = vsub.f32 0.0, %v3623
  %v3688 = vsub.f32 0.0, %v3624
  %v3689 = vsub.f32 0.0, %v3625
  %v3690 = vsub.f32 0.0, %v3626
  %v3691 = vsub.f32 0.0, %v3627
  %v3692 = vsub.f32 0.0, %v3628
  %v3693 = vsub.f32 0.0, %v3629
  %v3694 = vsub.f32 0.0, %v3630
  %v3695 = vsub.f32 0.0, %v3631
  %v3696 = vsub.f32 0.0, %v3632
  %v3697 = vsub.f32 0.0, %v3633
  %v3698 = vsub.f32 0.0, %v3634
  %v3699 = vsub.f32 0.0, %v3635
  %v3700 = vsub.f32 0.0, %v3636
  %v3701 = vsub.f32 0.0, %v3637
  %v3702 = vsub.f32 0.0, %v3638
  %v3703 = vsub.f32 0.0, %v3639
  %v3704 = vsub.f32 0.0, %v3640
  %v3705 = vsub.f32 0.0, %v3641
  %v3706 = vsub.f32 0.0, %v3642
  %v3707 = vsub.f32 0.0, %v3643
  %v3708 = vsub.f32 0.0, %v3644
  %v3709 = vsub.f32 0.0, %v3645
  %v3710 = vsub.f32 0.0, %v3646
  %v3711 = vsub.f32 0.0, %v3647
  %v3712 = vsub.f32 0.0, %v3648
  %v3713 = vsub.f32 0.0, %v3649
  %v3714 = vsub.f32 0.0, %v3650
  %v3715 = vsub.f32 0.0, %v3651
  %v3716 = vsub.f32 0.0, %v3652
  %v3717 = vsub.f32 0.0, %v3653
  %v3718 = vsub.f32 0.0, %v3654
  %v3719 = vsub.f32 0.0, %v3655
  %v3720 = vsub.f32 0.0, %v3656
  %v3721 = vsub.f32 0.0, %v3657
  %v3722 = vsub.f32 0.0, %v3658
  %v3723 = vsub.f32 0.0, %v3659
  %v3724 = vsub.f32 0.0, %v3660
  %v3725 = vsub.f32 0.0, %v3661
  %v3726 = vsub.f32 0.0, %v3662
  %v3727 = vsub.f32 0.0, %v3663
  %v3728 = vsub.f32 0.0, %v3664
  %v3729 = vsub.f32 0.0, %v3665
  %v3730 = vsub.f32 0.0, %v3666
  %v3731 = vsub.f32 0.0, %v3667
  %v3732 = vsub.f32 0.0, %v3668
  %v3733 = vsub.f32 0.0, %v3669
  %v3734 = vsub.f32 0.0, %v3670
  %v3735 = vsub.f32 0.0, %v3671
  %v3736 = vsub.f32 0.0, %v3672
  %v3737 = vsub.f32 0.0, %v3673
  %v3738 = vsub.f32 0.0, %v3674
  %v3739 = vsub.f32 0.0, %v3675
  %v3740 = vsub.f32 0.0, %v3676
  %v3741 = vsub.f32 0.0, %v3677
  %v3742 = vsub.f32 0.0, %v3678
  %v3743 = vmul.f32 %v3679, 1.442695
  %v3744 = vpow.pop %v3743
  %v3745 = vmul.f32 %v3680, 1.442695
  %v3746 = vpow.pop %v3745
  %v3747 = vmul.f32 %v3681, 1.442695
  %v3748 = vpow.pop %v3747
  %v3749 = vmul.f32 %v3682, 1.442695
  %v3750 = vpow.pop %v3749
  %v3751 = vmul.f32 %v3683, 1.442695
  %v3752 = vpow.pop %v3751
  %v3753 = vmul.f32 %v3684, 1.442695
  %v3754 = vpow.pop %v3753
  %v3755 = vmul.f32 %v3685, 1.442695
  %v3756 = vpow.pop %v3755
  %v3757 = vmul.f32 %v3686, 1.442695
  %v3758 = vpow.pop %v3757
  %v3759 = vmul.f32 %v3687, 1.442695
  %v3760 = vpow.pop %v3759
  %v3761 = vmul.f32 %v3688, 1.442695
  %v3762 = vpow.pop %v3761
  %v3763 = vmul.f32 %v3689, 1.442695
  %v3764 = vpow.pop %v3763
  %v3765 = vmul.f32 %v3690, 1.442695
  %v3766 = vpow.pop %v3765
  %v3767 = vmul.f32 %v3691, 1.442695
  %v3768 = vpow.pop %v3767
  %v3769 = vmul.f32 %v3692, 1.442695
  %v3770 = vpow.pop %v3769
  %v3771 = vmul.f32 %v3693, 1.442695
  %v3772 = vpow.pop %v3771
  %v3773 = vmul.f32 %v3694, 1.442695
  %v3774 = vpow.pop %v3773
  %v3775 = vmul.f32 %v3695, 1.442695
  %v3776 = vpow.pop %v3775
  %v3777 = vmul.f32 %v3696, 1.442695
  %v3778 = vpow.pop %v3777
  %v3779 = vmul.f32 %v3697, 1.442695
  %v3780 = vpow.pop %v3779
  %v3781 = vmul.f32 %v3698, 1.442695
  %v3782 = vpow.pop %v3781
  %v3783 = vmul.f32 %v3699, 1.442695
  %v3784 = vpow.pop %v3783
  %v3785 = vmul.f32 %v3700, 1.442695
  %v3786 = vpow.pop %v3785
  %v3787 = vmul.f32 %v3701, 1.442695
  %v3788 = vpow.pop %v3787
  %v3789 = vmul.f32 %v3702, 1.442695
  %v3790 = vpow.pop %v3789
  %v3791 = vmul.f32 %v3703, 1.442695
  %v3792 = vpow.pop %v3791
  %v3793 = vmul.f32 %v3704, 1.442695
  %v3794 = vpow.pop %v3793
  %v3795 = vmul.f32 %v3705, 1.442695
  %v3796 = vpow.pop %v3795
  %v3797 = vmul.f32 %v3706, 1.442695
  %v3798 = vpow.pop %v3797
  %v3799 = vmul.f32 %v3707, 1.442695
  %v3800 = vpow.pop %v3799
  %v3801 = vmul.f32 %v3708, 1.442695
  %v3802 = vpow.pop %v3801
  %v3803 = vmul.f32 %v3709, 1.442695
  %v3804 = vpow.pop %v3803
  %v3805 = vmul.f32 %v3710, 1.442695
  %v3806 = vpow.pop %v3805
  %v3807 = vmul.f32 %v3711, 1.442695
  %v3808 = vpow.pop %v3807
  %v3809 = vmul.f32 %v3712, 1.442695
  %v3810 = vpow.pop %v3809
  %v3811 = vmul.f32 %v3713, 1.442695
  %v3812 = vpow.pop %v3811
  %v3813 = vmul.f32 %v3714, 1.442695
  %v3814 = vpow.pop %v3813
  %v3815 = vmul.f32 %v3715, 1.442695
  %v3816 = vpow.pop %v3815
  %v3817 = vmul.f32 %v3716, 1.442695
  %v3818 = vpow.pop %v3817
  %v3819 = vmul.f32 %v3717, 1.442695
  %v3820 = vpow.pop %v3819
  %v3821 = vmul.f32 %v3718, 1.442695
  %v3822 = vpow.pop %v3821
  %v3823 = vmul.f32 %v3719, 1.442695
  %v3824 = vpow.pop %v3823
  %v3825 = vmul.f32 %v3720, 1.442695
  %v3826 = vpow.pop %v3825
  %v3827 = vmul.f32 %v3721, 1.442695
  %v3828 = vpow.pop %v3827
  %v3829 = vmul.f32 %v3722, 1.442695
  %v3830 = vpow.pop %v3829
  %v3831 = vmul.f32 %v3723, 1.442695
  %v3832 = vpow.pop %v3831
  %v3833 = vmul.f32 %v3724, 1.442695
  %v3834 = vpow.pop %v3833
  %v3835 = vmul.f32 %v3725, 1.442695
  %v3836 = vpow.pop %v3835
  %v3837 = vmul.f32 %v3726, 1.442695
  %v3838 = vpow.pop %v3837
  %v3839 = vmul.f32 %v3727, 1.442695
  %v3840 = vpow.pop %v3839
  %v3841 = vmul.f32 %v3728, 1.442695
  %v3842 = vpow.pop %v3841
  %v3843 = vmul.f32 %v3729, 1.442695
  %v3844 = vpow.pop %v3843
  %v3845 = vmul.f32 %v3730, 1.442695
  %v3846 = vpow.pop %v3845
  %v3847 = vmul.f32 %v3731, 1.442695
  %v3848 = vpow.pop %v3847
  %v3849 = vmul.f32 %v3732, 1.442695
  %v3850 = vpow.pop %v3849
  %v3851 = vmul.f32 %v3733, 1.442695
  %v3852 = vpow.pop %v3851
  %v3853 = vmul.f32 %v3734, 1.442695
  %v3854 = vpow.pop %v3853
  %v3855 = vmul.f32 %v3735, 1.442695
  %v3856 = vpow.pop %v3855
  %v3857 = vmul.f32 %v3736, 1.442695
  %v3858 = vpow.pop %v3857
  %v3859 = vmul.f32 %v3737, 1.442695
  %v3860 = vpow.pop %v3859
  %v3861 = vmul.f32 %v3738, 1.442695
  %v3862 = vpow.pop %v3861
  %v3863 = vmul.f32 %v3739, 1.442695
  %v3864 = vpow.pop %v3863
  %v3865 = vmul.f32 %v3740, 1.442695
  %v3866 = vpow.pop %v3865
  %v3867 = vmul.f32 %v3741, 1.442695
  %v3868 = vpow.pop %v3867
  %v3869 = vmul.f32 %v3742, 1.442695
  %v3870 = vpow.pop %v3869
  %v3871 = vadd.f32 %v3744, 1.0
  %v3872 = vadd.f32 %v3746, 1.0
  %v3873 = vadd.f32 %v3748, 1.0
  %v3874 = vadd.f32 %v3750, 1.0
  %v3875 = vadd.f32 %v3752, 1.0
  %v3876 = vadd.f32 %v3754, 1.0
  %v3877 = vadd.f32 %v3756, 1.0
  %v3878 = vadd.f32 %v3758, 1.0
  %v3879 = vadd.f32 %v3760, 1.0
  %v3880 = vadd.f32 %v3762, 1.0
  %v3881 = vadd.f32 %v3764, 1.0
  %v3882 = vadd.f32 %v3766, 1.0
  %v3883 = vadd.f32 %v3768, 1.0
  %v3884 = vadd.f32 %v3770, 1.0
  %v3885 = vadd.f32 %v3772, 1.0
  %v3886 = vadd.f32 %v3774, 1.0
  %v3887 = vadd.f32 %v3776, 1.0
  %v3888 = vadd.f32 %v3778, 1.0
  %v3889 = vadd.f32 %v3780, 1.0
  %v3890 = vadd.f32 %v3782, 1.0
  %v3891 = vadd.f32 %v3784, 1.0
  %v3892 = vadd.f32 %v3786, 1.0
  %v3893 = vadd.f32 %v3788, 1.0
  %v3894 = vadd.f32 %v3790, 1.0
  %v3895 = vadd.f32 %v3792, 1.0
  %v3896 = vadd.f32 %v3794, 1.0
  %v3897 = vadd.f32 %v3796, 1.0
  %v3898 = vadd.f32 %v3798, 1.0
  %v3899 = vadd.f32 %v3800, 1.0
  %v3900 = vadd.f32 %v3802, 1.0
  %v3901 = vadd.f32 %v3804, 1.0
  %v3902 = vadd.f32 %v3806, 1.0
  %v3903 = vadd.f32 %v3808, 1.0
  %v3904 = vadd.f32 %v3810, 1.0
  %v3905 = vadd.f32 %v3812, 1.0
  %v3906 = vadd.f32 %v3814, 1.0
  %v3907 = vadd.f32 %v3816, 1.0
  %v3908 = vadd.f32 %v3818, 1.0
  %v3909 = vadd.f32 %v3820, 1.0
  %v3910 = vadd.f32 %v3822, 1.0
  %v3911 = vadd.f32 %v3824, 1.0
  %v3912 = vadd.f32 %v3826, 1.0
  %v3913 = vadd.f32 %v3828, 1.0
  %v3914 = vadd.f32 %v3830, 1.0
  %v3915 = vadd.f32 %v3832, 1.0
  %v3916 = vadd.f32 %v3834, 1.0
  %v3917 = vadd.f32 %v3836, 1.0
  %v3918 = vadd.f32 %v3838, 1.0
  %v3919 = vadd.f32 %v3840, 1.0
  %v3920 = vadd.f32 %v3842, 1.0
  %v3921 = vadd.f32 %v3844, 1.0
  %v3922 = vadd.f32 %v3846, 1.0
  %v3923 = vadd.f32 %v3848, 1.0
  %v3924 = vadd.f32 %v3850, 1.0
  %v3925 = vadd.f32 %v3852, 1.0
  %v3926 = vadd.f32 %v3854, 1.0
  %v3927 = vadd.f32 %v3856, 1.0
  %v3928 = vadd.f32 %v3858, 1.0
  %v3929 = vadd.f32 %v3860, 1.0
  %v3930 = vadd.f32 %v3862, 1.0
  %v3931 = vadd.f32 %v3864, 1.0
  %v3932 = vadd.f32 %v3866, 1.0
  %v3933 = vadd.f32 %v3868, 1.0
  %v3934 = vadd.f32 %v3870, 1.0
  %v3935 = vrcp.pop %v3871
  %v3936 = vmul.f32 %v3871, %v3935
  %v3937 = vsub.f32 1.0, %v3936
  %v3938 = vmul.f32 %v3935, %v3937
  %v3939 = vadd.f32 %v3935, %v3938
  %vm3940 = vweird.f32 %v3871
  %vm3941 = vweird.f32 %v3935
  %vm3942 = vmor %vm3940, %vm3941
  %v3943 = vsel %vm3942, %v3935, %v3939
  %v3944 = vand.u32 2147483647, %v3871
  %vm3945 = vcmp.eq.f32.partialorder %v3944, 8.507059e+37
  %v3946 = vand.u32 %v3871, 2147483648
  %v3947 = vor.u32 1.1754944e-38, %v3946
  %v3948 = vsel %vm3945, %v3947, %v3943
  %v3949 = vmul.f32 1.0, %v3948
  %v3950 = vrcp.pop %v3872
  %v3951 = vmul.f32 %v3872, %v3950
  %v3952 = vsub.f32 1.0, %v3951
  %v3953 = vmul.f32 %v3950, %v3952
  %v3954 = vadd.f32 %v3950, %v3953
  %vm3955 = vweird.f32 %v3872
  %vm3956 = vweird.f32 %v3950
  %vm3957 = vmor %vm3955, %vm3956
  %v3958 = vsel %vm3957, %v3950, %v3954
  %v3959 = vand.u32 2147483647, %v3872
  %vm3960 = vcmp.eq.f32.partialorder %v3959, 8.507059e+37
  %v3961 = vand.u32 %v3872, 2147483648
  %v3962 = vor.u32 1.1754944e-38, %v3961
  %v3963 = vsel %vm3960, %v3962, %v3958
  %v3964 = vmul.f32 1.0, %v3963
  %v3965 = vrcp.pop %v3873
  %v3966 = vmul.f32 %v3873, %v3965
  %v3967 = vsub.f32 1.0, %v3966
  %v3968 = vmul.f32 %v3965, %v3967
  %v3969 = vadd.f32 %v3965, %v3968
  %vm3970 = vweird.f32 %v3873
  %vm3971 = vweird.f32 %v3965
  %vm3972 = vmor %vm3970, %vm3971
  %v3973 = vsel %vm3972, %v3965, %v3969
  %v3974 = vand.u32 2147483647, %v3873
  %vm3975 = vcmp.eq.f32.partialorder %v3974, 8.507059e+37
  %v3976 = vand.u32 %v3873, 2147483648
  %v3977 = vor.u32 1.1754944e-38, %v3976
  %v3978 = vsel %vm3975, %v3977, %v3973
  %v3979 = vmul.f32 1.0, %v3978
  %v3980 = vrcp.pop %v3874
  %v3981 = vmul.f32 %v3874, %v3980
  %v3982 = vsub.f32 1.0, %v3981
  %v3983 = vmul.f32 %v3980, %v3982
  %v3984 = vadd.f32 %v3980, %v3983
  %vm3985 = vweird.f32 %v3874
  %vm3986 = vweird.f32 %v3980
  %vm3987 = vmor %vm3985, %vm3986
  %v3988 = vsel %vm3987, %v3980, %v3984
  %v3989 = vand.u32 2147483647, %v3874
  %vm3990 = vcmp.eq.f32.partialorder %v3989, 8.507059e+37
  %v3991 = vand.u32 %v3874, 2147483648
  %v3992 = vor.u32 1.1754944e-38, %v3991
  %v3993 = vsel %vm3990, %v3992, %v3988
  %v3994 = vmul.f32 1.0, %v3993
  %v3995 = vrcp.pop %v3875
  %v3996 = vmul.f32 %v3875, %v3995
  %v3997 = vsub.f32 1.0, %v3996
  %v3998 = vmul.f32 %v3995, %v3997
  %v3999 = vadd.f32 %v3995, %v3998
  %vm4000 = vweird.f32 %v3875
  %vm4001 = vweird.f32 %v3995
  %vm4002 = vmor %vm4000, %vm4001
  %v4003 = vsel %vm4002, %v3995, %v3999
  %v4004 = vand.u32 2147483647, %v3875
  %vm4005 = vcmp.eq.f32.partialorder %v4004, 8.507059e+37
  %v4006 = vand.u32 %v3875, 2147483648
  %v4007 = vor.u32 1.1754944e-38, %v4006
  %v4008 = vsel %vm4005, %v4007, %v4003
  %v4009 = vmul.f32 1.0, %v4008
  %v4010 = vrcp.pop %v3876
  %v4011 = vmul.f32 %v3876, %v4010
  %v4012 = vsub.f32 1.0, %v4011
  %v4013 = vmul.f32 %v4010, %v4012
  %v4014 = vadd.f32 %v4010, %v4013
  %vm4015 = vweird.f32 %v3876
  %vm4016 = vweird.f32 %v4010
  %vm4017 = vmor %vm4015, %vm4016
  %v4018 = vsel %vm4017, %v4010, %v4014
  %v4019 = vand.u32 2147483647, %v3876
  %vm4020 = vcmp.eq.f32.partialorder %v4019, 8.507059e+37
  %v4021 = vand.u32 %v3876, 2147483648
  %v4022 = vor.u32 1.1754944e-38, %v4021
  %v4023 = vsel %vm4020, %v4022, %v4018
  %v4024 = vmul.f32 1.0, %v4023
  %v4025 = vrcp.pop %v3877
  %v4026 = vmul.f32 %v3877, %v4025
  %v4027 = vsub.f32 1.0, %v4026
  %v4028 = vmul.f32 %v4025, %v4027
  %v4029 = vadd.f32 %v4025, %v4028
  %vm4030 = vweird.f32 %v3877
  %vm4031 = vweird.f32 %v4025
  %vm4032 = vmor %vm4030, %vm4031
  %v4033 = vsel %vm4032, %v4025, %v4029
  %v4034 = vand.u32 2147483647, %v3877
  %vm4035 = vcmp.eq.f32.partialorder %v4034, 8.507059e+37
  %v4036 = vand.u32 %v3877, 2147483648
  %v4037 = vor.u32 1.1754944e-38, %v4036
  %v4038 = vsel %vm4035, %v4037, %v4033
  %v4039 = vmul.f32 1.0, %v4038
  %v4040 = vrcp.pop %v3878
  %v4041 = vmul.f32 %v3878, %v4040
  %v4042 = vsub.f32 1.0, %v4041
  %v4043 = vmul.f32 %v4040, %v4042
  %v4044 = vadd.f32 %v4040, %v4043
  %vm4045 = vweird.f32 %v3878
  %vm4046 = vweird.f32 %v4040
  %vm4047 = vmor %vm4045, %vm4046
  %v4048 = vsel %vm4047, %v4040, %v4044
  %v4049 = vand.u32 2147483647, %v3878
  %vm4050 = vcmp.eq.f32.partialorder %v4049, 8.507059e+37
  %v4051 = vand.u32 %v3878, 2147483648
  %v4052 = vor.u32 1.1754944e-38, %v4051
  %v4053 = vsel %vm4050, %v4052, %v4048
  %v4054 = vmul.f32 1.0, %v4053
  %v4055 = vrcp.pop %v3879
  %v4056 = vmul.f32 %v3879, %v4055
  %v4057 = vsub.f32 1.0, %v4056
  %v4058 = vmul.f32 %v4055, %v4057
  %v4059 = vadd.f32 %v4055, %v4058
  %vm4060 = vweird.f32 %v3879
  %vm4061 = vweird.f32 %v4055
  %vm4062 = vmor %vm4060, %vm4061
  %v4063 = vsel %vm4062, %v4055, %v4059
  %v4064 = vand.u32 2147483647, %v3879
  %vm4065 = vcmp.eq.f32.partialorder %v4064, 8.507059e+37
  %v4066 = vand.u32 %v3879, 2147483648
  %v4067 = vor.u32 1.1754944e-38, %v4066
  %v4068 = vsel %vm4065, %v4067, %v4063
  %v4069 = vmul.f32 1.0, %v4068
  %v4070 = vrcp.pop %v3880
  %v4071 = vmul.f32 %v3880, %v4070
  %v4072 = vsub.f32 1.0, %v4071
  %v4073 = vmul.f32 %v4070, %v4072
  %v4074 = vadd.f32 %v4070, %v4073
  %vm4075 = vweird.f32 %v3880
  %vm4076 = vweird.f32 %v4070
  %vm4077 = vmor %vm4075, %vm4076
  %v4078 = vsel %vm4077, %v4070, %v4074
  %v4079 = vand.u32 2147483647, %v3880
  %vm4080 = vcmp.eq.f32.partialorder %v4079, 8.507059e+37
  %v4081 = vand.u32 %v3880, 2147483648
  %v4082 = vor.u32 1.1754944e-38, %v4081
  %v4083 = vsel %vm4080, %v4082, %v4078
  %v4084 = vmul.f32 1.0, %v4083
  %v4085 = vrcp.pop %v3881
  %v4086 = vmul.f32 %v3881, %v4085
  %v4087 = vsub.f32 1.0, %v4086
  %v4088 = vmul.f32 %v4085, %v4087
  %v4089 = vadd.f32 %v4085, %v4088
  %vm4090 = vweird.f32 %v3881
  %vm4091 = vweird.f32 %v4085
  %vm4092 = vmor %vm4090, %vm4091
  %v4093 = vsel %vm4092, %v4085, %v4089
  %v4094 = vand.u32 2147483647, %v3881
  %vm4095 = vcmp.eq.f32.partialorder %v4094, 8.507059e+37
  %v4096 = vand.u32 %v3881, 2147483648
  %v4097 = vor.u32 1.1754944e-38, %v4096
  %v4098 = vsel %vm4095, %v4097, %v4093
  %v4099 = vmul.f32 1.0, %v4098
  %v4100 = vrcp.pop %v3882
  %v4101 = vmul.f32 %v3882, %v4100
  %v4102 = vsub.f32 1.0, %v4101
  %v4103 = vmul.f32 %v4100, %v4102
  %v4104 = vadd.f32 %v4100, %v4103
  %vm4105 = vweird.f32 %v3882
  %vm4106 = vweird.f32 %v4100
  %vm4107 = vmor %vm4105, %vm4106
  %v4108 = vsel %vm4107, %v4100, %v4104
  %v4109 = vand.u32 2147483647, %v3882
  %vm4110 = vcmp.eq.f32.partialorder %v4109, 8.507059e+37
  %v4111 = vand.u32 %v3882, 2147483648
  %v4112 = vor.u32 1.1754944e-38, %v4111
  %v4113 = vsel %vm4110, %v4112, %v4108
  %v4114 = vmul.f32 1.0, %v4113
  %v4115 = vrcp.pop %v3883
  %v4116 = vmul.f32 %v3883, %v4115
  %v4117 = vsub.f32 1.0, %v4116
  %v4118 = vmul.f32 %v4115, %v4117
  %v4119 = vadd.f32 %v4115, %v4118
  %vm4120 = vweird.f32 %v3883
  %vm4121 = vweird.f32 %v4115
  %vm4122 = vmor %vm4120, %vm4121
  %v4123 = vsel %vm4122, %v4115, %v4119
  %v4124 = vand.u32 2147483647, %v3883
  %vm4125 = vcmp.eq.f32.partialorder %v4124, 8.507059e+37
  %v4126 = vand.u32 %v3883, 2147483648
  %v4127 = vor.u32 1.1754944e-38, %v4126
  %v4128 = vsel %vm4125, %v4127, %v4123
  %v4129 = vmul.f32 1.0, %v4128
  %v4130 = vrcp.pop %v3884
  %v4131 = vmul.f32 %v3884, %v4130
  %v4132 = vsub.f32 1.0, %v4131
  %v4133 = vmul.f32 %v4130, %v4132
  %v4134 = vadd.f32 %v4130, %v4133
  %vm4135 = vweird.f32 %v3884
  %vm4136 = vweird.f32 %v4130
  %vm4137 = vmor %vm4135, %vm4136
  %v4138 = vsel %vm4137, %v4130, %v4134
  %v4139 = vand.u32 2147483647, %v3884
  %vm4140 = vcmp.eq.f32.partialorder %v4139, 8.507059e+37
  %v4141 = vand.u32 %v3884, 2147483648
  %v4142 = vor.u32 1.1754944e-38, %v4141
  %v4143 = vsel %vm4140, %v4142, %v4138
  %v4144 = vmul.f32 1.0, %v4143
  %v4145 = vrcp.pop %v3885
  %v4146 = vmul.f32 %v3885, %v4145
  %v4147 = vsub.f32 1.0, %v4146
  %v4148 = vmul.f32 %v4145, %v4147
  %v4149 = vadd.f32 %v4145, %v4148
  %vm4150 = vweird.f32 %v3885
  %vm4151 = vweird.f32 %v4145
  %vm4152 = vmor %vm4150, %vm4151
  %v4153 = vsel %vm4152, %v4145, %v4149
  %v4154 = vand.u32 2147483647, %v3885
  %vm4155 = vcmp.eq.f32.partialorder %v4154, 8.507059e+37
  %v4156 = vand.u32 %v3885, 2147483648
  %v4157 = vor.u32 1.1754944e-38, %v4156
  %v4158 = vsel %vm4155, %v4157, %v4153
  %v4159 = vmul.f32 1.0, %v4158
  %v4160 = vrcp.pop %v3886
  %v4161 = vmul.f32 %v3886, %v4160
  %v4162 = vsub.f32 1.0, %v4161
  %v4163 = vmul.f32 %v4160, %v4162
  %v4164 = vadd.f32 %v4160, %v4163
  %vm4165 = vweird.f32 %v3886
  %vm4166 = vweird.f32 %v4160
  %vm4167 = vmor %vm4165, %vm4166
  %v4168 = vsel %vm4167, %v4160, %v4164
  %v4169 = vand.u32 2147483647, %v3886
  %vm4170 = vcmp.eq.f32.partialorder %v4169, 8.507059e+37
  %v4171 = vand.u32 %v3886, 2147483648
  %v4172 = vor.u32 1.1754944e-38, %v4171
  %v4173 = vsel %vm4170, %v4172, %v4168
  %v4174 = vmul.f32 1.0, %v4173
  %v4175 = vrcp.pop %v3887
  %v4176 = vmul.f32 %v3887, %v4175
  %v4177 = vsub.f32 1.0, %v4176
  %v4178 = vmul.f32 %v4175, %v4177
  %v4179 = vadd.f32 %v4175, %v4178
  %vm4180 = vweird.f32 %v3887
  %vm4181 = vweird.f32 %v4175
  %vm4182 = vmor %vm4180, %vm4181
  %v4183 = vsel %vm4182, %v4175, %v4179
  %v4184 = vand.u32 2147483647, %v3887
  %vm4185 = vcmp.eq.f32.partialorder %v4184, 8.507059e+37
  %v4186 = vand.u32 %v3887, 2147483648
  %v4187 = vor.u32 1.1754944e-38, %v4186
  %v4188 = vsel %vm4185, %v4187, %v4183
  %v4189 = vmul.f32 1.0, %v4188
  %v4190 = vrcp.pop %v3888
  %v4191 = vmul.f32 %v3888, %v4190
  %v4192 = vsub.f32 1.0, %v4191
  %v4193 = vmul.f32 %v4190, %v4192
  %v4194 = vadd.f32 %v4190, %v4193
  %vm4195 = vweird.f32 %v3888
  %vm4196 = vweird.f32 %v4190
  %vm4197 = vmor %vm4195, %vm4196
  %v4198 = vsel %vm4197, %v4190, %v4194
  %v4199 = vand.u32 2147483647, %v3888
  %vm4200 = vcmp.eq.f32.partialorder %v4199, 8.507059e+37
  %v4201 = vand.u32 %v3888, 2147483648
  %v4202 = vor.u32 1.1754944e-38, %v4201
  %v4203 = vsel %vm4200, %v4202, %v4198
  %v4204 = vmul.f32 1.0, %v4203
  %v4205 = vrcp.pop %v3889
  %v4206 = vmul.f32 %v3889, %v4205
  %v4207 = vsub.f32 1.0, %v4206
  %v4208 = vmul.f32 %v4205, %v4207
  %v4209 = vadd.f32 %v4205, %v4208
  %vm4210 = vweird.f32 %v3889
  %vm4211 = vweird.f32 %v4205
  %vm4212 = vmor %vm4210, %vm4211
  %v4213 = vsel %vm4212, %v4205, %v4209
  %v4214 = vand.u32 2147483647, %v3889
  %vm4215 = vcmp.eq.f32.partialorder %v4214, 8.507059e+37
  %v4216 = vand.u32 %v3889, 2147483648
  %v4217 = vor.u32 1.1754944e-38, %v4216
  %v4218 = vsel %vm4215, %v4217, %v4213
  %v4219 = vmul.f32 1.0, %v4218
  %v4220 = vrcp.pop %v3890
  %v4221 = vmul.f32 %v3890, %v4220
  %v4222 = vsub.f32 1.0, %v4221
  %v4223 = vmul.f32 %v4220, %v4222
  %v4224 = vadd.f32 %v4220, %v4223
  %vm4225 = vweird.f32 %v3890
  %vm4226 = vweird.f32 %v4220
  %vm4227 = vmor %vm4225, %vm4226
  %v4228 = vsel %vm4227, %v4220, %v4224
  %v4229 = vand.u32 2147483647, %v3890
  %vm4230 = vcmp.eq.f32.partialorder %v4229, 8.507059e+37
  %v4231 = vand.u32 %v3890, 2147483648
  %v4232 = vor.u32 1.1754944e-38, %v4231
  %v4233 = vsel %vm4230, %v4232, %v4228
  %v4234 = vmul.f32 1.0, %v4233
  %v4235 = vrcp.pop %v3891
  %v4236 = vmul.f32 %v3891, %v4235
  %v4237 = vsub.f32 1.0, %v4236
  %v4238 = vmul.f32 %v4235, %v4237
  %v4239 = vadd.f32 %v4235, %v4238
  %vm4240 = vweird.f32 %v3891
  %vm4241 = vweird.f32 %v4235
  %vm4242 = vmor %vm4240, %vm4241
  %v4243 = vsel %vm4242, %v4235, %v4239
  %v4244 = vand.u32 2147483647, %v3891
  %vm4245 = vcmp.eq.f32.partialorder %v4244, 8.507059e+37
  %v4246 = vand.u32 %v3891, 2147483648
  %v4247 = vor.u32 1.1754944e-38, %v4246
  %v4248 = vsel %vm4245, %v4247, %v4243
  %v4249 = vmul.f32 1.0, %v4248
  %v4250 = vrcp.pop %v3892
  %v4251 = vmul.f32 %v3892, %v4250
  %v4252 = vsub.f32 1.0, %v4251
  %v4253 = vmul.f32 %v4250, %v4252
  %v4254 = vadd.f32 %v4250, %v4253
  %vm4255 = vweird.f32 %v3892
  %vm4256 = vweird.f32 %v4250
  %vm4257 = vmor %vm4255, %vm4256
  %v4258 = vsel %vm4257, %v4250, %v4254
  %v4259 = vand.u32 2147483647, %v3892
  %vm4260 = vcmp.eq.f32.partialorder %v4259, 8.507059e+37
  %v4261 = vand.u32 %v3892, 2147483648
  %v4262 = vor.u32 1.1754944e-38, %v4261
  %v4263 = vsel %vm4260, %v4262, %v4258
  %v4264 = vmul.f32 1.0, %v4263
  %v4265 = vrcp.pop %v3893
  %v4266 = vmul.f32 %v3893, %v4265
  %v4267 = vsub.f32 1.0, %v4266
  %v4268 = vmul.f32 %v4265, %v4267
  %v4269 = vadd.f32 %v4265, %v4268
  %vm4270 = vweird.f32 %v3893
  %vm4271 = vweird.f32 %v4265
  %vm4272 = vmor %vm4270, %vm4271
  %v4273 = vsel %vm4272, %v4265, %v4269
  %v4274 = vand.u32 2147483647, %v3893
  %vm4275 = vcmp.eq.f32.partialorder %v4274, 8.507059e+37
  %v4276 = vand.u32 %v3893, 2147483648
  %v4277 = vor.u32 1.1754944e-38, %v4276
  %v4278 = vsel %vm4275, %v4277, %v4273
  %v4279 = vmul.f32 1.0, %v4278
  %v4280 = vrcp.pop %v3894
  %v4281 = vmul.f32 %v3894, %v4280
  %v4282 = vsub.f32 1.0, %v4281
  %v4283 = vmul.f32 %v4280, %v4282
  %v4284 = vadd.f32 %v4280, %v4283
  %vm4285 = vweird.f32 %v3894
  %vm4286 = vweird.f32 %v4280
  %vm4287 = vmor %vm4285, %vm4286
  %v4288 = vsel %vm4287, %v4280, %v4284
  %v4289 = vand.u32 2147483647, %v3894
  %vm4290 = vcmp.eq.f32.partialorder %v4289, 8.507059e+37
  %v4291 = vand.u32 %v3894, 2147483648
  %v4292 = vor.u32 1.1754944e-38, %v4291
  %v4293 = vsel %vm4290, %v4292, %v4288
  %v4294 = vmul.f32 1.0, %v4293
  %v4295 = vrcp.pop %v3895
  %v4296 = vmul.f32 %v3895, %v4295
  %v4297 = vsub.f32 1.0, %v4296
  %v4298 = vmul.f32 %v4295, %v4297
  %v4299 = vadd.f32 %v4295, %v4298
  %vm4300 = vweird.f32 %v3895
  %vm4301 = vweird.f32 %v4295
  %vm4302 = vmor %vm4300, %vm4301
  %v4303 = vsel %vm4302, %v4295, %v4299
  %v4304 = vand.u32 2147483647, %v3895
  %vm4305 = vcmp.eq.f32.partialorder %v4304, 8.507059e+37
  %v4306 = vand.u32 %v3895, 2147483648
  %v4307 = vor.u32 1.1754944e-38, %v4306
  %v4308 = vsel %vm4305, %v4307, %v4303
  %v4309 = vmul.f32 1.0, %v4308
  %v4310 = vrcp.pop %v3896
  %v4311 = vmul.f32 %v3896, %v4310
  %v4312 = vsub.f32 1.0, %v4311
  %v4313 = vmul.f32 %v4310, %v4312
  %v4314 = vadd.f32 %v4310, %v4313
  %vm4315 = vweird.f32 %v3896
  %vm4316 = vweird.f32 %v4310
  %vm4317 = vmor %vm4315, %vm4316
  %v4318 = vsel %vm4317, %v4310, %v4314
  %v4319 = vand.u32 2147483647, %v3896
  %vm4320 = vcmp.eq.f32.partialorder %v4319, 8.507059e+37
  %v4321 = vand.u32 %v3896, 2147483648
  %v4322 = vor.u32 1.1754944e-38, %v4321
  %v4323 = vsel %vm4320, %v4322, %v4318
  %v4324 = vmul.f32 1.0, %v4323
  %v4325 = vrcp.pop %v3897
  %v4326 = vmul.f32 %v3897, %v4325
  %v4327 = vsub.f32 1.0, %v4326
  %v4328 = vmul.f32 %v4325, %v4327
  %v4329 = vadd.f32 %v4325, %v4328
  %vm4330 = vweird.f32 %v3897
  %vm4331 = vweird.f32 %v4325
  %vm4332 = vmor %vm4330, %vm4331
  %v4333 = vsel %vm4332, %v4325, %v4329
  %v4334 = vand.u32 2147483647, %v3897
  %vm4335 = vcmp.eq.f32.partialorder %v4334, 8.507059e+37
  %v4336 = vand.u32 %v3897, 2147483648
  %v4337 = vor.u32 1.1754944e-38, %v4336
  %v4338 = vsel %vm4335, %v4337, %v4333
  %v4339 = vmul.f32 1.0, %v4338
  %v4340 = vrcp.pop %v3898
  %v4341 = vmul.f32 %v3898, %v4340
  %v4342 = vsub.f32 1.0, %v4341
  %v4343 = vmul.f32 %v4340, %v4342
  %v4344 = vadd.f32 %v4340, %v4343
  %vm4345 = vweird.f32 %v3898
  %vm4346 = vweird.f32 %v4340
  %vm4347 = vmor %vm4345, %vm4346
  %v4348 = vsel %vm4347, %v4340, %v4344
  %v4349 = vand.u32 2147483647, %v3898
  %vm4350 = vcmp.eq.f32.partialorder %v4349, 8.507059e+37
  %v4351 = vand.u32 %v3898, 2147483648
  %v4352 = vor.u32 1.1754944e-38, %v4351
  %v4353 = vsel %vm4350, %v4352, %v4348
  %v4354 = vmul.f32 1.0, %v4353
  %v4355 = vrcp.pop %v3899
  %v4356 = vmul.f32 %v3899, %v4355
  %v4357 = vsub.f32 1.0, %v4356
  %v4358 = vmul.f32 %v4355, %v4357
  %v4359 = vadd.f32 %v4355, %v4358
  %vm4360 = vweird.f32 %v3899
  %vm4361 = vweird.f32 %v4355
  %vm4362 = vmor %vm4360, %vm4361
  %v4363 = vsel %vm4362, %v4355, %v4359
  %v4364 = vand.u32 2147483647, %v3899
  %vm4365 = vcmp.eq.f32.partialorder %v4364, 8.507059e+37
  %v4366 = vand.u32 %v3899, 2147483648
  %v4367 = vor.u32 1.1754944e-38, %v4366
  %v4368 = vsel %vm4365, %v4367, %v4363
  %v4369 = vmul.f32 1.0, %v4368
  %v4370 = vrcp.pop %v3900
  %v4371 = vmul.f32 %v3900, %v4370
  %v4372 = vsub.f32 1.0, %v4371
  %v4373 = vmul.f32 %v4370, %v4372
  %v4374 = vadd.f32 %v4370, %v4373
  %vm4375 = vweird.f32 %v3900
  %vm4376 = vweird.f32 %v4370
  %vm4377 = vmor %vm4375, %vm4376
  %v4378 = vsel %vm4377, %v4370, %v4374
  %v4379 = vand.u32 2147483647, %v3900
  %vm4380 = vcmp.eq.f32.partialorder %v4379, 8.507059e+37
  %v4381 = vand.u32 %v3900, 2147483648
  %v4382 = vor.u32 1.1754944e-38, %v4381
  %v4383 = vsel %vm4380, %v4382, %v4378
  %v4384 = vmul.f32 1.0, %v4383
  %v4385 = vrcp.pop %v3901
  %v4386 = vmul.f32 %v3901, %v4385
  %v4387 = vsub.f32 1.0, %v4386
  %v4388 = vmul.f32 %v4385, %v4387
  %v4389 = vadd.f32 %v4385, %v4388
  %vm4390 = vweird.f32 %v3901
  %vm4391 = vweird.f32 %v4385
  %vm4392 = vmor %vm4390, %vm4391
  %v4393 = vsel %vm4392, %v4385, %v4389
  %v4394 = vand.u32 2147483647, %v3901
  %vm4395 = vcmp.eq.f32.partialorder %v4394, 8.507059e+37
  %v4396 = vand.u32 %v3901, 2147483648
  %v4397 = vor.u32 1.1754944e-38, %v4396
  %v4398 = vsel %vm4395, %v4397, %v4393
  %v4399 = vmul.f32 1.0, %v4398
  %v4400 = vrcp.pop %v3902
  %v4401 = vmul.f32 %v3902, %v4400
  %v4402 = vsub.f32 1.0, %v4401
  %v4403 = vmul.f32 %v4400, %v4402
  %v4404 = vadd.f32 %v4400, %v4403
  %vm4405 = vweird.f32 %v3902
  %vm4406 = vweird.f32 %v4400
  %vm4407 = vmor %vm4405, %vm4406
  %v4408 = vsel %vm4407, %v4400, %v4404
  %v4409 = vand.u32 2147483647, %v3902
  %vm4410 = vcmp.eq.f32.partialorder %v4409, 8.507059e+37
  %v4411 = vand.u32 %v3902, 2147483648
  %v4412 = vor.u32 1.1754944e-38, %v4411
  %v4413 = vsel %vm4410, %v4412, %v4408
  %v4414 = vmul.f32 1.0, %v4413
  %v4415 = vrcp.pop %v3903
  %v4416 = vmul.f32 %v3903, %v4415
  %v4417 = vsub.f32 1.0, %v4416
  %v4418 = vmul.f32 %v4415, %v4417
  %v4419 = vadd.f32 %v4415, %v4418
  %vm4420 = vweird.f32 %v3903
  %vm4421 = vweird.f32 %v4415
  %vm4422 = vmor %vm4420, %vm4421
  %v4423 = vsel %vm4422, %v4415, %v4419
  %v4424 = vand.u32 2147483647, %v3903
  %vm4425 = vcmp.eq.f32.partialorder %v4424, 8.507059e+37
  %v4426 = vand.u32 %v3903, 2147483648
  %v4427 = vor.u32 1.1754944e-38, %v4426
  %v4428 = vsel %vm4425, %v4427, %v4423
  %v4429 = vmul.f32 1.0, %v4428
  %v4430 = vrcp.pop %v3904
  %v4431 = vmul.f32 %v3904, %v4430
  %v4432 = vsub.f32 1.0, %v4431
  %v4433 = vmul.f32 %v4430, %v4432
  %v4434 = vadd.f32 %v4430, %v4433
  %vm4435 = vweird.f32 %v3904
  %vm4436 = vweird.f32 %v4430
  %vm4437 = vmor %vm4435, %vm4436
  %v4438 = vsel %vm4437, %v4430, %v4434
  %v4439 = vand.u32 2147483647, %v3904
  %vm4440 = vcmp.eq.f32.partialorder %v4439, 8.507059e+37
  %v4441 = vand.u32 %v3904, 2147483648
  %v4442 = vor.u32 1.1754944e-38, %v4441
  %v4443 = vsel %vm4440, %v4442, %v4438
  %v4444 = vmul.f32 1.0, %v4443
  %v4445 = vrcp.pop %v3905
  %v4446 = vmul.f32 %v3905, %v4445
  %v4447 = vsub.f32 1.0, %v4446
  %v4448 = vmul.f32 %v4445, %v4447
  %v4449 = vadd.f32 %v4445, %v4448
  %vm4450 = vweird.f32 %v3905
  %vm4451 = vweird.f32 %v4445
  %vm4452 = vmor %vm4450, %vm4451
  %v4453 = vsel %vm4452, %v4445, %v4449
  %v4454 = vand.u32 2147483647, %v3905
  %vm4455 = vcmp.eq.f32.partialorder %v4454, 8.507059e+37
  %v4456 = vand.u32 %v3905, 2147483648
  %v4457 = vor.u32 1.1754944e-38, %v4456
  %v4458 = vsel %vm4455, %v4457, %v4453
  %v4459 = vmul.f32 1.0, %v4458
  %v4460 = vrcp.pop %v3906
  %v4461 = vmul.f32 %v3906, %v4460
  %v4462 = vsub.f32 1.0, %v4461
  %v4463 = vmul.f32 %v4460, %v4462
  %v4464 = vadd.f32 %v4460, %v4463
  %vm4465 = vweird.f32 %v3906
  %vm4466 = vweird.f32 %v4460
  %vm4467 = vmor %vm4465, %vm4466
  %v4468 = vsel %vm4467, %v4460, %v4464
  %v4469 = vand.u32 2147483647, %v3906
  %vm4470 = vcmp.eq.f32.partialorder %v4469, 8.507059e+37
  %v4471 = vand.u32 %v3906, 2147483648
  %v4472 = vor.u32 1.1754944e-38, %v4471
  %v4473 = vsel %vm4470, %v4472, %v4468
  %v4474 = vmul.f32 1.0, %v4473
  %v4475 = vrcp.pop %v3907
  %v4476 = vmul.f32 %v3907, %v4475
  %v4477 = vsub.f32 1.0, %v4476
  %v4478 = vmul.f32 %v4475, %v4477
  %v4479 = vadd.f32 %v4475, %v4478
  %vm4480 = vweird.f32 %v3907
  %vm4481 = vweird.f32 %v4475
  %vm4482 = vmor %vm4480, %vm4481
  %v4483 = vsel %vm4482, %v4475, %v4479
  %v4484 = vand.u32 2147483647, %v3907
  %vm4485 = vcmp.eq.f32.partialorder %v4484, 8.507059e+37
  %v4486 = vand.u32 %v3907, 2147483648
  %v4487 = vor.u32 1.1754944e-38, %v4486
  %v4488 = vsel %vm4485, %v4487, %v4483
  %v4489 = vmul.f32 1.0, %v4488
  %v4490 = vrcp.pop %v3908
  %v4491 = vmul.f32 %v3908, %v4490
  %v4492 = vsub.f32 1.0, %v4491
  %v4493 = vmul.f32 %v4490, %v4492
  %v4494 = vadd.f32 %v4490, %v4493
  %vm4495 = vweird.f32 %v3908
  %vm4496 = vweird.f32 %v4490
  %vm4497 = vmor %vm4495, %vm4496
  %v4498 = vsel %vm4497, %v4490, %v4494
  %v4499 = vand.u32 2147483647, %v3908
  %vm4500 = vcmp.eq.f32.partialorder %v4499, 8.507059e+37
  %v4501 = vand.u32 %v3908, 2147483648
  %v4502 = vor.u32 1.1754944e-38, %v4501
  %v4503 = vsel %vm4500, %v4502, %v4498
  %v4504 = vmul.f32 1.0, %v4503
  %v4505 = vrcp.pop %v3909
  %v4506 = vmul.f32 %v3909, %v4505
  %v4507 = vsub.f32 1.0, %v4506
  %v4508 = vmul.f32 %v4505, %v4507
  %v4509 = vadd.f32 %v4505, %v4508
  %vm4510 = vweird.f32 %v3909
  %vm4511 = vweird.f32 %v4505
  %vm4512 = vmor %vm4510, %vm4511
  %v4513 = vsel %vm4512, %v4505, %v4509
  %v4514 = vand.u32 2147483647, %v3909
  %vm4515 = vcmp.eq.f32.partialorder %v4514, 8.507059e+37
  %v4516 = vand.u32 %v3909, 2147483648
  %v4517 = vor.u32 1.1754944e-38, %v4516
  %v4518 = vsel %vm4515, %v4517, %v4513
  %v4519 = vmul.f32 1.0, %v4518
  %v4520 = vrcp.pop %v3910
  %v4521 = vmul.f32 %v3910, %v4520
  %v4522 = vsub.f32 1.0, %v4521
  %v4523 = vmul.f32 %v4520, %v4522
  %v4524 = vadd.f32 %v4520, %v4523
  %vm4525 = vweird.f32 %v3910
  %vm4526 = vweird.f32 %v4520
  %vm4527 = vmor %vm4525, %vm4526
  %v4528 = vsel %vm4527, %v4520, %v4524
  %v4529 = vand.u32 2147483647, %v3910
  %vm4530 = vcmp.eq.f32.partialorder %v4529, 8.507059e+37
  %v4531 = vand.u32 %v3910, 2147483648
  %v4532 = vor.u32 1.1754944e-38, %v4531
  %v4533 = vsel %vm4530, %v4532, %v4528
  %v4534 = vmul.f32 1.0, %v4533
  %v4535 = vrcp.pop %v3911
  %v4536 = vmul.f32 %v3911, %v4535
  %v4537 = vsub.f32 1.0, %v4536
  %v4538 = vmul.f32 %v4535, %v4537
  %v4539 = vadd.f32 %v4535, %v4538
  %vm4540 = vweird.f32 %v3911
  %vm4541 = vweird.f32 %v4535
  %vm4542 = vmor %vm4540, %vm4541
  %v4543 = vsel %vm4542, %v4535, %v4539
  %v4544 = vand.u32 2147483647, %v3911
  %vm4545 = vcmp.eq.f32.partialorder %v4544, 8.507059e+37
  %v4546 = vand.u32 %v3911, 2147483648
  %v4547 = vor.u32 1.1754944e-38, %v4546
  %v4548 = vsel %vm4545, %v4547, %v4543
  %v4549 = vmul.f32 1.0, %v4548
  %v4550 = vrcp.pop %v3912
  %v4551 = vmul.f32 %v3912, %v4550
  %v4552 = vsub.f32 1.0, %v4551
  %v4553 = vmul.f32 %v4550, %v4552
  %v4554 = vadd.f32 %v4550, %v4553
  %vm4555 = vweird.f32 %v3912
  %vm4556 = vweird.f32 %v4550
  %vm4557 = vmor %vm4555, %vm4556
  %v4558 = vsel %vm4557, %v4550, %v4554
  %v4559 = vand.u32 2147483647, %v3912
  %vm4560 = vcmp.eq.f32.partialorder %v4559, 8.507059e+37
  %v4561 = vand.u32 %v3912, 2147483648
  %v4562 = vor.u32 1.1754944e-38, %v4561
  %v4563 = vsel %vm4560, %v4562, %v4558
  %v4564 = vmul.f32 1.0, %v4563
  %v4565 = vrcp.pop %v3913
  %v4566 = vmul.f32 %v3913, %v4565
  %v4567 = vsub.f32 1.0, %v4566
  %v4568 = vmul.f32 %v4565, %v4567
  %v4569 = vadd.f32 %v4565, %v4568
  %vm4570 = vweird.f32 %v3913
  %vm4571 = vweird.f32 %v4565
  %vm4572 = vmor %vm4570, %vm4571
  %v4573 = vsel %vm4572, %v4565, %v4569
  %v4574 = vand.u32 2147483647, %v3913
  %vm4575 = vcmp.eq.f32.partialorder %v4574, 8.507059e+37
  %v4576 = vand.u32 %v3913, 2147483648
  %v4577 = vor.u32 1.1754944e-38, %v4576
  %v4578 = vsel %vm4575, %v4577, %v4573
  %v4579 = vmul.f32 1.0, %v4578
  %v4580 = vrcp.pop %v3914
  %v4581 = vmul.f32 %v3914, %v4580
  %v4582 = vsub.f32 1.0, %v4581
  %v4583 = vmul.f32 %v4580, %v4582
  %v4584 = vadd.f32 %v4580, %v4583
  %vm4585 = vweird.f32 %v3914
  %vm4586 = vweird.f32 %v4580
  %vm4587 = vmor %vm4585, %vm4586
  %v4588 = vsel %vm4587, %v4580, %v4584
  %v4589 = vand.u32 2147483647, %v3914
  %vm4590 = vcmp.eq.f32.partialorder %v4589, 8.507059e+37
  %v4591 = vand.u32 %v3914, 2147483648
  %v4592 = vor.u32 1.1754944e-38, %v4591
  %v4593 = vsel %vm4590, %v4592, %v4588
  %v4594 = vmul.f32 1.0, %v4593
  %v4595 = vrcp.pop %v3915
  %v4596 = vmul.f32 %v3915, %v4595
  %v4597 = vsub.f32 1.0, %v4596
  %v4598 = vmul.f32 %v4595, %v4597
  %v4599 = vadd.f32 %v4595, %v4598
  %vm4600 = vweird.f32 %v3915
  %vm4601 = vweird.f32 %v4595
  %vm4602 = vmor %vm4600, %vm4601
  %v4603 = vsel %vm4602, %v4595, %v4599
  %v4604 = vand.u32 2147483647, %v3915
  %vm4605 = vcmp.eq.f32.partialorder %v4604, 8.507059e+37
  %v4606 = vand.u32 %v3915, 2147483648
  %v4607 = vor.u32 1.1754944e-38, %v4606
  %v4608 = vsel %vm4605, %v4607, %v4603
  %v4609 = vmul.f32 1.0, %v4608
  %v4610 = vrcp.pop %v3916
  %v4611 = vmul.f32 %v3916, %v4610
  %v4612 = vsub.f32 1.0, %v4611
  %v4613 = vmul.f32 %v4610, %v4612
  %v4614 = vadd.f32 %v4610, %v4613
  %vm4615 = vweird.f32 %v3916
  %vm4616 = vweird.f32 %v4610
  %vm4617 = vmor %vm4615, %vm4616
  %v4618 = vsel %vm4617, %v4610, %v4614
  %v4619 = vand.u32 2147483647, %v3916
  %vm4620 = vcmp.eq.f32.partialorder %v4619, 8.507059e+37
  %v4621 = vand.u32 %v3916, 2147483648
  %v4622 = vor.u32 1.1754944e-38, %v4621
  %v4623 = vsel %vm4620, %v4622, %v4618
  %v4624 = vmul.f32 1.0, %v4623
  %v4625 = vrcp.pop %v3917
  %v4626 = vmul.f32 %v3917, %v4625
  %v4627 = vsub.f32 1.0, %v4626
  %v4628 = vmul.f32 %v4625, %v4627
  %v4629 = vadd.f32 %v4625, %v4628
  %vm4630 = vweird.f32 %v3917
  %vm4631 = vweird.f32 %v4625
  %vm4632 = vmor %vm4630, %vm4631
  %v4633 = vsel %vm4632, %v4625, %v4629
  %v4634 = vand.u32 2147483647, %v3917
  %vm4635 = vcmp.eq.f32.partialorder %v4634, 8.507059e+37
  %v4636 = vand.u32 %v3917, 2147483648
  %v4637 = vor.u32 1.1754944e-38, %v4636
  %v4638 = vsel %vm4635, %v4637, %v4633
  %v4639 = vmul.f32 1.0, %v4638
  %v4640 = vrcp.pop %v3918
  %v4641 = vmul.f32 %v3918, %v4640
  %v4642 = vsub.f32 1.0, %v4641
  %v4643 = vmul.f32 %v4640, %v4642
  %v4644 = vadd.f32 %v4640, %v4643
  %vm4645 = vweird.f32 %v3918
  %vm4646 = vweird.f32 %v4640
  %vm4647 = vmor %vm4645, %vm4646
  %v4648 = vsel %vm4647, %v4640, %v4644
  %v4649 = vand.u32 2147483647, %v3918
  %vm4650 = vcmp.eq.f32.partialorder %v4649, 8.507059e+37
  %v4651 = vand.u32 %v3918, 2147483648
  %v4652 = vor.u32 1.1754944e-38, %v4651
  %v4653 = vsel %vm4650, %v4652, %v4648
  %v4654 = vmul.f32 1.0, %v4653
  %v4655 = vrcp.pop %v3919
  %v4656 = vmul.f32 %v3919, %v4655
  %v4657 = vsub.f32 1.0, %v4656
  %v4658 = vmul.f32 %v4655, %v4657
  %v4659 = vadd.f32 %v4655, %v4658
  %vm4660 = vweird.f32 %v3919
  %vm4661 = vweird.f32 %v4655
  %vm4662 = vmor %vm4660, %vm4661
  %v4663 = vsel %vm4662, %v4655, %v4659
  %v4664 = vand.u32 2147483647, %v3919
  %vm4665 = vcmp.eq.f32.partialorder %v4664, 8.507059e+37
  %v4666 = vand.u32 %v3919, 2147483648
  %v4667 = vor.u32 1.1754944e-38, %v4666
  %v4668 = vsel %vm4665, %v4667, %v4663
  %v4669 = vmul.f32 1.0, %v4668
  %v4670 = vrcp.pop %v3920
  %v4671 = vmul.f32 %v3920, %v4670
  %v4672 = vsub.f32 1.0, %v4671
  %v4673 = vmul.f32 %v4670, %v4672
  %v4674 = vadd.f32 %v4670, %v4673
  %vm4675 = vweird.f32 %v3920
  %vm4676 = vweird.f32 %v4670
  %vm4677 = vmor %vm4675, %vm4676
  %v4678 = vsel %vm4677, %v4670, %v4674
  %v4679 = vand.u32 2147483647, %v3920
  %vm4680 = vcmp.eq.f32.partialorder %v4679, 8.507059e+37
  %v4681 = vand.u32 %v3920, 2147483648
  %v4682 = vor.u32 1.1754944e-38, %v4681
  %v4683 = vsel %vm4680, %v4682, %v4678
  %v4684 = vmul.f32 1.0, %v4683
  %v4685 = vrcp.pop %v3921
  %v4686 = vmul.f32 %v3921, %v4685
  %v4687 = vsub.f32 1.0, %v4686
  %v4688 = vmul.f32 %v4685, %v4687
  %v4689 = vadd.f32 %v4685, %v4688
  %vm4690 = vweird.f32 %v3921
  %vm4691 = vweird.f32 %v4685
  %vm4692 = vmor %vm4690, %vm4691
  %v4693 = vsel %vm4692, %v4685, %v4689
  %v4694 = vand.u32 2147483647, %v3921
  %vm4695 = vcmp.eq.f32.partialorder %v4694, 8.507059e+37
  %v4696 = vand.u32 %v3921, 2147483648
  %v4697 = vor.u32 1.1754944e-38, %v4696
  %v4698 = vsel %vm4695, %v4697, %v4693
  %v4699 = vmul.f32 1.0, %v4698
  %v4700 = vrcp.pop %v3922
  %v4701 = vmul.f32 %v3922, %v4700
  %v4702 = vsub.f32 1.0, %v4701
  %v4703 = vmul.f32 %v4700, %v4702
  %v4704 = vadd.f32 %v4700, %v4703
  %vm4705 = vweird.f32 %v3922
  %vm4706 = vweird.f32 %v4700
  %vm4707 = vmor %vm4705, %vm4706
  %v4708 = vsel %vm4707, %v4700, %v4704
  %v4709 = vand.u32 2147483647, %v3922
  %vm4710 = vcmp.eq.f32.partialorder %v4709, 8.507059e+37
  %v4711 = vand.u32 %v3922, 2147483648
  %v4712 = vor.u32 1.1754944e-38, %v4711
  %v4713 = vsel %vm4710, %v4712, %v4708
  %v4714 = vmul.f32 1.0, %v4713
  %v4715 = vrcp.pop %v3923
  %v4716 = vmul.f32 %v3923, %v4715
  %v4717 = vsub.f32 1.0, %v4716
  %v4718 = vmul.f32 %v4715, %v4717
  %v4719 = vadd.f32 %v4715, %v4718
  %vm4720 = vweird.f32 %v3923
  %vm4721 = vweird.f32 %v4715
  %vm4722 = vmor %vm4720, %vm4721
  %v4723 = vsel %vm4722, %v4715, %v4719
  %v4724 = vand.u32 2147483647, %v3923
  %vm4725 = vcmp.eq.f32.partialorder %v4724, 8.507059e+37
  %v4726 = vand.u32 %v3923, 2147483648
  %v4727 = vor.u32 1.1754944e-38, %v4726
  %v4728 = vsel %vm4725, %v4727, %v4723
  %v4729 = vmul.f32 1.0, %v4728
  %v4730 = vrcp.pop %v3924
  %v4731 = vmul.f32 %v3924, %v4730
  %v4732 = vsub.f32 1.0, %v4731
  %v4733 = vmul.f32 %v4730, %v4732
  %v4734 = vadd.f32 %v4730, %v4733
  %vm4735 = vweird.f32 %v3924
  %vm4736 = vweird.f32 %v4730
  %vm4737 = vmor %vm4735, %vm4736
  %v4738 = vsel %vm4737, %v4730, %v4734
  %v4739 = vand.u32 2147483647, %v3924
  %vm4740 = vcmp.eq.f32.partialorder %v4739, 8.507059e+37
  %v4741 = vand.u32 %v3924, 2147483648
  %v4742 = vor.u32 1.1754944e-38, %v4741
  %v4743 = vsel %vm4740, %v4742, %v4738
  %v4744 = vmul.f32 1.0, %v4743
  %v4745 = vrcp.pop %v3925
  %v4746 = vmul.f32 %v3925, %v4745
  %v4747 = vsub.f32 1.0, %v4746
  %v4748 = vmul.f32 %v4745, %v4747
  %v4749 = vadd.f32 %v4745, %v4748
  %vm4750 = vweird.f32 %v3925
  %vm4751 = vweird.f32 %v4745
  %vm4752 = vmor %vm4750, %vm4751
  %v4753 = vsel %vm4752, %v4745, %v4749
  %v4754 = vand.u32 2147483647, %v3925
  %vm4755 = vcmp.eq.f32.partialorder %v4754, 8.507059e+37
  %v4756 = vand.u32 %v3925, 2147483648
  %v4757 = vor.u32 1.1754944e-38, %v4756
  %v4758 = vsel %vm4755, %v4757, %v4753
  %v4759 = vmul.f32 1.0, %v4758
  %v4760 = vrcp.pop %v3926
  %v4761 = vmul.f32 %v3926, %v4760
  %v4762 = vsub.f32 1.0, %v4761
  %v4763 = vmul.f32 %v4760, %v4762
  %v4764 = vadd.f32 %v4760, %v4763
  %vm4765 = vweird.f32 %v3926
  %vm4766 = vweird.f32 %v4760
  %vm4767 = vmor %vm4765, %vm4766
  %v4768 = vsel %vm4767, %v4760, %v4764
  %v4769 = vand.u32 2147483647, %v3926
  %vm4770 = vcmp.eq.f32.partialorder %v4769, 8.507059e+37
  %v4771 = vand.u32 %v3926, 2147483648
  %v4772 = vor.u32 1.1754944e-38, %v4771
  %v4773 = vsel %vm4770, %v4772, %v4768
  %v4774 = vmul.f32 1.0, %v4773
  %v4775 = vrcp.pop %v3927
  %v4776 = vmul.f32 %v3927, %v4775
  %v4777 = vsub.f32 1.0, %v4776
  %v4778 = vmul.f32 %v4775, %v4777
  %v4779 = vadd.f32 %v4775, %v4778
  %vm4780 = vweird.f32 %v3927
  %vm4781 = vweird.f32 %v4775
  %vm4782 = vmor %vm4780, %vm4781
  %v4783 = vsel %vm4782, %v4775, %v4779
  %v4784 = vand.u32 2147483647, %v3927
  %vm4785 = vcmp.eq.f32.partialorder %v4784, 8.507059e+37
  %v4786 = vand.u32 %v3927, 2147483648
  %v4787 = vor.u32 1.1754944e-38, %v4786
  %v4788 = vsel %vm4785, %v4787, %v4783
  %v4789 = vmul.f32 1.0, %v4788
  %v4790 = vrcp.pop %v3928
  %v4791 = vmul.f32 %v3928, %v4790
  %v4792 = vsub.f32 1.0, %v4791
  %v4793 = vmul.f32 %v4790, %v4792
  %v4794 = vadd.f32 %v4790, %v4793
  %vm4795 = vweird.f32 %v3928
  %vm4796 = vweird.f32 %v4790
  %vm4797 = vmor %vm4795, %vm4796
  %v4798 = vsel %vm4797, %v4790, %v4794
  %v4799 = vand.u32 2147483647, %v3928
  %vm4800 = vcmp.eq.f32.partialorder %v4799, 8.507059e+37
  %v4801 = vand.u32 %v3928, 2147483648
  %v4802 = vor.u32 1.1754944e-38, %v4801
  %v4803 = vsel %vm4800, %v4802, %v4798
  %v4804 = vmul.f32 1.0, %v4803
  %v4805 = vrcp.pop %v3929
  %v4806 = vmul.f32 %v3929, %v4805
  %v4807 = vsub.f32 1.0, %v4806
  %v4808 = vmul.f32 %v4805, %v4807
  %v4809 = vadd.f32 %v4805, %v4808
  %vm4810 = vweird.f32 %v3929
  %vm4811 = vweird.f32 %v4805
  %vm4812 = vmor %vm4810, %vm4811
  %v4813 = vsel %vm4812, %v4805, %v4809
  %v4814 = vand.u32 2147483647, %v3929
  %vm4815 = vcmp.eq.f32.partialorder %v4814, 8.507059e+37
  %v4816 = vand.u32 %v3929, 2147483648
  %v4817 = vor.u32 1.1754944e-38, %v4816
  %v4818 = vsel %vm4815, %v4817, %v4813
  %v4819 = vmul.f32 1.0, %v4818
  %v4820 = vrcp.pop %v3930
  %v4821 = vmul.f32 %v3930, %v4820
  %v4822 = vsub.f32 1.0, %v4821
  %v4823 = vmul.f32 %v4820, %v4822
  %v4824 = vadd.f32 %v4820, %v4823
  %vm4825 = vweird.f32 %v3930
  %vm4826 = vweird.f32 %v4820
  %vm4827 = vmor %vm4825, %vm4826
  %v4828 = vsel %vm4827, %v4820, %v4824
  %v4829 = vand.u32 2147483647, %v3930
  %vm4830 = vcmp.eq.f32.partialorder %v4829, 8.507059e+37
  %v4831 = vand.u32 %v3930, 2147483648
  %v4832 = vor.u32 1.1754944e-38, %v4831
  %v4833 = vsel %vm4830, %v4832, %v4828
  %v4834 = vmul.f32 1.0, %v4833
  %v4835 = vrcp.pop %v3931
  %v4836 = vmul.f32 %v3931, %v4835
  %v4837 = vsub.f32 1.0, %v4836
  %v4838 = vmul.f32 %v4835, %v4837
  %v4839 = vadd.f32 %v4835, %v4838
  %vm4840 = vweird.f32 %v3931
  %vm4841 = vweird.f32 %v4835
  %vm4842 = vmor %vm4840, %vm4841
  %v4843 = vsel %vm4842, %v4835, %v4839
  %v4844 = vand.u32 2147483647, %v3931
  %vm4845 = vcmp.eq.f32.partialorder %v4844, 8.507059e+37
  %v4846 = vand.u32 %v3931, 2147483648
  %v4847 = vor.u32 1.1754944e-38, %v4846
  %v4848 = vsel %vm4845, %v4847, %v4843
  %v4849 = vmul.f32 1.0, %v4848
  %v4850 = vrcp.pop %v3932
  %v4851 = vmul.f32 %v3932, %v4850
  %v4852 = vsub.f32 1.0, %v4851
  %v4853 = vmul.f32 %v4850, %v4852
  %v4854 = vadd.f32 %v4850, %v4853
  %vm4855 = vweird.f32 %v3932
  %vm4856 = vweird.f32 %v4850
  %vm4857 = vmor %vm4855, %vm4856
  %v4858 = vsel %vm4857, %v4850, %v4854
  %v4859 = vand.u32 2147483647, %v3932
  %vm4860 = vcmp.eq.f32.partialorder %v4859, 8.507059e+37
  %v4861 = vand.u32 %v3932, 2147483648
  %v4862 = vor.u32 1.1754944e-38, %v4861
  %v4863 = vsel %vm4860, %v4862, %v4858
  %v4864 = vmul.f32 1.0, %v4863
  %v4865 = vrcp.pop %v3933
  %v4866 = vmul.f32 %v3933, %v4865
  %v4867 = vsub.f32 1.0, %v4866
  %v4868 = vmul.f32 %v4865, %v4867
  %v4869 = vadd.f32 %v4865, %v4868
  %vm4870 = vweird.f32 %v3933
  %vm4871 = vweird.f32 %v4865
  %vm4872 = vmor %vm4870, %vm4871
  %v4873 = vsel %vm4872, %v4865, %v4869
  %v4874 = vand.u32 2147483647, %v3933
  %vm4875 = vcmp.eq.f32.partialorder %v4874, 8.507059e+37
  %v4876 = vand.u32 %v3933, 2147483648
  %v4877 = vor.u32 1.1754944e-38, %v4876
  %v4878 = vsel %vm4875, %v4877, %v4873
  %v4879 = vmul.f32 1.0, %v4878
  %v4880 = vrcp.pop %v3934
  %v4881 = vmul.f32 %v3934, %v4880
  %v4882 = vsub.f32 1.0, %v4881
  %v4883 = vmul.f32 %v4880, %v4882
  %v4884 = vadd.f32 %v4880, %v4883
  %vm4885 = vweird.f32 %v3934
  %vm4886 = vweird.f32 %v4880
  %vm4887 = vmor %vm4885, %vm4886
  %v4888 = vsel %vm4887, %v4880, %v4884
  %v4889 = vand.u32 2147483647, %v3934
  %vm4890 = vcmp.eq.f32.partialorder %v4889, 8.507059e+37
  %v4891 = vand.u32 %v3934, 2147483648
  %v4892 = vor.u32 1.1754944e-38, %v4891
  %v4893 = vsel %vm4890, %v4892, %v4888
  %v4894 = vmul.f32 1.0, %v4893
  %v4895 = vpack.c.bf16 %v1622, %v1622
  %v4896 = vpack.c.bf16 %v1637, %v1637
  %v4897 = vpack.c.bf16 %v1652, %v1652
  %v4898 = vpack.c.bf16 %v1667, %v1667
  %v4899 = vpack.c.bf16 %v1682, %v1682
  %v4900 = vpack.c.bf16 %v1697, %v1697
  %v4901 = vpack.c.bf16 %v1712, %v1712
  %v4902 = vpack.c.bf16 %v1727, %v1727
  %v4903 = vpack.c.bf16 %v1742, %v1742
  %v4904 = vpack.c.bf16 %v1757, %v1757
  %v4905 = vpack.c.bf16 %v1772, %v1772
  %v4906 = vpack.c.bf16 %v1787, %v1787
  %v4907 = vpack.c.bf16 %v1802, %v1802
  %v4908 = vpack.c.bf16 %v1817, %v1817
  %v4909 = vpack.c.bf16 %v1832, %v1832
  %v4910 = vpack.c.bf16 %v1847, %v1847
  %v4911 = vpack.c.bf16 %v1862, %v1862
  %v4912 = vpack.c.bf16 %v1877, %v1877
  %v4913 = vpack.c.bf16 %v1892, %v1892
  %v4914 = vpack.c.bf16 %v1907, %v1907
  %v4915 = vpack.c.bf16 %v1922, %v1922
  %v4916 = vpack.c.bf16 %v1937, %v1937
  %v4917 = vpack.c.bf16 %v1952, %v1952
  %v4918 = vpack.c.bf16 %v1967, %v1967
  %v4919 = vpack.c.bf16 %v1982, %v1982
  %v4920 = vpack.c.bf16 %v1997, %v1997
  %v4921 = vpack.c.bf16 %v2012, %v2012
  %v4922 = vpack.c.bf16 %v2027, %v2027
  %v4923 = vpack.c.bf16 %v2042, %v2042
  %v4924 = vpack.c.bf16 %v2057, %v2057
  %v4925 = vpack.c.bf16 %v2072, %v2072
  %v4926 = vpack.c.bf16 %v2087, %v2087
  %v4927 = vpack.c.bf16 %v2102, %v2102
  %v4928 = vpack.c.bf16 %v2117, %v2117
  %v4929 = vpack.c.bf16 %v2132, %v2132
  %v4930 = vpack.c.bf16 %v2147, %v2147
  %v4931 = vpack.c.bf16 %v2162, %v2162
  %v4932 = vpack.c.bf16 %v2177, %v2177
  %v4933 = vpack.c.bf16 %v2192, %v2192
  %v4934 = vpack.c.bf16 %v2207, %v2207
  %v4935 = vpack.c.bf16 %v2222, %v2222
  %v4936 = vpack.c.bf16 %v2237, %v2237
  %v4937 = vpack.c.bf16 %v2252, %v2252
  %v4938 = vpack.c.bf16 %v2267, %v2267
  %v4939 = vpack.c.bf16 %v2282, %v2282
  %v4940 = vpack.c.bf16 %v2297, %v2297
  %v4941 = vpack.c.bf16 %v2312, %v2312
  %v4942 = vpack.c.bf16 %v2327, %v2327
  %v4943 = vpack.c.bf16 %v2342, %v2342
  %v4944 = vpack.c.bf16 %v2357, %v2357
  %v4945 = vpack.c.bf16 %v2372, %v2372
  %v4946 = vpack.c.bf16 %v2387, %v2387
  %v4947 = vpack.c.bf16 %v2402, %v2402
  %v4948 = vpack.c.bf16 %v2417, %v2417
  %v4949 = vpack.c.bf16 %v2432, %v2432
  %v4950 = vpack.c.bf16 %v2447, %v2447
  %v4951 = vpack.c.bf16 %v2462, %v2462
  %v4952 = vpack.c.bf16 %v2477, %v2477
  %v4953 = vpack.c.bf16 %v2492, %v2492
  %v4954 = vpack.c.bf16 %v2507, %v2507
  %v4955 = vpack.c.bf16 %v2522, %v2522
  %v4956 = vpack.c.bf16 %v2537, %v2537
  %v4957 = vpack.c.bf16 %v2552, %v2552
  %v4958 = vpack.c.bf16 %v2567, %v2567
  %vm4959 = vcmask 125952
  %4960 = vst.msk [vmem:[%s13] sm:$0xf] %vm4959, %v4895
  %4961 = vst.msk [vmem:[%s13 + $0x4] sm:$0xf] %vm4959, %v4896
  %4962 = vst.msk [vmem:[%s13 + $0x8] sm:$0xf] %vm4959, %v4897
  %4963 = vst.msk [vmem:[%s13 + $0xc] sm:$0xf] %vm4959, %v4898
  %4964 = vst.msk [vmem:[%s13 + $0x10] sm:$0xf] %vm4959, %v4899
  %4965 = vst.msk [vmem:[%s13 + $0x14] sm:$0xf] %vm4959, %v4900
  %4966 = vst.msk [vmem:[%s13 + $0x18] sm:$0xf] %vm4959, %v4901
  %4967 = vst.msk [vmem:[%s13 + $0x1c] sm:$0xf] %vm4959, %v4902
  %4968 = vst.msk [vmem:[%s13 + $0x20] sm:$0xf] %vm4959, %v4903
  %4969 = vst.msk [vmem:[%s13 + $0x24] sm:$0xf] %vm4959, %v4904
  %4970 = vst.msk [vmem:[%s13 + $0x28] sm:$0xf] %vm4959, %v4905
  %4971 = vst.msk [vmem:[%s13 + $0x2c] sm:$0xf] %vm4959, %v4906
  %4972 = vst.msk [vmem:[%s13 + $0x30] sm:$0xf] %vm4959, %v4907
  %4973 = vst.msk [vmem:[%s13 + $0x34] sm:$0xf] %vm4959, %v4908
  %4974 = vst.msk [vmem:[%s13 + $0x38] sm:$0xf] %vm4959, %v4909
  %4975 = vst.msk [vmem:[%s13 + $0x3c] sm:$0xf] %vm4959, %v4910
  %4976 = vst.msk [vmem:[%s13 + $0x40] sm:$0xf] %vm4959, %v4911
  %4977 = vst.msk [vmem:[%s13 + $0x44] sm:$0xf] %vm4959, %v4912
  %4978 = vst.msk [vmem:[%s13 + $0x48] sm:$0xf] %vm4959, %v4913
  %4979 = vst.msk [vmem:[%s13 + $0x4c] sm:$0xf] %vm4959, %v4914
  %4980 = vst.msk [vmem:[%s13 + $0x50] sm:$0xf] %vm4959, %v4915
  %4981 = vst.msk [vmem:[%s13 + $0x54] sm:$0xf] %vm4959, %v4916
  %4982 = vst.msk [vmem:[%s13 + $0x58] sm:$0xf] %vm4959, %v4917
  %4983 = vst.msk [vmem:[%s13 + $0x5c] sm:$0xf] %vm4959, %v4918
  %4984 = vst.msk [vmem:[%s13 + $0x60] sm:$0xf] %vm4959, %v4919
  %4985 = vst.msk [vmem:[%s13 + $0x64] sm:$0xf] %vm4959, %v4920
  %4986 = vst.msk [vmem:[%s13 + $0x68] sm:$0xf] %vm4959, %v4921
  %4987 = vst.msk [vmem:[%s13 + $0x6c] sm:$0xf] %vm4959, %v4922
  %4988 = vst.msk [vmem:[%s13 + $0x70] sm:$0xf] %vm4959, %v4923
  %4989 = vst.msk [vmem:[%s13 + $0x74] sm:$0xf] %vm4959, %v4924
  %4990 = vst.msk [vmem:[%s13 + $0x78] sm:$0xf] %vm4959, %v4925
  %4991 = vst.msk [vmem:[%s13 + $0x7c] sm:$0xf] %vm4959, %v4926
  %4992 = vst.msk [vmem:[%s13 + $0x80] sm:$0xf] %vm4959, %v4927
  %4993 = vst.msk [vmem:[%s13 + $0x84] sm:$0xf] %vm4959, %v4928
  %4994 = vst.msk [vmem:[%s13 + $0x88] sm:$0xf] %vm4959, %v4929
  %4995 = vst.msk [vmem:[%s13 + $0x8c] sm:$0xf] %vm4959, %v4930
  %4996 = vst.msk [vmem:[%s13 + $0x90] sm:$0xf] %vm4959, %v4931
  %4997 = vst.msk [vmem:[%s13 + $0x94] sm:$0xf] %vm4959, %v4932
  %4998 = vst.msk [vmem:[%s13 + $0x98] sm:$0xf] %vm4959, %v4933
  %4999 = vst.msk [vmem:[%s13 + $0x9c] sm:$0xf] %vm4959, %v4934
  %5000 = vst.msk [vmem:[%s13 + $0xa0] sm:$0xf] %vm4959, %v4935
  %5001 = vst.msk [vmem:[%s13 + $0xa4] sm:$0xf] %vm4959, %v4936
  %5002 = vst.msk [vmem:[%s13 + $0xa8] sm:$0xf] %vm4959, %v4937
  %5003 = vst.msk [vmem:[%s13 + $0xac] sm:$0xf] %vm4959, %v4938
  %5004 = vst.msk [vmem:[%s13 + $0xb0] sm:$0xf] %vm4959, %v4939
  %5005 = vst.msk [vmem:[%s13 + $0xb4] sm:$0xf] %vm4959, %v4940
  %5006 = vst.msk [vmem:[%s13 + $0xb8] sm:$0xf] %vm4959, %v4941
  %5007 = vst.msk [vmem:[%s13 + $0xbc] sm:$0xf] %vm4959, %v4942
  %5008 = vst.msk [vmem:[%s13 + $0xc0] sm:$0xf] %vm4959, %v4943
  %5009 = vst.msk [vmem:[%s13 + $0xc4] sm:$0xf] %vm4959, %v4944
  %5010 = vst.msk [vmem:[%s13 + $0xc8] sm:$0xf] %vm4959, %v4945
  %5011 = vst.msk [vmem:[%s13 + $0xcc] sm:$0xf] %vm4959, %v4946
  %5012 = vst.msk [vmem:[%s13 + $0xd0] sm:$0xf] %vm4959, %v4947
  %5013 = vst.msk [vmem:[%s13 + $0xd4] sm:$0xf] %vm4959, %v4948
  %5014 = vst.msk [vmem:[%s13 + $0xd8] sm:$0xf] %vm4959, %v4949
  %5015 = vst.msk [vmem:[%s13 + $0xdc] sm:$0xf] %vm4959, %v4950
  %5016 = vst.msk [vmem:[%s13 + $0xe0] sm:$0xf] %vm4959, %v4951
  %5017 = vst.msk [vmem:[%s13 + $0xe4] sm:$0xf] %vm4959, %v4952
  %5018 = vst.msk [vmem:[%s13 + $0xe8] sm:$0xf] %vm4959, %v4953
  %5019 = vst.msk [vmem:[%s13 + $0xec] sm:$0xf] %vm4959, %v4954
  %5020 = vst.msk [vmem:[%s13 + $0xf0] sm:$0xf] %vm4959, %v4955
  %5021 = vst.msk [vmem:[%s13 + $0xf4] sm:$0xf] %vm4959, %v4956
  %5022 = vst.msk [vmem:[%s13 + $0xf8] sm:$0xf] %vm4959, %v4957
  %5023 = vst.msk [vmem:[%s13 + $0xfc] sm:$0xf] %vm4959, %v4958
  %vm5024 = vcmask 31744
  %5025 = vst.msk [vmem:[%s14] sm:$0xff] %vm5024, %v3949
  %5026 = vst.msk [vmem:[%s14 + $0x8] sm:$0xff] %vm5024, %v3964
  %5027 = vst.msk [vmem:[%s14 + $0x10] sm:$0xff] %vm5024, %v3979
  %5028 = vst.msk [vmem:[%s14 + $0x18] sm:$0xff] %vm5024, %v3994
  %5029 = vst.msk [vmem:[%s14 + $0x20] sm:$0xff] %vm5024, %v4009
  %5030 = vst.msk [vmem:[%s14 + $0x28] sm:$0xff] %vm5024, %v4024
  %5031 = vst.msk [vmem:[%s14 + $0x30] sm:$0xff] %vm5024, %v4039
  %5032 = vst.msk [vmem:[%s14 + $0x38] sm:$0xff] %vm5024, %v4054
  %5033 = vst.msk [vmem:[%s14 + $0x40] sm:$0xff] %vm5024, %v4069
  %5034 = vst.msk [vmem:[%s14 + $0x48] sm:$0xff] %vm5024, %v4084
  %5035 = vst.msk [vmem:[%s14 + $0x50] sm:$0xff] %vm5024, %v4099
  %5036 = vst.msk [vmem:[%s14 + $0x58] sm:$0xff] %vm5024, %v4114
  %5037 = vst.msk [vmem:[%s14 + $0x60] sm:$0xff] %vm5024, %v4129
  %5038 = vst.msk [vmem:[%s14 + $0x68] sm:$0xff] %vm5024, %v4144
  %5039 = vst.msk [vmem:[%s14 + $0x70] sm:$0xff] %vm5024, %v4159
  %5040 = vst.msk [vmem:[%s14 + $0x78] sm:$0xff] %vm5024, %v4174
  %5041 = vst.msk [vmem:[%s14 + $0x80] sm:$0xff] %vm5024, %v4189
  %5042 = vst.msk [vmem:[%s14 + $0x88] sm:$0xff] %vm5024, %v4204
  %5043 = vst.msk [vmem:[%s14 + $0x90] sm:$0xff] %vm5024, %v4219
  %5044 = vst.msk [vmem:[%s14 + $0x98] sm:$0xff] %vm5024, %v4234
  %5045 = vst.msk [vmem:[%s14 + $0xa0] sm:$0xff] %vm5024, %v4249
  %5046 = vst.msk [vmem:[%s14 + $0xa8] sm:$0xff] %vm5024, %v4264
  %5047 = vst.msk [vmem:[%s14 + $0xb0] sm:$0xff] %vm5024, %v4279
  %5048 = vst.msk [vmem:[%s14 + $0xb8] sm:$0xff] %vm5024, %v4294
  %5049 = vst.msk [vmem:[%s14 + $0xc0] sm:$0xff] %vm5024, %v4309
  %5050 = vst.msk [vmem:[%s14 + $0xc8] sm:$0xff] %vm5024, %v4324
  %5051 = vst.msk [vmem:[%s14 + $0xd0] sm:$0xff] %vm5024, %v4339
  %5052 = vst.msk [vmem:[%s14 + $0xd8] sm:$0xff] %vm5024, %v4354
  %5053 = vst.msk [vmem:[%s14 + $0xe0] sm:$0xff] %vm5024, %v4369
  %5054 = vst.msk [vmem:[%s14 + $0xe8] sm:$0xff] %vm5024, %v4384
  %5055 = vst.msk [vmem:[%s14 + $0xf0] sm:$0xff] %vm5024, %v4399
  %5056 = vst.msk [vmem:[%s14 + $0xf8] sm:$0xff] %vm5024, %v4414
  %5057 = vst.msk [vmem:[%s14 + $0x100] sm:$0xff] %vm5024, %v4429
  %5058 = vst.msk [vmem:[%s14 + $0x108] sm:$0xff] %vm5024, %v4444
  %5059 = vst.msk [vmem:[%s14 + $0x110] sm:$0xff] %vm5024, %v4459
  %5060 = vst.msk [vmem:[%s14 + $0x118] sm:$0xff] %vm5024, %v4474
  %5061 = vst.msk [vmem:[%s14 + $0x120] sm:$0xff] %vm5024, %v4489
  %5062 = vst.msk [vmem:[%s14 + $0x128] sm:$0xff] %vm5024, %v4504
  %5063 = vst.msk [vmem:[%s14 + $0x130] sm:$0xff] %vm5024, %v4519
  %5064 = vst.msk [vmem:[%s14 + $0x138] sm:$0xff] %vm5024, %v4534
  %5065 = vst.msk [vmem:[%s14 + $0x140] sm:$0xff] %vm5024, %v4549
  %5066 = vst.msk [vmem:[%s14 + $0x148] sm:$0xff] %vm5024, %v4564
  %5067 = vst.msk [vmem:[%s14 + $0x150] sm:$0xff] %vm5024, %v4579
  %5068 = vst.msk [vmem:[%s14 + $0x158] sm:$0xff] %vm5024, %v4594
  %5069 = vst.msk [vmem:[%s14 + $0x160] sm:$0xff] %vm5024, %v4609
  %5070 = vst.msk [vmem:[%s14 + $0x168] sm:$0xff] %vm5024, %v4624
  %5071 = vst.msk [vmem:[%s14 + $0x170] sm:$0xff] %vm5024, %v4639
  %5072 = vst.msk [vmem:[%s14 + $0x178] sm:$0xff] %vm5024, %v4654
  %5073 = vst.msk [vmem:[%s14 + $0x180] sm:$0xff] %vm5024, %v4669
  %5074 = vst.msk [vmem:[%s14 + $0x188] sm:$0xff] %vm5024, %v4684
  %5075 = vst.msk [vmem:[%s14 + $0x190] sm:$0xff] %vm5024, %v4699
  %5076 = vst.msk [vmem:[%s14 + $0x198] sm:$0xff] %vm5024, %v4714
  %5077 = vst.msk [vmem:[%s14 + $0x1a0] sm:$0xff] %vm5024, %v4729
  %5078 = vst.msk [vmem:[%s14 + $0x1a8] sm:$0xff] %vm5024, %v4744
  %5079 = vst.msk [vmem:[%s14 + $0x1b0] sm:$0xff] %vm5024, %v4759
  %5080 = vst.msk [vmem:[%s14 + $0x1b8] sm:$0xff] %vm5024, %v4774
  %5081 = vst.msk [vmem:[%s14 + $0x1c0] sm:$0xff] %vm5024, %v4789
  %5082 = vst.msk [vmem:[%s14 + $0x1c8] sm:$0xff] %vm5024, %v4804
  %5083 = vst.msk [vmem:[%s14 + $0x1d0] sm:$0xff] %vm5024, %v4819
  %5084 = vst.msk [vmem:[%s14 + $0x1d8] sm:$0xff] %vm5024, %v4834
  %5085 = vst.msk [vmem:[%s14 + $0x1e0] sm:$0xff] %vm5024, %v4849
  %5086 = vst.msk [vmem:[%s14 + $0x1e8] sm:$0xff] %vm5024, %v4864
  %5087 = vst.msk [vmem:[%s14 + $0x1f0] sm:$0xff] %vm5024, %v4879
  %5088 = vst.msk [vmem:[%s14 + $0x1f8] sm:$0xff] %vm5024, %v4894
  // Predicated region
  $region54: #{qfreedet_heads_forward.1} parent=0 // pred_check
    _
  $region55: #{qfreedet_heads_forward.1} parent=0 // pred_check_branch
    %5090 = sbr.rel (0) target = $region57
  $region56: #{qfreedet_heads_forward.1} parent=0 // pred_region
    _
  $region57: #{qfreedet_heads_forward.1} parent=0 // pred_fallthru
    _
  // Predicated region
  $region58: #{qfreedet_heads_forward.1} parent=0 // pred_check
    _
  $region59: #{qfreedet_heads_forward.1} parent=0 // pred_check_branch
    %5092 = sbr.rel (0) target = $region61
  $region60: #{qfreedet_heads_forward.1} parent=0 // pred_region
    _
  $region61: #{qfreedet_heads_forward.1} parent=0 // pred_fallthru
    _
  // Predicated region
  $region62: #{qfreedet_heads_forward.1} parent=0 // pred_check
    _
  $region63: #{qfreedet_heads_forward.1} parent=0 // pred_check_branch
    %5094 = sbr.rel (0) target = $region65
  $region64: #{qfreedet_heads_forward.1} parent=0 // pred_region
    _
  $region65: #{qfreedet_heads_forward.1} parent=0 // pred_fallthru
    _
  // Predicated region
  $region66: #{qfreedet_heads_forward.1} parent=0 // pred_check
    _
  $region67: #{qfreedet_heads_forward.1} parent=0 // pred_check_branch
    %5096 = sbr.rel (0) target = $region69
  $region68: #{qfreedet_heads_forward.1} parent=0 // pred_region
    _
  $region69: #{qfreedet_heads_forward.1} parent=0 // pred_fallthru
    _

</llo_original>
